<compile_context>
chip_gen: v6e
topology: v6e:2x2x1
jax: 0.10.0
libtpu: 0.0.40
codegen_flags: <defaults>
</compile_context>

<pallas_src>
import jax
import jax.numpy as jnp
from jax.experimental import pallas as pl
from jax.experimental.pallas import tpu as pltpu

F32 = jnp.float32
BF16 = jnp.bfloat16


# ----------------------------------------------------------------------------
# In-kernel helpers (spatial-major slab layout: (L, batch_tile, C))
# ----------------------------------------------------------------------------
def _shift_prev(a, z):
    """slab l -> a[l-1]; slab 0 -> zeros (conv tap k=0 pairs x[l-1])."""
    return jnp.concatenate([z, a[:-1]], axis=0)


def _shift_next(a, z):
    """slab l -> a[l+1]; last slab -> zeros (conv tap k=2 pairs x[l+1])."""
    return jnp.concatenate([a[1:], z], axis=0)


def _pool2_slabs(y):
    """MaxPool1d(kernel=2, stride=2) over the spatial slab dim.

    y: (L, TB, C) f32 with TB % 8 == 0.  The reshape only regroups the
    leading/sublane dims (last dim untouched, both TB and 2*TB multiples of 8),
    so it is a layout no-op; the max is a plain VPU op on two aligned slices.
    """
    L, TB, C = y.shape
    y2 = y.reshape(L // 2, 2 * TB, C)
    return jnp.maximum(y2[:, :TB, :], y2[:, TB:, :])


def _conv_bn_relu_pool(a, wcat_ref, t_ref):
    """Conv1d(k=3, pad=1) + folded-BN + ReLU + MaxPool1d(2).

    a: (L, TB, Cin) f32 spatial-major slabs.
    wcat_ref: (3*Cin, Cout) bf16, taps concatenated along K, BN scale folded in.
    t_ref: (1, Cout) f32 additive BN shift.
    """
    L, TB, Cin = a.shape
    z = jnp.zeros((1, TB, Cin), F32)
    # Tap-concatenate the 3 shifted inputs along lanes -> single MXU matmul.
    xcat = jnp.concatenate(
        [_shift_prev(a, z), a, _shift_next(a, z)], axis=2)      # (L, TB, 3*Cin)
    x2 = xcat.reshape(L * TB, 3 * Cin).astype(BF16)             # layout no-op reshape
    y = jnp.dot(x2, wcat_ref[...], preferred_element_type=F32)  # (L*TB, Cout)
    y = jnp.maximum(y + t_ref[...], 0.0)
    return _pool2_slabs(y.reshape(L, TB, -1))                   # (L//2, TB, Cout)


# ----------------------------------------------------------------------------
# The fused kernel: whole network for one batch tile
# ----------------------------------------------------------------------------
def net_fused_kernel(x_ref,
                     w1_ref, t1_ref,
                     w2_ref, t2_ref,
                     w3_ref, t3_ref,
                     fc1w_ref, fc1b_ref,
                     fc2w_ref, fc2b_ref,
                     fc3w_ref, fc3b_ref,
                     o_ref):
    x = x_ref[...].astype(F32)                                   # (L0, TB, 1)
    L0, TB, _ = x.shape

    # ---- conv1 + BN + ReLU + pool (Cin=1 -> 3 broadcast FMAs on the VPU) ----
    w1 = w1_ref[...]                                             # (3, 64) f32, BN scale folded
    z1 = jnp.zeros((1, TB, 1), F32)
    y = (_shift_prev(x, z1) * w1[0:1, :]                         # shift the narrow (rows,1) input,
         + x * w1[1:2, :]                                        # then broadcast-multiply to 64 lanes
         + _shift_next(x, z1) * w1[2:3, :])                      # (L0, TB, 64)
    y = jnp.maximum(y + t1_ref[...], 0.0)
    a = _pool2_slabs(y)                                          # (L0/2, TB, 64)

    # ---- conv2 / conv3 + BN + ReLU + pool (one K=3*Cin MXU matmul each) ----
    a = _conv_bn_relu_pool(a, w2_ref, t2_ref)                    # (L0/4, TB, 128)
    a = _conv_bn_relu_pool(a, w3_ref, t3_ref)                    # (L0/8, TB, 256)

    # ---- fc1: lane-concat the L3 spatial slabs -> one (TB, 256*L3) matmul ----
    # PyTorch's channel-major x.view(B, -1) flatten is folded into the weight
    # permutation (rows ordered l*256 + c), so no runtime gather is needed.
    L3 = a.shape[0]
    flat = jnp.concatenate([a[l] for l in range(L3)], axis=1).astype(BF16)  # (TB, 256*L3)
    # TODO(synk): nn.Dropout(p=0.5) is identity in eval mode; no RNG mask applied.
    h = jnp.dot(flat, fc1w_ref[...], preferred_element_type=F32)
    h = jnp.maximum(h + fc1b_ref[...], 0.0)

    # ---- fc2 ----
    h = jnp.dot(h.astype(BF16), fc2w_ref[...], preferred_element_type=F32)
    h = jnp.maximum(h + fc2b_ref[...], 0.0)

    # ---- fc3 (out_features=1): VPU multiply + lane reduce, not an N=1 matmul ----
    out = jnp.sum(h * fc3w_ref[...], axis=1, keepdims=True) + fc3b_ref[...]
    o_ref[...] = out.astype(o_ref.dtype)


# ----------------------------------------------------------------------------
# Wrapper: 1-D grid over batch tiles, weights resident across all grid steps
# ----------------------------------------------------------------------------
def net_forward(x_ncw, params, *, batch_tile=8):
    """x_ncw: (B, 1, num_features) — PyTorch NCW input layout.  Returns (B, 1) f32."""
    B, cin, L0 = x_ncw.shape
    assert cin == 1
    assert L0 % 8 == 0, "three MaxPool1d(2) stages + fc1 sizing assume num_features % 8 == 0"
    # TODO(synk): MaxPool1d floor behaviour for num_features not divisible by 8 is not modelled.
    assert batch_tile % 8 == 0, "batch tile must be a multiple of the f32 sublane tile (8)"

    # Spatial-major slab layout (L0, B, 1): batch sits on sublanes, so conv shifts
    # are slab slices and pooling is a layout-trivial reshape.  The tiny input
    # transpose is done once by XLA outside the kernel.
    xt = jnp.transpose(x_ncw, (2, 0, 1)).astype(jnp.float32)     # (L0, B, 1)

    B_pad = ((B + batch_tile - 1) // batch_tile) * batch_tile
    if B_pad != B:
        xt = jnp.pad(xt, ((0, 0), (0, B_pad - B), (0, 0)))
    n_tiles = B_pad // batch_tile

    def resident(arr):
        # Constant block index on every grid step -> Pallas keeps the weight
        # VMEM-resident (DMA'd once, reused for all batch tiles).
        nd = arr.ndim
        return pl.BlockSpec(arr.shape, lambda i, _n=nd: (0,) * _n)

    weights = (params["w1"], params["t1"],
               params["w2"], params["t2"],
               params["w3"], params["t3"],
               params["fc1_w"], params["fc1_b"],
               params["fc2_w"], params["fc2_b"],
               params["fc3_w"], params["fc3_b"])

    out = pl.pallas_call(
        net_fused_kernel,
        out_shape=jax.ShapeDtypeStruct((B_pad, 1), jnp.float32),
        grid=(n_tiles,),
        in_specs=[pl.BlockSpec((L0, batch_tile, 1), lambda i: (0, i, 0))]
                 + [resident(w) for w in weights],
        out_specs=pl.BlockSpec((batch_tile, 1), lambda i: (i, 0)),
        compiler_params=pltpu.CompilerParams(
            dimension_semantics=("parallel",),   # shard batch tiles across v7x's 2 TCs
        ),
    )(xt, *weights)
    return out[:B]


# ----------------------------------------------------------------------------
# Parameter construction (deterministic, synthetic, torch-layout -> kernel layout)
# ----------------------------------------------------------------------------
def _fold_bn(gamma, beta, mean, var, conv_bias, eps=1e-5):
    scale = gamma / jnp.sqrt(var + eps)
    shift = scale * conv_bias + beta - scale * mean
    return scale, shift


def make_params(num_features, key, mxu_dtype=jnp.bfloat16):
    assert num_features % 8 == 0
    l3 = num_features // 8
    keys = iter(jax.random.split(key, 32))
    nk = lambda: next(keys)

    def conv_block(cin, cout):
        w = 0.1 * jax.random.normal(nk(), (cout, cin, 3), jnp.float32)   # torch (Cout, Cin, K)
        b = 0.1 * jax.random.normal(nk(), (cout,), jnp.float32)
        gamma = 1.0 + 0.1 * jax.random.normal(nk(), (cout,), jnp.float32)
        beta = 0.1 * jax.random.normal(nk(), (cout,), jnp.float32)
        mean = 0.1 * jax.random.normal(nk(), (cout,), jnp.float32)
        var = jax.random.uniform(nk(), (cout,), jnp.float32, 0.5, 1.5)
        scale, shift = _fold_bn(gamma, beta, mean, var, b)
        # taps[k, ci, co] pairs x[l+k-1]; BN scale folded into the weights.
        taps = jnp.transpose(w, (2, 1, 0)) * scale
        return taps, shift.reshape(1, cout)

    p = {}
    t1, p["t1"] = conv_block(1, 64)
    p["w1"] = t1[:, 0, :]                                        # (3, 64) f32 — VPU FMA path
    t2, p["t2"] = conv_block(64, 128)
    p["w2"] = t2.reshape(3 * 64, 128).astype(mxu_dtype)          # tap-concatenated (192, 128)
    t3, p["t3"] = conv_block(128, 256)
    p["w3"] = t3.reshape(3 * 128, 256).astype(mxu_dtype)         # tap-concatenated (384, 256)

    f_in = 256 * l3
    # torch fc1.weight is (512, f_in); x @ W.T uses rows indexed c*l3 + l (channel-major
    # flatten).  Pre-permute once to the kernel's slab-concat order (row l*256 + c).
    fc1_wT = 0.05 * jax.random.normal(nk(), (f_in, 512), jnp.float32)
    p["fc1_w"] = (jnp.transpose(fc1_wT.reshape(256, l3, 512), (1, 0, 2))
                  .reshape(f_in, 512).astype(mxu_dtype))
    p["fc1_b"] = (0.05 * jax.random.normal(nk(), (512,), jnp.float32)).reshape(1, 512)
    p["fc2_w"] = (0.05 * jax.random.normal(nk(), (512, 128), jnp.float32)).astype(mxu_dtype)
    p["fc2_b"] = (0.05 * jax.random.normal(nk(), (128,), jnp.float32)).reshape(1, 128)
    p["fc3_w"] = 0.05 * jax.random.normal(nk(), (1, 128), jnp.float32)   # f32 — VPU reduce path
    p["fc3_b"] = (0.05 * jax.random.normal(nk(), (1,), jnp.float32)).reshape(1, 1)
    return p


if __name__ == "__main__":
    num_features = 32        # divisible by 8 (three MaxPool1d(2) stages)
    batch = 16               # 2 batch tiles of 8 -> exercises the grid + parallel batch axis
    key = jax.random.PRNGKey(0)
    k_x, k_p = jax.random.split(key)

    x = jax.random.normal(k_x, (batch, 1, num_features), jnp.float32)    # PyTorch NCW input
    params = make_params(num_features, k_p)

    out = jax.jit(net_forward)(x, params)
    out = jax.block_until_ready(out)
    assert out.shape == (batch, 1), out.shape
    print("KERNEL_OK")
</pallas_src>

<mosaic_0001>
module attributes {stable_mosaic.version = 11 : i64} {
  func.func @net_fused_kernel(%arg0: i32, %arg1: memref<32x8x1xf32, #tpu.memory_space<vmem>>, %arg2: memref<3x64xf32, #tpu.memory_space<vmem>>, %arg3: memref<1x64xf32, #tpu.memory_space<vmem>>, %arg4: memref<192x128xbf16, #tpu.memory_space<vmem>>, %arg5: memref<1x128xf32, #tpu.memory_space<vmem>>, %arg6: memref<384x256xbf16, #tpu.memory_space<vmem>>, %arg7: memref<1x256xf32, #tpu.memory_space<vmem>>, %arg8: memref<1024x512xbf16, #tpu.memory_space<vmem>>, %arg9: memref<1x512xf32, #tpu.memory_space<vmem>>, %arg10: memref<512x128xbf16, #tpu.memory_space<vmem>>, %arg11: memref<1x128xf32, #tpu.memory_space<vmem>>, %arg12: memref<1x128xf32, #tpu.memory_space<vmem>>, %arg13: memref<1x1xf32, #tpu.memory_space<vmem>>, %arg14: memref<8x1xf32, #tpu.memory_space<vmem>>) attributes {dimension_semantics = [#tpu.dimension_semantics<parallel>], iteration_bounds = array<i64: 2>, scalar_prefetch = 0 : i64, scratch_operands = 0 : i64, tpu.core_type = #tpu.core_type<tc>, window_params = [{transform_indices = @transform_0, window_bounds = array<i64: 32, 8, 1>}, {pipeline_mode = #tpu.pipeline_mode<synchronous>, transform_indices = @transform_1, window_bounds = array<i64: 3, 64>}, {pipeline_mode = #tpu.pipeline_mode<synchronous>, transform_indices = @transform_2, window_bounds = array<i64: 1, 64>}, {pipeline_mode = #tpu.pipeline_mode<synchronous>, transform_indices = @transform_3, window_bounds = array<i64: 192, 128>}, {pipeline_mode = #tpu.pipeline_mode<synchronous>, transform_indices = @transform_4, window_bounds = array<i64: 1, 128>}, {pipeline_mode = #tpu.pipeline_mode<synchronous>, transform_indices = @transform_5, window_bounds = array<i64: 384, 256>}, {pipeline_mode = #tpu.pipeline_mode<synchronous>, transform_indices = @transform_6, window_bounds = array<i64: 1, 256>}, {pipeline_mode = #tpu.pipeline_mode<synchronous>, transform_indices = @transform_7, window_bounds = array<i64: 1024, 512>}, {pipeline_mode = #tpu.pipeline_mode<synchronous>, transform_indices = @transform_8, window_bounds = array<i64: 1, 512>}, {pipeline_mode = #tpu.pipeline_mode<synchronous>, transform_indices = @transform_9, window_bounds = array<i64: 512, 128>}, {pipeline_mode = #tpu.pipeline_mode<synchronous>, transform_indices = @transform_10, window_bounds = array<i64: 1, 128>}, {pipeline_mode = #tpu.pipeline_mode<synchronous>, transform_indices = @transform_11, window_bounds = array<i64: 1, 128>}, {pipeline_mode = #tpu.pipeline_mode<synchronous>, transform_indices = @transform_12, window_bounds = array<i64: 1, 1>}, {transform_indices = @transform_13, window_bounds = array<i64: 8, 1>}]} {
    %c0 = arith.constant 0 : index
    %c0_0 = arith.constant 0 : index
    %c0_1 = arith.constant 0 : index
    %0 = vector.load %arg1[%c0, %c0_0, %c0_1] : memref<32x8x1xf32, #tpu.memory_space<vmem>>, vector<32x8x1xf32>
    %c0_2 = arith.constant 0 : index
    %c0_3 = arith.constant 0 : index
    %1 = vector.load %arg2[%c0_2, %c0_3] : memref<3x64xf32, #tpu.memory_space<vmem>>, vector<3x64xf32>
    %cst = arith.constant 0.000000e+00 : f32
    %2 = vector.broadcast %cst : f32 to vector<1x8x1xf32>
    %3 = vector.extract_strided_slice %0 {offsets = [0, 0, 0], sizes = [31, 8, 1], strides = [1, 1, 1]} : vector<32x8x1xf32> to vector<31x8x1xf32>
    %4 = tpu.concatenate %2, %3 in 0 : vector<1x8x1xf32>, vector<31x8x1xf32> -> vector<32x8x1xf32>
    %5 = vector.extract_strided_slice %1 {offsets = [0, 0], sizes = [1, 64], strides = [1, 1]} : vector<3x64xf32> to vector<1x64xf32>
    %6 = vector.shape_cast %5 : vector<1x64xf32> to vector<1x1x64xf32>
    %7 = vector.broadcast %4 : vector<32x8x1xf32> to vector<32x8x64xf32>
    %8 = vector.broadcast %6 : vector<1x1x64xf32> to vector<32x8x64xf32>
    %9 = arith.mulf %7, %8 : vector<32x8x64xf32>
    %10 = vector.extract_strided_slice %1 {offsets = [1, 0], sizes = [1, 64], strides = [1, 1]} : vector<3x64xf32> to vector<1x64xf32>
    %11 = vector.shape_cast %10 : vector<1x64xf32> to vector<1x1x64xf32>
    %12 = vector.broadcast %0 : vector<32x8x1xf32> to vector<32x8x64xf32>
    %13 = vector.broadcast %11 : vector<1x1x64xf32> to vector<32x8x64xf32>
    %14 = arith.mulf %12, %13 : vector<32x8x64xf32>
    %15 = arith.addf %9, %14 : vector<32x8x64xf32>
    %16 = vector.extract_strided_slice %0 {offsets = [1, 0, 0], sizes = [31, 8, 1], strides = [1, 1, 1]} : vector<32x8x1xf32> to vector<31x8x1xf32>
    %17 = tpu.concatenate %16, %2 in 0 : vector<31x8x1xf32>, vector<1x8x1xf32> -> vector<32x8x1xf32>
    %18 = vector.extract_strided_slice %1 {offsets = [2, 0], sizes = [1, 64], strides = [1, 1]} : vector<3x64xf32> to vector<1x64xf32>
    %19 = vector.shape_cast %18 : vector<1x64xf32> to vector<1x1x64xf32>
    %20 = vector.broadcast %17 : vector<32x8x1xf32> to vector<32x8x64xf32>
    %21 = vector.broadcast %19 : vector<1x1x64xf32> to vector<32x8x64xf32>
    %22 = arith.mulf %20, %21 : vector<32x8x64xf32>
    %23 = arith.addf %15, %22 : vector<32x8x64xf32>
    %c0_4 = arith.constant 0 : index
    %c0_5 = arith.constant 0 : index
    %24 = vector.load %arg3[%c0_4, %c0_5] : memref<1x64xf32, #tpu.memory_space<vmem>>, vector<1x64xf32>
    %25 = vector.shape_cast %24 : vector<1x64xf32> to vector<1x1x64xf32>
    %26 = vector.broadcast %25 : vector<1x1x64xf32> to vector<32x8x64xf32>
    %27 = arith.addf %23, %26 : vector<32x8x64xf32>
    %cst_6 = arith.constant 0.000000e+00 : f32
    %28 = vector.broadcast %cst_6 : f32 to vector<32x8x64xf32>
    %29 = arith.maximumf %27, %28 : vector<32x8x64xf32>
    %30 = vector.shape_cast %29 : vector<32x8x64xf32> to vector<16x16x64xf32>
    %31 = vector.extract_strided_slice %30 {offsets = [0, 0, 0], sizes = [16, 8, 64], strides = [1, 1, 1]} : vector<16x16x64xf32> to vector<16x8x64xf32>
    %32 = vector.extract_strided_slice %30 {offsets = [0, 8, 0], sizes = [16, 8, 64], strides = [1, 1, 1]} : vector<16x16x64xf32> to vector<16x8x64xf32>
    %33 = arith.maximumf %31, %32 : vector<16x8x64xf32>
    %cst_7 = arith.constant 0.000000e+00 : f32
    %34 = vector.broadcast %cst_7 : f32 to vector<1x8x64xf32>
    %35 = vector.extract_strided_slice %33 {offsets = [0, 0, 0], sizes = [15, 8, 64], strides = [1, 1, 1]} : vector<16x8x64xf32> to vector<15x8x64xf32>
    %36 = tpu.concatenate %34, %35 in 0 : vector<1x8x64xf32>, vector<15x8x64xf32> -> vector<16x8x64xf32>
    %37 = vector.extract_strided_slice %33 {offsets = [1, 0, 0], sizes = [15, 8, 64], strides = [1, 1, 1]} : vector<16x8x64xf32> to vector<15x8x64xf32>
    %38 = tpu.concatenate %37, %34 in 0 : vector<15x8x64xf32>, vector<1x8x64xf32> -> vector<16x8x64xf32>
    %39 = tpu.concatenate %36, %33, %38 in 2 : vector<16x8x64xf32>, vector<16x8x64xf32>, vector<16x8x64xf32> -> vector<16x8x192xf32>
    %40 = vector.shape_cast %39 : vector<16x8x192xf32> to vector<128x192xf32>
    %41 = arith.truncf %40 : vector<128x192xf32> to vector<128x192xbf16>
    %c0_8 = arith.constant 0 : index
    %c0_9 = arith.constant 0 : index
    %42 = vector.load %arg4[%c0_8, %c0_9] : memref<192x128xbf16, #tpu.memory_space<vmem>>, vector<192x128xbf16>
    %cst_10 = arith.constant dense<0.000000e+00> : vector<128x128xf32>
    %43 = tpu.matmul %41, %42, %cst_10 {dimension_numbers = #tpu.dot_dimension_numbers<[1], [0], [0], [1], [0, 0, 1, 1], [], []>} : vector<128x192xbf16>, vector<192x128xbf16>, vector<128x128xf32> -> vector<128x128xf32>
    %c0_11 = arith.constant 0 : index
    %c0_12 = arith.constant 0 : index
    %44 = vector.load %arg5[%c0_11, %c0_12] : memref<1x128xf32, #tpu.memory_space<vmem>>, vector<1x128xf32>
    %45 = vector.broadcast %44 : vector<1x128xf32> to vector<128x128xf32>
    %46 = arith.addf %43, %45 : vector<128x128xf32>
    %cst_13 = arith.constant 0.000000e+00 : f32
    %47 = vector.broadcast %cst_13 : f32 to vector<128x128xf32>
    %48 = arith.maximumf %46, %47 : vector<128x128xf32>
    %49 = vector.shape_cast %48 : vector<128x128xf32> to vector<16x8x128xf32>
    %50 = vector.shape_cast %49 : vector<16x8x128xf32> to vector<8x16x128xf32>
    %51 = vector.extract_strided_slice %50 {offsets = [0, 0, 0], sizes = [8, 8, 128], strides = [1, 1, 1]} : vector<8x16x128xf32> to vector<8x8x128xf32>
    %52 = vector.extract_strided_slice %50 {offsets = [0, 8, 0], sizes = [8, 8, 128], strides = [1, 1, 1]} : vector<8x16x128xf32> to vector<8x8x128xf32>
    %53 = arith.maximumf %51, %52 : vector<8x8x128xf32>
    %cst_14 = arith.constant 0.000000e+00 : f32
    %54 = vector.broadcast %cst_14 : f32 to vector<1x8x128xf32>
    %55 = vector.extract_strided_slice %53 {offsets = [0, 0, 0], sizes = [7, 8, 128], strides = [1, 1, 1]} : vector<8x8x128xf32> to vector<7x8x128xf32>
    %56 = tpu.concatenate %54, %55 in 0 : vector<1x8x128xf32>, vector<7x8x128xf32> -> vector<8x8x128xf32>
    %57 = vector.extract_strided_slice %53 {offsets = [1, 0, 0], sizes = [7, 8, 128], strides = [1, 1, 1]} : vector<8x8x128xf32> to vector<7x8x128xf32>
    %58 = tpu.concatenate %57, %54 in 0 : vector<7x8x128xf32>, vector<1x8x128xf32> -> vector<8x8x128xf32>
    %59 = tpu.concatenate %56, %53, %58 in 2 : vector<8x8x128xf32>, vector<8x8x128xf32>, vector<8x8x128xf32> -> vector<8x8x384xf32>
    %60 = vector.shape_cast %59 : vector<8x8x384xf32> to vector<64x384xf32>
    %61 = arith.truncf %60 : vector<64x384xf32> to vector<64x384xbf16>
    %c0_15 = arith.constant 0 : index
    %c0_16 = arith.constant 0 : index
    %62 = vector.load %arg6[%c0_15, %c0_16] : memref<384x256xbf16, #tpu.memory_space<vmem>>, vector<384x256xbf16>
    %cst_17 = arith.constant dense<0.000000e+00> : vector<64x256xf32>
    %63 = tpu.matmul %61, %62, %cst_17 {dimension_numbers = #tpu.dot_dimension_numbers<[1], [0], [0], [1], [0, 0, 1, 1], [], []>} : vector<64x384xbf16>, vector<384x256xbf16>, vector<64x256xf32> -> vector<64x256xf32>
    %c0_18 = arith.constant 0 : index
    %c0_19 = arith.constant 0 : index
    %64 = vector.load %arg7[%c0_18, %c0_19] : memref<1x256xf32, #tpu.memory_space<vmem>>, vector<1x256xf32>
    %65 = vector.broadcast %64 : vector<1x256xf32> to vector<64x256xf32>
    %66 = arith.addf %63, %65 : vector<64x256xf32>
    %cst_20 = arith.constant 0.000000e+00 : f32
    %67 = vector.broadcast %cst_20 : f32 to vector<64x256xf32>
    %68 = arith.maximumf %66, %67 : vector<64x256xf32>
    %69 = vector.shape_cast %68 : vector<64x256xf32> to vector<8x8x256xf32>
    %70 = vector.shape_cast %69 : vector<8x8x256xf32> to vector<4x16x256xf32>
    %71 = vector.extract_strided_slice %70 {offsets = [0, 0, 0], sizes = [4, 8, 256], strides = [1, 1, 1]} : vector<4x16x256xf32> to vector<4x8x256xf32>
    %72 = vector.extract_strided_slice %70 {offsets = [0, 8, 0], sizes = [4, 8, 256], strides = [1, 1, 1]} : vector<4x16x256xf32> to vector<4x8x256xf32>
    %73 = arith.maximumf %71, %72 : vector<4x8x256xf32>
    %74 = vector.extract_strided_slice %73 {offsets = [0, 0, 0], sizes = [1, 8, 256], strides = [1, 1, 1]} : vector<4x8x256xf32> to vector<1x8x256xf32>
    %75 = vector.shape_cast %74 : vector<1x8x256xf32> to vector<8x256xf32>
    %76 = vector.extract_strided_slice %73 {offsets = [1, 0, 0], sizes = [1, 8, 256], strides = [1, 1, 1]} : vector<4x8x256xf32> to vector<1x8x256xf32>
    %77 = vector.shape_cast %76 : vector<1x8x256xf32> to vector<8x256xf32>
    %78 = vector.extract_strided_slice %73 {offsets = [2, 0, 0], sizes = [1, 8, 256], strides = [1, 1, 1]} : vector<4x8x256xf32> to vector<1x8x256xf32>
    %79 = vector.shape_cast %78 : vector<1x8x256xf32> to vector<8x256xf32>
    %80 = vector.extract_strided_slice %73 {offsets = [3, 0, 0], sizes = [1, 8, 256], strides = [1, 1, 1]} : vector<4x8x256xf32> to vector<1x8x256xf32>
    %81 = vector.shape_cast %80 : vector<1x8x256xf32> to vector<8x256xf32>
    %82 = tpu.concatenate %75, %77, %79, %81 in 1 : vector<8x256xf32>, vector<8x256xf32>, vector<8x256xf32>, vector<8x256xf32> -> vector<8x1024xf32>
    %83 = arith.truncf %82 : vector<8x1024xf32> to vector<8x1024xbf16>
    %c0_21 = arith.constant 0 : index
    %c0_22 = arith.constant 0 : index
    %84 = vector.load %arg8[%c0_21, %c0_22] : memref<1024x512xbf16, #tpu.memory_space<vmem>>, vector<1024x512xbf16>
    %cst_23 = arith.constant dense<0.000000e+00> : vector<8x512xf32>
    %85 = tpu.matmul %83, %84, %cst_23 {dimension_numbers = #tpu.dot_dimension_numbers<[1], [0], [0], [1], [0, 0, 1, 1], [], []>} : vector<8x1024xbf16>, vector<1024x512xbf16>, vector<8x512xf32> -> vector<8x512xf32>
    %c0_24 = arith.constant 0 : index
    %c0_25 = arith.constant 0 : index
    %86 = vector.load %arg9[%c0_24, %c0_25] : memref<1x512xf32, #tpu.memory_space<vmem>>, vector<1x512xf32>
    %87 = vector.broadcast %86 : vector<1x512xf32> to vector<8x512xf32>
    %88 = arith.addf %85, %87 : vector<8x512xf32>
    %cst_26 = arith.constant 0.000000e+00 : f32
    %89 = vector.broadcast %cst_26 : f32 to vector<8x512xf32>
    %90 = arith.maximumf %88, %89 : vector<8x512xf32>
    %91 = arith.truncf %90 : vector<8x512xf32> to vector<8x512xbf16>
    %c0_27 = arith.constant 0 : index
    %c0_28 = arith.constant 0 : index
    %92 = vector.load %arg10[%c0_27, %c0_28] : memref<512x128xbf16, #tpu.memory_space<vmem>>, vector<512x128xbf16>
    %cst_29 = arith.constant dense<0.000000e+00> : vector<8x128xf32>
    %93 = tpu.matmul %91, %92, %cst_29 {dimension_numbers = #tpu.dot_dimension_numbers<[1], [0], [0], [1], [0, 0, 1, 1], [], []>} : vector<8x512xbf16>, vector<512x128xbf16>, vector<8x128xf32> -> vector<8x128xf32>
    %c0_30 = arith.constant 0 : index
    %c0_31 = arith.constant 0 : index
    %94 = vector.load %arg11[%c0_30, %c0_31] : memref<1x128xf32, #tpu.memory_space<vmem>>, vector<1x128xf32>
    %95 = vector.broadcast %94 : vector<1x128xf32> to vector<8x128xf32>
    %96 = arith.addf %93, %95 : vector<8x128xf32>
    %cst_32 = arith.constant 0.000000e+00 : f32
    %97 = vector.broadcast %cst_32 : f32 to vector<8x128xf32>
    %98 = arith.maximumf %96, %97 : vector<8x128xf32>
    %c0_33 = arith.constant 0 : index
    %c0_34 = arith.constant 0 : index
    %99 = vector.load %arg12[%c0_33, %c0_34] : memref<1x128xf32, #tpu.memory_space<vmem>>, vector<1x128xf32>
    %100 = vector.broadcast %99 : vector<1x128xf32> to vector<8x128xf32>
    %101 = arith.mulf %98, %100 : vector<8x128xf32>
    %cst_35 = arith.constant dense<0.000000e+00> : vector<8xf32>
    %102 = vector.multi_reduction <add>, %101, %cst_35 [1] : vector<8x128xf32> to vector<8xf32>
    %103 = vector.shape_cast %102 : vector<8xf32> to vector<8x1xf32>
    %c0_36 = arith.constant 0 : index
    %c0_37 = arith.constant 0 : index
    %104 = vector.load %arg13[%c0_36, %c0_37] : memref<1x1xf32, #tpu.memory_space<vmem>>, vector<1x1xf32>
    %105 = vector.broadcast %104 : vector<1x1xf32> to vector<8x1xf32>
    %106 = arith.addf %103, %105 : vector<8x1xf32>
    %c0_38 = arith.constant 0 : index
    %c0_39 = arith.constant 0 : index
    %107 = vector.load %arg14[%c0_38, %c0_39] : memref<8x1xf32, #tpu.memory_space<vmem>>, vector<8x1xf32>
    tpu.vector_store %arg14[%c0_38, %c0_39], %106 {strides = array<i32>} : memref<8x1xf32, #tpu.memory_space<vmem>>, vector<8x1xf32>,
    return
  }
  func.func @transform_0(%arg0: i32) -> (i32, i32, i32) {
    %c0_i32 = arith.constant 0 : i32
    %c0_i32_0 = arith.constant 0 : i32
    %c0_i32_1 = arith.constant 0 : i32
    return %c0_i32, %arg0, %c0_i32_0 : i32, i32, i32
  }
  func.func @transform_1(%arg0: i32) -> (i32, i32) {
    %c0_i32 = arith.constant 0 : i32
    %c0_i32_0 = arith.constant 0 : i32
    %c0_i32_1 = arith.constant 0 : i32
    return %c0_i32, %c0_i32_0 : i32, i32
  }
  func.func @transform_2(%arg0: i32) -> (i32, i32) {
    %c0_i32 = arith.constant 0 : i32
    %c0_i32_0 = arith.constant 0 : i32
    %c0_i32_1 = arith.constant 0 : i32
    return %c0_i32, %c0_i32_0 : i32, i32
  }
  func.func @transform_3(%arg0: i32) -> (i32, i32) {
    %c0_i32 = arith.constant 0 : i32
    %c0_i32_0 = arith.constant 0 : i32
    %c0_i32_1 = arith.constant 0 : i32
    return %c0_i32, %c0_i32_0 : i32, i32
  }
  func.func @transform_4(%arg0: i32) -> (i32, i32) {
    %c0_i32 = arith.constant 0 : i32
    %c0_i32_0 = arith.constant 0 : i32
    %c0_i32_1 = arith.constant 0 : i32
    return %c0_i32, %c0_i32_0 : i32, i32
  }
  func.func @transform_5(%arg0: i32) -> (i32, i32) {
    %c0_i32 = arith.constant 0 : i32
    %c0_i32_0 = arith.constant 0 : i32
    %c0_i32_1 = arith.constant 0 : i32
    return %c0_i32, %c0_i32_0 : i32, i32
  }
  func.func @transform_6(%arg0: i32) -> (i32, i32) {
    %c0_i32 = arith.constant 0 : i32
    %c0_i32_0 = arith.constant 0 : i32
    %c0_i32_1 = arith.constant 0 : i32
    return %c0_i32, %c0_i32_0 : i32, i32
  }
  func.func @transform_7(%arg0: i32) -> (i32, i32) {
    %c0_i32 = arith.constant 0 : i32
    %c0_i32_0 = arith.constant 0 : i32
    %c0_i32_1 = arith.constant 0 : i32
    return %c0_i32, %c0_i32_0 : i32, i32
  }
  func.func @transform_8(%arg0: i32) -> (i32, i32) {
    %c0_i32 = arith.constant 0 : i32
    %c0_i32_0 = arith.constant 0 : i32
    %c0_i32_1 = arith.constant 0 : i32
    return %c0_i32, %c0_i32_0 : i32, i32
  }
  func.func @transform_9(%arg0: i32) -> (i32, i32) {
    %c0_i32 = arith.constant 0 : i32
    %c0_i32_0 = arith.constant 0 : i32
    %c0_i32_1 = arith.constant 0 : i32
    return %c0_i32, %c0_i32_0 : i32, i32
  }
  func.func @transform_10(%arg0: i32) -> (i32, i32) {
    %c0_i32 = arith.constant 0 : i32
    %c0_i32_0 = arith.constant 0 : i32
    %c0_i32_1 = arith.constant 0 : i32
    return %c0_i32, %c0_i32_0 : i32, i32
  }
  func.func @transform_11(%arg0: i32) -> (i32, i32) {
    %c0_i32 = arith.constant 0 : i32
    %c0_i32_0 = arith.constant 0 : i32
    %c0_i32_1 = arith.constant 0 : i32
    return %c0_i32, %c0_i32_0 : i32, i32
  }
  func.func @transform_12(%arg0: i32) -> (i32, i32) {
    %c0_i32 = arith.constant 0 : i32
    %c0_i32_0 = arith.constant 0 : i32
    %c0_i32_1 = arith.constant 0 : i32
    return %c0_i32, %c0_i32_0 : i32, i32
  }
  func.func @transform_13(%arg0: i32) -> (i32, i32) {
    %c0_i32 = arith.constant 0 : i32
    %c0_i32_0 = arith.constant 0 : i32
    return %arg0, %c0_i32 : i32, i32
  }
}

</mosaic_0001>

<llo_original>
// kernel: net_forward.1
$region0: #{net_forward.1}
  #allocation0 [shape = 'u32[]', space=smem, size = 0x4, offset = 0x4, fixed_abs, tag = 'smem constant byte address 0x4 - core index']
  #allocation1 [shape = 'u32[144,128]{1,0:T(1,128)}', space=vmem, size = 0x12000, scoped, tag = 'internal scratch']
  #allocation2 [shape = 'f32[1,1]{1,0:T(1,128)S(1)}', space=vmem, size = 0x200, scoped, tag = 'scoped memory for net_forward.1']
  %s0 = inlined_call_operand.vmem [shape: f32[32,16,1], index: 0, kind: input, shape index: {}]
  %s1 = inlined_call_operand.vmem [shape: f32[3,64], index: 1, kind: input, shape index: {}]
  %s2 = inlined_call_operand.vmem [shape: f32[1,64], index: 2, kind: input, shape index: {}]
  %s3 = inlined_call_operand.vmem [shape: bf16[192,128], index: 3, kind: input, shape index: {}]
  %s4 = inlined_call_operand.vmem [shape: f32[1,128], index: 4, kind: input, shape index: {}]
  %s5 = inlined_call_operand.vmem [shape: bf16[384,256], index: 5, kind: input, shape index: {}]
  %s6 = inlined_call_operand.vmem [shape: f32[1,256], index: 6, kind: input, shape index: {}]
  %s7 = inlined_call_operand.hbm [shape: bf16[1024,512], index: 7, kind: input, shape index: {}]
  %s8 = inlined_call_operand.vmem [shape: f32[1,512], index: 8, kind: input, shape index: {}]
  %s9 = inlined_call_operand.hbm [shape: bf16[512,128], index: 9, kind: input, shape index: {}]
  %s10 = inlined_call_operand.vmem [shape: f32[1,128], index: 10, kind: input, shape index: {}]
  %s11 = inlined_call_operand.vmem [shape: f32[1,128], index: 11, kind: input, shape index: {}]
  %s12 = inlined_call_operand.<no memory space> [shape: f32[1,1], index: 12, kind: input, shape index: {}]
  %s13 = inlined_call_operand.vmem [shape: f32[16,1], index: 13, kind: output, shape index: {}]
  %s14 = sld [smem:[#allocation0]]
  $region131: #{net_forward.1} parent=0
    _
  %s16 = ssub.s32 1, %s14
  %s17 = scalar_select 0, %s16, %s14
  %v18 = vstv %s12
  %19 = vst [vmem:[#allocation2] sm:$0x1] %v18
  $region1: #{net_forward.1} parent=0
    #allocation3 [shape = 'u8[262144]{0}', space=vmem, size = 0x40000, scoped, tag = 'input window, operand 0']
    #allocation4 [shape = 'u8[1048576]{0}', space=vmem, size = 0x100000, scoped, tag = 'input window, operand 7, single buffered']
    #allocation5 [shape = 's32[2]{0}', space=sflag, size = 0x8, scoped, tag = 'scoped memory for net_forward.1']
    #allocation6 [shape = 'u8[131072]{0}', space=vmem, size = 0x20000, scoped, tag = 'input window, operand 9, single buffered']
    #allocation7 [shape = 's32[1]{0}', space=sflag, size = 0x4, scoped, tag = 'scoped memory for net_forward.1']
    %20 = vsyncpa [#allocation5], 0
    %21 = vsyncpa [#allocation7], 0
    loop: start=0, step=1, limit=4
    $region2: #{net_forward.1} parent=1 // loop_pre_header
      _
    $region3: #{net_forward.1} parent=1 // loop_header
      %s23 = sphi 0, %s27
      %p24 = scmp.ge.s32.totalorder %s23, 4
      %s33 = sphi 0, %s35
      %s36 = sphi 0, %s33
      %s37 = sphi 0, %s36
      %s53 = sphi 0, %s37
      %s57 = sphi 0, %s57
      %s59 = sphi 0, %s57
      %s60 = sphi 0, %s59
      %s74 = sphi 0, %s60
      %s78 = sphi 0, %s78
      %s80 = sphi 0, %s78
      %s81 = sphi 0, %s80
      %s95 = sphi 0, %s81
      %s99 = sphi 0, %s99
      %s101 = sphi 0, %s99
      %s102 = sphi 0, %s101
      %s116 = sphi 0, %s102
      %s120 = sphi 0, %s120
      %s122 = sphi 0, %s120
      %s123 = sphi 0, %s122
      %s137 = sphi 0, %s123
      %s141 = sphi 0, %s141
      %s143 = sphi 0, %s141
      %s144 = sphi 0, %s143
      %s158 = sphi 0, %s144
      %s162 = sphi 0, %s162
      %s164 = sphi 0, %s162
      %s165 = sphi 0, %s164
      %s179 = sphi 0, %s165
      %s183 = sphi 0, %s183
      %s185 = sphi 0, %s183
      %s186 = sphi 0, %s185
      %s200 = sphi 0, %s186
      %s204 = sphi 0, %s204
      %s206 = sphi 0, %s204
      %s207 = sphi 0, %s206
      %s221 = sphi 0, %s207
      %s225 = sphi 0, %s225
      %s227 = sphi 0, %s225
      %s228 = sphi 0, %s227
      %s242 = sphi 0, %s228
      %s246 = sphi 0, %s246
      %s248 = sphi 0, %s246
      %s249 = sphi 0, %s248
      %s263 = sphi 0, %s249
      %s267 = sphi 0, %s267
      %s269 = sphi 0, %s267
      %s270 = sphi 0, %s269
      %s284 = sphi 0, %s270
      %s288 = sphi 0, %s288
      %s290 = sphi 0, %s288
      %s291 = sphi 0, %s290
      %s305 = sphi 0, %s291
      %s311 = sphi 0, %s313
      %s314 = sphi 0, %s311
      %s315 = sphi 0, %s314
      %s331 = sphi 0, %s315
    $region4: #{net_forward.1} parent=1 // loop_header_branch
      %26 = sbr.rel (%p24) target = $region8
    $region5: #{net_forward.1} parent=1 // loop_body
      %s28 = ssub.s32 %s23, 1
      %s29 = ssub.s32 %s23, 2
      %s30 = sadd.s32 %s23, 1
      %s31 = ssub.s32 %s23, %s30
      %p32 = scmp.eq.s32.totalorder %s31, 0
      %s34 = sadd.s32 %s33, 1
      %s35 = scalar_select %p32, %s33, %s34
      %p38 = pneg %p32
      %p39 = scmp.eq.s32.totalorder %s23, 1
      %p40 = por %p38, %p39
      %p41 = scmp.ne.s32.totalorder %s33, %s36
      %p42 = scmp.eq.s32.totalorder %s23, 0
      %p43 = por %p41, %p42
      %p44 = scmp.ne.s32.totalorder %s33, %s36
      %p45 = scmp.eq.s32.totalorder %s28, 1
      %p46 = por %p44, %p45
      %p47 = scmp.ne.s32.totalorder %s36, %s37
      %p48 = scmp.eq.s32.totalorder %s28, 0
      %p49 = por %p47, %p48
      %p50 = scmp.ne.s32.totalorder %s36, %s37
      %p51 = scmp.eq.s32.totalorder %s29, 1
      %p52 = por %p50, %p51
      %p54 = scmp.ne.s32.totalorder %s37, %s53
      %p55 = scmp.eq.s32.totalorder %s29, 0
      %p56 = por %p54, %p55
      %s58 = sadd.s32 %s57, 1
      %p61 = scmp.eq.s32.totalorder %s23, 1
      %p62 = scmp.ne.s32.totalorder %s57, %s59
      %p63 = scmp.eq.s32.totalorder %s23, 0
      %p64 = por %p62, %p63
      %p65 = scmp.ne.s32.totalorder %s57, %s59
      %p66 = scmp.eq.s32.totalorder %s28, 1
      %p67 = por %p65, %p66
      %p68 = scmp.ne.s32.totalorder %s59, %s60
      %p69 = scmp.eq.s32.totalorder %s28, 0
      %p70 = por %p68, %p69
      %p71 = scmp.ne.s32.totalorder %s59, %s60
      %p72 = scmp.eq.s32.totalorder %s29, 1
      %p73 = por %p71, %p72
      %p75 = scmp.ne.s32.totalorder %s60, %s74
      %p76 = scmp.eq.s32.totalorder %s29, 0
      %p77 = por %p75, %p76
      %s79 = sadd.s32 %s78, 1
      %p82 = scmp.eq.s32.totalorder %s23, 1
      %p83 = scmp.ne.s32.totalorder %s78, %s80
      %p84 = scmp.eq.s32.totalorder %s23, 0
      %p85 = por %p83, %p84
      %p86 = scmp.ne.s32.totalorder %s78, %s80
      %p87 = scmp.eq.s32.totalorder %s28, 1
      %p88 = por %p86, %p87
      %p89 = scmp.ne.s32.totalorder %s80, %s81
      %p90 = scmp.eq.s32.totalorder %s28, 0
      %p91 = por %p89, %p90
      %p92 = scmp.ne.s32.totalorder %s80, %s81
      %p93 = scmp.eq.s32.totalorder %s29, 1
      %p94 = por %p92, %p93
      %p96 = scmp.ne.s32.totalorder %s81, %s95
      %p97 = scmp.eq.s32.totalorder %s29, 0
      %p98 = por %p96, %p97
      %s100 = sadd.s32 %s99, 1
      %p103 = scmp.eq.s32.totalorder %s23, 1
      %p104 = scmp.ne.s32.totalorder %s99, %s101
      %p105 = scmp.eq.s32.totalorder %s23, 0
      %p106 = por %p104, %p105
      %p107 = scmp.ne.s32.totalorder %s99, %s101
      %p108 = scmp.eq.s32.totalorder %s28, 1
      %p109 = por %p107, %p108
      %p110 = scmp.ne.s32.totalorder %s101, %s102
      %p111 = scmp.eq.s32.totalorder %s28, 0
      %p112 = por %p110, %p111
      %p113 = scmp.ne.s32.totalorder %s101, %s102
      %p114 = scmp.eq.s32.totalorder %s29, 1
      %p115 = por %p113, %p114
      %p117 = scmp.ne.s32.totalorder %s102, %s116
      %p118 = scmp.eq.s32.totalorder %s29, 0
      %p119 = por %p117, %p118
      %s121 = sadd.s32 %s120, 1
      %p124 = scmp.eq.s32.totalorder %s23, 1
      %p125 = scmp.ne.s32.totalorder %s120, %s122
      %p126 = scmp.eq.s32.totalorder %s23, 0
      %p127 = por %p125, %p126
      %p128 = scmp.ne.s32.totalorder %s120, %s122
      %p129 = scmp.eq.s32.totalorder %s28, 1
      %p130 = por %p128, %p129
      %p131 = scmp.ne.s32.totalorder %s122, %s123
      %p132 = scmp.eq.s32.totalorder %s28, 0
      %p133 = por %p131, %p132
      %p134 = scmp.ne.s32.totalorder %s122, %s123
      %p135 = scmp.eq.s32.totalorder %s29, 1
      %p136 = por %p134, %p135
      %p138 = scmp.ne.s32.totalorder %s123, %s137
      %p139 = scmp.eq.s32.totalorder %s29, 0
      %p140 = por %p138, %p139
      %s142 = sadd.s32 %s141, 1
      %p145 = scmp.eq.s32.totalorder %s23, 1
      %p146 = scmp.ne.s32.totalorder %s141, %s143
      %p147 = scmp.eq.s32.totalorder %s23, 0
      %p148 = por %p146, %p147
      %p149 = scmp.ne.s32.totalorder %s141, %s143
      %p150 = scmp.eq.s32.totalorder %s28, 1
      %p151 = por %p149, %p150
      %p152 = scmp.ne.s32.totalorder %s143, %s144
      %p153 = scmp.eq.s32.totalorder %s28, 0
      %p154 = por %p152, %p153
      %p155 = scmp.ne.s32.totalorder %s143, %s144
      %p156 = scmp.eq.s32.totalorder %s29, 1
      %p157 = por %p155, %p156
      %p159 = scmp.ne.s32.totalorder %s144, %s158
      %p160 = scmp.eq.s32.totalorder %s29, 0
      %p161 = por %p159, %p160
      %s163 = sadd.s32 %s162, 1
      %p166 = scmp.eq.s32.totalorder %s23, 1
      %p167 = scmp.ne.s32.totalorder %s162, %s164
      %p168 = scmp.eq.s32.totalorder %s23, 0
      %p169 = por %p167, %p168
      %p170 = scmp.ne.s32.totalorder %s162, %s164
      %p171 = scmp.eq.s32.totalorder %s28, 1
      %p172 = por %p170, %p171
      %p173 = scmp.ne.s32.totalorder %s164, %s165
      %p174 = scmp.eq.s32.totalorder %s28, 0
      %p175 = por %p173, %p174
      %p176 = scmp.ne.s32.totalorder %s164, %s165
      %p177 = scmp.eq.s32.totalorder %s29, 1
      %p178 = por %p176, %p177
      %p180 = scmp.ne.s32.totalorder %s165, %s179
      %p181 = scmp.eq.s32.totalorder %s29, 0
      %p182 = por %p180, %p181
      %s184 = sadd.s32 %s183, 1
      %p187 = scmp.eq.s32.totalorder %s23, 1
      %p188 = scmp.ne.s32.totalorder %s183, %s185
      %p189 = scmp.eq.s32.totalorder %s23, 0
      %p190 = por %p188, %p189
      %p191 = scmp.ne.s32.totalorder %s183, %s185
      %p192 = scmp.eq.s32.totalorder %s28, 1
      %p193 = por %p191, %p192
      %p194 = scmp.ne.s32.totalorder %s185, %s186
      %p195 = scmp.eq.s32.totalorder %s28, 0
      %p196 = por %p194, %p195
      %p197 = scmp.ne.s32.totalorder %s185, %s186
      %p198 = scmp.eq.s32.totalorder %s29, 1
      %p199 = por %p197, %p198
      %p201 = scmp.ne.s32.totalorder %s186, %s200
      %p202 = scmp.eq.s32.totalorder %s29, 0
      %p203 = por %p201, %p202
      %s205 = sadd.s32 %s204, 1
      %p208 = scmp.eq.s32.totalorder %s23, 1
      %p209 = scmp.ne.s32.totalorder %s204, %s206
      %p210 = scmp.eq.s32.totalorder %s23, 0
      %p211 = por %p209, %p210
      %p212 = scmp.ne.s32.totalorder %s204, %s206
      %p213 = scmp.eq.s32.totalorder %s28, 1
      %p214 = por %p212, %p213
      %p215 = scmp.ne.s32.totalorder %s206, %s207
      %p216 = scmp.eq.s32.totalorder %s28, 0
      %p217 = por %p215, %p216
      %p218 = scmp.ne.s32.totalorder %s206, %s207
      %p219 = scmp.eq.s32.totalorder %s29, 1
      %p220 = por %p218, %p219
      %p222 = scmp.ne.s32.totalorder %s207, %s221
      %p223 = scmp.eq.s32.totalorder %s29, 0
      %p224 = por %p222, %p223
      %s226 = sadd.s32 %s225, 1
      %p229 = scmp.eq.s32.totalorder %s23, 1
      %p230 = scmp.ne.s32.totalorder %s225, %s227
      %p231 = scmp.eq.s32.totalorder %s23, 0
      %p232 = por %p230, %p231
      %p233 = scmp.ne.s32.totalorder %s225, %s227
      %p234 = scmp.eq.s32.totalorder %s28, 1
      %p235 = por %p233, %p234
      %p236 = scmp.ne.s32.totalorder %s227, %s228
      %p237 = scmp.eq.s32.totalorder %s28, 0
      %p238 = por %p236, %p237
      %p239 = scmp.ne.s32.totalorder %s227, %s228
      %p240 = scmp.eq.s32.totalorder %s29, 1
      %p241 = por %p239, %p240
      %p243 = scmp.ne.s32.totalorder %s228, %s242
      %p244 = scmp.eq.s32.totalorder %s29, 0
      %p245 = por %p243, %p244
      %s247 = sadd.s32 %s246, 1
      %p250 = scmp.eq.s32.totalorder %s23, 1
      %p251 = scmp.ne.s32.totalorder %s246, %s248
      %p252 = scmp.eq.s32.totalorder %s23, 0
      %p253 = por %p251, %p252
      %p254 = scmp.ne.s32.totalorder %s246, %s248
      %p255 = scmp.eq.s32.totalorder %s28, 1
      %p256 = por %p254, %p255
      %p257 = scmp.ne.s32.totalorder %s248, %s249
      %p258 = scmp.eq.s32.totalorder %s28, 0
      %p259 = por %p257, %p258
      %p260 = scmp.ne.s32.totalorder %s248, %s249
      %p261 = scmp.eq.s32.totalorder %s29, 1
      %p262 = por %p260, %p261
      %p264 = scmp.ne.s32.totalorder %s249, %s263
      %p265 = scmp.eq.s32.totalorder %s29, 0
      %p266 = por %p264, %p265
      %s268 = sadd.s32 %s267, 1
      %p271 = scmp.eq.s32.totalorder %s23, 1
      %p272 = scmp.ne.s32.totalorder %s267, %s269
      %p273 = scmp.eq.s32.totalorder %s23, 0
      %p274 = por %p272, %p273
      %p275 = scmp.ne.s32.totalorder %s267, %s269
      %p276 = scmp.eq.s32.totalorder %s28, 1
      %p277 = por %p275, %p276
      %p278 = scmp.ne.s32.totalorder %s269, %s270
      %p279 = scmp.eq.s32.totalorder %s28, 0
      %p280 = por %p278, %p279
      %p281 = scmp.ne.s32.totalorder %s269, %s270
      %p282 = scmp.eq.s32.totalorder %s29, 1
      %p283 = por %p281, %p282
      %p285 = scmp.ne.s32.totalorder %s270, %s284
      %p286 = scmp.eq.s32.totalorder %s29, 0
      %p287 = por %p285, %p286
      %s289 = sadd.s32 %s288, 1
      %p292 = scmp.eq.s32.totalorder %s23, 1
      %p293 = scmp.ne.s32.totalorder %s288, %s290
      %p294 = scmp.eq.s32.totalorder %s23, 0
      %p295 = por %p293, %p294
      %p296 = scmp.ne.s32.totalorder %s288, %s290
      %p297 = scmp.eq.s32.totalorder %s28, 1
      %p298 = por %p296, %p297
      %p299 = scmp.ne.s32.totalorder %s290, %s291
      %p300 = scmp.eq.s32.totalorder %s28, 0
      %p301 = por %p299, %p300
      %p302 = scmp.ne.s32.totalorder %s290, %s291
      %p303 = scmp.eq.s32.totalorder %s29, 1
      %p304 = por %p302, %p303
      %p306 = scmp.ne.s32.totalorder %s291, %s305
      %p307 = scmp.eq.s32.totalorder %s29, 0
      %p308 = por %p306, %p307
      %s309 = ssub.s32 %s23, %s30
      %p310 = scmp.eq.s32.totalorder %s309, 0
      %s312 = sadd.s32 %s311, 1
      %s313 = scalar_select %p310, %s311, %s312
      %p316 = pneg %p310
      %p317 = scmp.eq.s32.totalorder %s23, 1
      %p318 = por %p316, %p317
      %p319 = scmp.ne.s32.totalorder %s311, %s314
      %p320 = scmp.eq.s32.totalorder %s23, 0
      %p321 = por %p319, %p320
      %p322 = scmp.ne.s32.totalorder %s311, %s314
      %p323 = scmp.eq.s32.totalorder %s28, 1
      %p324 = por %p322, %p323
      %p325 = scmp.ne.s32.totalorder %s314, %s315
      %p326 = scmp.eq.s32.totalorder %s28, 0
      %p327 = por %p325, %p326
      %p328 = scmp.ne.s32.totalorder %s314, %s315
      %p329 = scmp.eq.s32.totalorder %s29, 1
      %p330 = por %p328, %p329
      %p332 = scmp.ne.s32.totalorder %s315, %s331
      %p333 = scmp.eq.s32.totalorder %s29, 0
      %p334 = por %p332, %p333
      %p335 = scmp.le.s32.totalorder 1, %s23
      %p336 = scmp.lt.s32.totalorder %s23, 3
      %p337 = pnand %p335, %p336
      %p338 = pneg %p337
      // Predicated region
      $region9: #{net_forward.1} parent=5 // pred_check
        _
      $region10: #{net_forward.1} parent=5 // pred_check_branch
        %340 = sbr.rel (%p337) target = $region12
      $region11: #{net_forward.1} parent=5 // pred_region
        %s341 = ssub.s32 %s23, 1
        // Predicated region
        $region13: #{net_forward.1} parent=11 // pred_check
          %p342 = pneg %p70
        $region14: #{net_forward.1} parent=11 // pred_check_branch
          %344 = sbr.rel (%p342) target = $region16
        $region15: #{net_forward.1} parent=11 // pred_region
          _
        $region16: #{net_forward.1} parent=11 // pred_fallthru
          _
        // Predicated region
        $region17: #{net_forward.1} parent=11 // pred_check
          %p345 = pneg %p91
        $region18: #{net_forward.1} parent=11 // pred_check_branch
          %347 = sbr.rel (%p345) target = $region20
        $region19: #{net_forward.1} parent=11 // pred_region
          _
        $region20: #{net_forward.1} parent=11 // pred_fallthru
          _
        // Predicated region
        $region21: #{net_forward.1} parent=11 // pred_check
          %p348 = pneg %p112
        $region22: #{net_forward.1} parent=11 // pred_check_branch
          %350 = sbr.rel (%p348) target = $region24
        $region23: #{net_forward.1} parent=11 // pred_region
          _
        $region24: #{net_forward.1} parent=11 // pred_fallthru
          _
        // Predicated region
        $region25: #{net_forward.1} parent=11 // pred_check
          %p351 = pneg %p133
        $region26: #{net_forward.1} parent=11 // pred_check_branch
          %353 = sbr.rel (%p351) target = $region28
        $region27: #{net_forward.1} parent=11 // pred_region
          _
        $region28: #{net_forward.1} parent=11 // pred_fallthru
          _
        // Predicated region
        $region29: #{net_forward.1} parent=11 // pred_check
          %p354 = pneg %p154
        $region30: #{net_forward.1} parent=11 // pred_check_branch
          %356 = sbr.rel (%p354) target = $region32
        $region31: #{net_forward.1} parent=11 // pred_region
          _
        $region32: #{net_forward.1} parent=11 // pred_fallthru
          _
        // Predicated region
        $region33: #{net_forward.1} parent=11 // pred_check
          %p357 = pneg %p175
        $region34: #{net_forward.1} parent=11 // pred_check_branch
          %359 = sbr.rel (%p357) target = $region36
        $region35: #{net_forward.1} parent=11 // pred_region
          _
        $region36: #{net_forward.1} parent=11 // pred_fallthru
          _
        // Predicated region
        $region37: #{net_forward.1} parent=11 // pred_check
          %p360 = pneg %p196
        $region38: #{net_forward.1} parent=11 // pred_check_branch
          %362 = sbr.rel (%p360) target = $region40
        $region39: #{net_forward.1} parent=11 // pred_region
          %s364 = ssub.s32 32768, 32768
          %365 = vsyncadd [#allocation5], %s364
          %s366 = sshll.u32 [#allocation4], 4
          %s367 = int_to_ptr.vmem [resolvable:$true] %s366
          %372 = dma.hbm_to_vmem [thread:$0]  %s7, 32768, %s367, [#allocation5], 256, 256, 16
        $region40: #{net_forward.1} parent=11 // pred_fallthru
          _
        // Predicated region
        $region41: #{net_forward.1} parent=11 // pred_check
          %p373 = pneg %p217
        $region42: #{net_forward.1} parent=11 // pred_check_branch
          %375 = sbr.rel (%p373) target = $region44
        $region43: #{net_forward.1} parent=11 // pred_region
          _
        $region44: #{net_forward.1} parent=11 // pred_fallthru
          _
        // Predicated region
        $region45: #{net_forward.1} parent=11 // pred_check
          %p376 = pneg %p238
        $region46: #{net_forward.1} parent=11 // pred_check_branch
          %378 = sbr.rel (%p376) target = $region48
        $region47: #{net_forward.1} parent=11 // pred_region
          %s380 = ssub.s32 4096, 4096
          %381 = vsyncadd [#allocation7], %s380
          %s382 = sshll.u32 [#allocation6], 4
          %s383 = int_to_ptr.vmem [resolvable:$true] %s382
          %388 = dma.hbm_to_vmem [thread:$0]  %s9, 4096, %s383, [#allocation7], 64, 64, 4
        $region48: #{net_forward.1} parent=11 // pred_fallthru
          _
        // Predicated region
        $region49: #{net_forward.1} parent=11 // pred_check
          %p389 = pneg %p259
        $region50: #{net_forward.1} parent=11 // pred_check_branch
          %391 = sbr.rel (%p389) target = $region52
        $region51: #{net_forward.1} parent=11 // pred_region
          _
        $region52: #{net_forward.1} parent=11 // pred_fallthru
          _
        // Predicated region
        $region53: #{net_forward.1} parent=11 // pred_check
          %p392 = pneg %p280
        $region54: #{net_forward.1} parent=11 // pred_check_branch
          %394 = sbr.rel (%p392) target = $region56
        $region55: #{net_forward.1} parent=11 // pred_region
          _
        $region56: #{net_forward.1} parent=11 // pred_fallthru
          _
        // Predicated region
        $region57: #{net_forward.1} parent=11 // pred_check
          %p395 = pneg %p301
        $region58: #{net_forward.1} parent=11 // pred_check_branch
          %397 = sbr.rel (%p395) target = $region60
        $region59: #{net_forward.1} parent=11 // pred_region
          _
        $region60: #{net_forward.1} parent=11 // pred_fallthru
          _
      $region12: #{net_forward.1} parent=5 // pred_fallthru
        _
      %p398 = scmp.lt.s32.totalorder %s23, 2
      // Predicated region
      $region61: #{net_forward.1} parent=5 // pred_check
        %p399 = pneg %p398
      $region62: #{net_forward.1} parent=5 // pred_check_branch
        %401 = sbr.rel (%p399) target = $region64
      $region63: #{net_forward.1} parent=5 // pred_region
        // Predicated region
        $region65: #{net_forward.1} parent=63 // pred_check
          %p402 = pneg %p43
        $region66: #{net_forward.1} parent=63 // pred_check_branch
          %404 = sbr.rel (%p402) target = $region68
        $region67: #{net_forward.1} parent=63 // pred_region
          %s405 = sand.u32 %s33, 1
          %s406 = sand.u32 %s33, 1
          %s407 = smul.addr %s406, 256
          %s408 = scalar_lea.vmem [#allocation3], %s407
          %s409 = smul.addr %s23, 8
          %s410 = scalar_lea.vmem %s0, %s409
          // Predicated region
          $region69: #{net_forward.1} parent=67 // pred_check
            _
          $region70: #{net_forward.1} parent=67 // pred_check_branch
            %412 = sbr.rel (0) target = $region72
          $region71: #{net_forward.1} parent=67 // pred_region
            // Predicated region
            $region73: #{net_forward.1} parent=71 // pred_check
              _
            $region74: #{net_forward.1} parent=71 // pred_check_branch
              %414 = sbr.rel (0) target = $region76
            $region75: #{net_forward.1} parent=71 // pred_region
              // Predicated region
              $region88: #{net_forward.1} parent=75 // pred_check
                _
              $region89: #{net_forward.1} parent=75 // pred_check_branch
                %492 = sbr.rel (0) target = $region91
              $region90: #{net_forward.1} parent=75 // pred_region
                loop: start=0, step=1, limit=1
                $region92: #{net_forward.1} parent=90 // loop_pre_header
                  _
                $region93: #{net_forward.1} parent=90 // loop_header
                  %s494 = sphi 0, %s498
                  %p495 = scmp.ge.s32.totalorder %s494, 1
                  %s499 = sphi %s410, %s410
                  %s500 = sphi %s408, %s408
                $region94: #{net_forward.1} parent=90 // loop_header_branch
                  %497 = sbr.rel (%p495) target = $region98
                $region95: #{net_forward.1} parent=90 // loop_body
                  %v501 = vld [vmem:[%s499] sm:$0xff]
                  %502 = vst [vmem:[%s500] sm:$0xff] %v501
                  %v503 = vld [vmem:[%s499 + $0x10] sm:$0xff]
                  %504 = vst [vmem:[%s500 + $0x8] sm:$0xff] %v503
                  %v505 = vld [vmem:[%s499 + $0x20] sm:$0xff]
                  %506 = vst [vmem:[%s500 + $0x10] sm:$0xff] %v505
                  %v507 = vld [vmem:[%s499 + $0x30] sm:$0xff]
                  %508 = vst [vmem:[%s500 + $0x18] sm:$0xff] %v507
                  %v509 = vld [vmem:[%s499 + $0x40] sm:$0xff]
                  %510 = vst [vmem:[%s500 + $0x20] sm:$0xff] %v509
                  %v511 = vld [vmem:[%s499 + $0x50] sm:$0xff]
                  %512 = vst [vmem:[%s500 + $0x28] sm:$0xff] %v511
                  %v513 = vld [vmem:[%s499 + $0x60] sm:$0xff]
                  %514 = vst [vmem:[%s500 + $0x30] sm:$0xff] %v513
                  %v515 = vld [vmem:[%s499 + $0x70] sm:$0xff]
                  %516 = vst [vmem:[%s500 + $0x38] sm:$0xff] %v515
                  %v517 = vld [vmem:[%s499 + $0x80] sm:$0xff]
                  %518 = vst [vmem:[%s500 + $0x40] sm:$0xff] %v517
                  %v519 = vld [vmem:[%s499 + $0x90] sm:$0xff]
                  %520 = vst [vmem:[%s500 + $0x48] sm:$0xff] %v519
                  %v521 = vld [vmem:[%s499 + $0xa0] sm:$0xff]
                  %522 = vst [vmem:[%s500 + $0x50] sm:$0xff] %v521
                  %v523 = vld [vmem:[%s499 + $0xb0] sm:$0xff]
                  %524 = vst [vmem:[%s500 + $0x58] sm:$0xff] %v523
                  %v525 = vld [vmem:[%s499 + $0xc0] sm:$0xff]
                  %526 = vst [vmem:[%s500 + $0x60] sm:$0xff] %v525
                  %v527 = vld [vmem:[%s499 + $0xd0] sm:$0xff]
                  %528 = vst [vmem:[%s500 + $0x68] sm:$0xff] %v527
                  %v529 = vld [vmem:[%s499 + $0xe0] sm:$0xff]
                  %530 = vst [vmem:[%s500 + $0x70] sm:$0xff] %v529
                  %v531 = vld [vmem:[%s499 + $0xf0] sm:$0xff]
                  %532 = vst [vmem:[%s500 + $0x78] sm:$0xff] %v531
                  %v533 = vld [vmem:[%s499 + $0x100] sm:$0xff]
                  %534 = vst [vmem:[%s500 + $0x80] sm:$0xff] %v533
                  %v535 = vld [vmem:[%s499 + $0x110] sm:$0xff]
                  %536 = vst [vmem:[%s500 + $0x88] sm:$0xff] %v535
                  %v537 = vld [vmem:[%s499 + $0x120] sm:$0xff]
                  %538 = vst [vmem:[%s500 + $0x90] sm:$0xff] %v537
                  %v539 = vld [vmem:[%s499 + $0x130] sm:$0xff]
                  %540 = vst [vmem:[%s500 + $0x98] sm:$0xff] %v539
                  %v541 = vld [vmem:[%s499 + $0x140] sm:$0xff]
                  %542 = vst [vmem:[%s500 + $0xa0] sm:$0xff] %v541
                  %v543 = vld [vmem:[%s499 + $0x150] sm:$0xff]
                  %544 = vst [vmem:[%s500 + $0xa8] sm:$0xff] %v543
                  %v545 = vld [vmem:[%s499 + $0x160] sm:$0xff]
                  %546 = vst [vmem:[%s500 + $0xb0] sm:$0xff] %v545
                  %v547 = vld [vmem:[%s499 + $0x170] sm:$0xff]
                  %548 = vst [vmem:[%s500 + $0xb8] sm:$0xff] %v547
                  %v549 = vld [vmem:[%s499 + $0x180] sm:$0xff]
                  %550 = vst [vmem:[%s500 + $0xc0] sm:$0xff] %v549
                  %v551 = vld [vmem:[%s499 + $0x190] sm:$0xff]
                  %552 = vst [vmem:[%s500 + $0xc8] sm:$0xff] %v551
                  %v553 = vld [vmem:[%s499 + $0x1a0] sm:$0xff]
                  %554 = vst [vmem:[%s500 + $0xd0] sm:$0xff] %v553
                  %v555 = vld [vmem:[%s499 + $0x1b0] sm:$0xff]
                  %556 = vst [vmem:[%s500 + $0xd8] sm:$0xff] %v555
                  %v557 = vld [vmem:[%s499 + $0x1c0] sm:$0xff]
                  %558 = vst [vmem:[%s500 + $0xe0] sm:$0xff] %v557
                  %v559 = vld [vmem:[%s499 + $0x1d0] sm:$0xff]
                  %560 = vst [vmem:[%s500 + $0xe8] sm:$0xff] %v559
                  %v561 = vld [vmem:[%s499 + $0x1e0] sm:$0xff]
                  %562 = vst [vmem:[%s500 + $0xf0] sm:$0xff] %v561
                  %v563 = vld [vmem:[%s499 + $0x1f0] sm:$0xff]
                  %564 = vst [vmem:[%s500 + $0xf8] sm:$0xff] %v563
                $region96: #{net_forward.1} parent=90 // loop_footer
                  %s498 = sadd.s32 1, %s494
                $region97: #{net_forward.1} parent=90 // loop_footer_branch
                  %493 = sbr.rel target = $region93
                $region98: #{net_forward.1} parent=90 // loop_exit
                  _
              $region91: #{net_forward.1} parent=75 // pred_fallthru
                _
              // Predicated region
              $region99: #{net_forward.1} parent=75 // pred_check
                _
              $region100: #{net_forward.1} parent=75 // pred_check_branch
                %566 = sbr.rel target = $region102
              $region101: #{net_forward.1} parent=75 // pred_region
                _
              $region102: #{net_forward.1} parent=75 // pred_fallthru
                _
            $region76: #{net_forward.1} parent=71 // pred_fallthru
              _
            // Predicated region
            $region77: #{net_forward.1} parent=71 // pred_check
              _
            $region78: #{net_forward.1} parent=71 // pred_check_branch
              %416 = sbr.rel target = $region80
            $region79: #{net_forward.1} parent=71 // pred_region
              %s418 = ssub.s32 256, 1
              loop: start=0, step=1, limit=1
              $region81: #{net_forward.1} parent=79 // loop_pre_header
                _
              $region82: #{net_forward.1} parent=79 // loop_header
                %s420 = sphi 0, %s424
                %p421 = scmp.ge.s32.totalorder %s420, 1
                %s425 = sphi %s410, %s410
                %s426 = sphi %s408, %s408
              $region83: #{net_forward.1} parent=79 // loop_header_branch
                %423 = sbr.rel (%p421) target = $region87
              $region84: #{net_forward.1} parent=79 // loop_body
                %v427 = vld [vmem:[%s425] sm:%s418]
                %428 = vst [vmem:[%s426] sm:%s418] %v427
                %v429 = vld [vmem:[%s425 + $0x10] sm:%s418]
                %430 = vst [vmem:[%s426 + $0x8] sm:%s418] %v429
                %v431 = vld [vmem:[%s425 + $0x20] sm:%s418]
                %432 = vst [vmem:[%s426 + $0x10] sm:%s418] %v431
                %v433 = vld [vmem:[%s425 + $0x30] sm:%s418]
                %434 = vst [vmem:[%s426 + $0x18] sm:%s418] %v433
                %v435 = vld [vmem:[%s425 + $0x40] sm:%s418]
                %436 = vst [vmem:[%s426 + $0x20] sm:%s418] %v435
                %v437 = vld [vmem:[%s425 + $0x50] sm:%s418]
                %438 = vst [vmem:[%s426 + $0x28] sm:%s418] %v437
                %v439 = vld [vmem:[%s425 + $0x60] sm:%s418]
                %440 = vst [vmem:[%s426 + $0x30] sm:%s418] %v439
                %v441 = vld [vmem:[%s425 + $0x70] sm:%s418]
                %442 = vst [vmem:[%s426 + $0x38] sm:%s418] %v441
                %v443 = vld [vmem:[%s425 + $0x80] sm:%s418]
                %444 = vst [vmem:[%s426 + $0x40] sm:%s418] %v443
                %v445 = vld [vmem:[%s425 + $0x90] sm:%s418]
                %446 = vst [vmem:[%s426 + $0x48] sm:%s418] %v445
                %v447 = vld [vmem:[%s425 + $0xa0] sm:%s418]
                %448 = vst [vmem:[%s426 + $0x50] sm:%s418] %v447
                %v449 = vld [vmem:[%s425 + $0xb0] sm:%s418]
                %450 = vst [vmem:[%s426 + $0x58] sm:%s418] %v449
                %v451 = vld [vmem:[%s425 + $0xc0] sm:%s418]
                %452 = vst [vmem:[%s426 + $0x60] sm:%s418] %v451
                %v453 = vld [vmem:[%s425 + $0xd0] sm:%s418]
                %454 = vst [vmem:[%s426 + $0x68] sm:%s418] %v453
                %v455 = vld [vmem:[%s425 + $0xe0] sm:%s418]
                %456 = vst [vmem:[%s426 + $0x70] sm:%s418] %v455
                %v457 = vld [vmem:[%s425 + $0xf0] sm:%s418]
                %458 = vst [vmem:[%s426 + $0x78] sm:%s418] %v457
                %v459 = vld [vmem:[%s425 + $0x100] sm:%s418]
                %460 = vst [vmem:[%s426 + $0x80] sm:%s418] %v459
                %v461 = vld [vmem:[%s425 + $0x110] sm:%s418]
                %462 = vst [vmem:[%s426 + $0x88] sm:%s418] %v461
                %v463 = vld [vmem:[%s425 + $0x120] sm:%s418]
                %464 = vst [vmem:[%s426 + $0x90] sm:%s418] %v463
                %v465 = vld [vmem:[%s425 + $0x130] sm:%s418]
                %466 = vst [vmem:[%s426 + $0x98] sm:%s418] %v465
                %v467 = vld [vmem:[%s425 + $0x140] sm:%s418]
                %468 = vst [vmem:[%s426 + $0xa0] sm:%s418] %v467
                %v469 = vld [vmem:[%s425 + $0x150] sm:%s418]
                %470 = vst [vmem:[%s426 + $0xa8] sm:%s418] %v469
                %v471 = vld [vmem:[%s425 + $0x160] sm:%s418]
                %472 = vst [vmem:[%s426 + $0xb0] sm:%s418] %v471
                %v473 = vld [vmem:[%s425 + $0x170] sm:%s418]
                %474 = vst [vmem:[%s426 + $0xb8] sm:%s418] %v473
                %v475 = vld [vmem:[%s425 + $0x180] sm:%s418]
                %476 = vst [vmem:[%s426 + $0xc0] sm:%s418] %v475
                %v477 = vld [vmem:[%s425 + $0x190] sm:%s418]
                %478 = vst [vmem:[%s426 + $0xc8] sm:%s418] %v477
                %v479 = vld [vmem:[%s425 + $0x1a0] sm:%s418]
                %480 = vst [vmem:[%s426 + $0xd0] sm:%s418] %v479
                %v481 = vld [vmem:[%s425 + $0x1b0] sm:%s418]
                %482 = vst [vmem:[%s426 + $0xd8] sm:%s418] %v481
                %v483 = vld [vmem:[%s425 + $0x1c0] sm:%s418]
                %484 = vst [vmem:[%s426 + $0xe0] sm:%s418] %v483
                %v485 = vld [vmem:[%s425 + $0x1d0] sm:%s418]
                %486 = vst [vmem:[%s426 + $0xe8] sm:%s418] %v485
                %v487 = vld [vmem:[%s425 + $0x1e0] sm:%s418]
                %488 = vst [vmem:[%s426 + $0xf0] sm:%s418] %v487
                %v489 = vld [vmem:[%s425 + $0x1f0] sm:%s418]
                %490 = vst [vmem:[%s426 + $0xf8] sm:%s418] %v489
              $region85: #{net_forward.1} parent=79 // loop_footer
                %s424 = sadd.s32 1, %s420
              $region86: #{net_forward.1} parent=79 // loop_footer_branch
                %419 = sbr.rel target = $region82
              $region87: #{net_forward.1} parent=79 // loop_exit
                _
            $region80: #{net_forward.1} parent=71 // pred_fallthru
              _
          $region72: #{net_forward.1} parent=67 // pred_fallthru
            _
          %567 = vnop
        $region68: #{net_forward.1} parent=63 // pred_fallthru
          _
      $region64: #{net_forward.1} parent=5 // pred_fallthru
        _
      %p568 = scmp.le.s32.totalorder 1, %s23
      %p569 = scmp.lt.s32.totalorder %s23, 3
      %p570 = pnand %p568, %p569
      %p571 = pneg %p570
      // Predicated region
      $region103: #{net_forward.1} parent=5 // pred_check
        _
      $region104: #{net_forward.1} parent=5 // pred_check_branch
        %573 = sbr.rel (%p570) target = $region106
      $region105: #{net_forward.1} parent=5 // pred_region
        %s574 = ssub.s32 %s23, 1
        %s575 = sand.u32 %s36, 1
        %s576 = sand.u32 %s36, 1
        %s577 = smul.addr %s576, 256
        %s578 = scalar_lea.vmem [#allocation3], %s577
        // Predicated region
        $region107: #{net_forward.1} parent=105 // pred_check
          %p579 = pneg %p49
        $region108: #{net_forward.1} parent=105 // pred_check_branch
          %581 = sbr.rel (%p579) target = $region110
        $region109: #{net_forward.1} parent=105 // pred_region
          _
        $region110: #{net_forward.1} parent=105 // pred_fallthru
          _
        // Predicated region
        $region111: #{net_forward.1} parent=105 // pred_check
          %p582 = pneg %p196
        $region112: #{net_forward.1} parent=105 // pred_check_branch
          %584 = sbr.rel (%p582) target = $region114
        $region113: #{net_forward.1} parent=105 // pred_region
          %585 = dma.done [#allocation5], 32768
        $region114: #{net_forward.1} parent=105 // pred_fallthru
          _
        // Predicated region
        $region115: #{net_forward.1} parent=105 // pred_check
          %p586 = pneg %p238
        $region116: #{net_forward.1} parent=105 // pred_check_branch
          %588 = sbr.rel (%p586) target = $region118
        $region117: #{net_forward.1} parent=105 // pred_region
          %589 = dma.done [#allocation7], 4096
        $region118: #{net_forward.1} parent=105 // pred_fallthru
          _
        %s590 = sand.u32 %s36, 1
        %s591 = sand.u32 %s36, 1
        %s592 = smul.addr %s591, 256
        %s593 = scalar_lea.vmem [#allocation3], %s592
        %p594 = pneg %p49
        %p595 = pneg %p46
        %p596 = pneg %p70
        %p597 = pneg %p67
        %p598 = pneg %p91
        %p599 = pneg %p88
        %p600 = pneg %p112
        %p601 = pneg %p109
        %p602 = pneg %p133
        %p603 = pneg %p130
        %p604 = pneg %p154
        %p605 = pneg %p151
        %p606 = pneg %p175
        %p607 = pneg %p172
        %p608 = pneg %p196
        %p609 = pneg %p193
        %p610 = pneg %p217
        %p611 = pneg %p214
        %p612 = pneg %p238
        %p613 = pneg %p235
        %p614 = pneg %p259
        %p615 = pneg %p256
        %p616 = pneg %p280
        %p617 = pneg %p277
        %p618 = pneg %p301
        %p619 = pneg %p298
        %p620 = pneg %p327
        %p621 = pneg %p324
        %p622 = scmp.lt.s32.totalorder %s28, 1
        %s623 = scalar_select %p622, %s28, 1
        %s624 = smul.addr %s623, 8
        %s625 = scalar_lea.vmem %s13, %s624
        %p626 = scmp.lt.s32.totalorder %s28, 1
        %s627 = scalar_select %p626, %s28, 1
        %s628 = smul.addr %s627, 8
        %s629 = scalar_lea.vmem %s13, %s628
        %v631 = vld [vmem:[%s578] sm:$0xff]
        %v632 = vld [vmem:[%s578 + $0x8] sm:$0xff]
        %v633 = vld [vmem:[%s578 + $0x10] sm:$0xff]
        %v634 = vld [vmem:[%s578 + $0x18] sm:$0xff]
        %v635 = vld [vmem:[%s578 + $0x20] sm:$0xff]
        %v636 = vld [vmem:[%s578 + $0x28] sm:$0xff]
        %v637 = vld [vmem:[%s578 + $0x30] sm:$0xff]
        %v638 = vld [vmem:[%s578 + $0x38] sm:$0xff]
        %v639 = vld [vmem:[%s578 + $0x40] sm:$0xff]
        %v640 = vld [vmem:[%s578 + $0x48] sm:$0xff]
        %v641 = vld [vmem:[%s578 + $0x50] sm:$0xff]
        %v642 = vld [vmem:[%s578 + $0x58] sm:$0xff]
        %v643 = vld [vmem:[%s578 + $0x60] sm:$0xff]
        %v644 = vld [vmem:[%s578 + $0x68] sm:$0xff]
        %v645 = vld [vmem:[%s578 + $0x70] sm:$0xff]
        %v646 = vld [vmem:[%s578 + $0x78] sm:$0xff]
        %v647 = vld [vmem:[%s578 + $0x80] sm:$0xff]
        %v648 = vld [vmem:[%s578 + $0x88] sm:$0xff]
        %v649 = vld [vmem:[%s578 + $0x90] sm:$0xff]
        %v650 = vld [vmem:[%s578 + $0x98] sm:$0xff]
        %v651 = vld [vmem:[%s578 + $0xa0] sm:$0xff]
        %v652 = vld [vmem:[%s578 + $0xa8] sm:$0xff]
        %v653 = vld [vmem:[%s578 + $0xb0] sm:$0xff]
        %v654 = vld [vmem:[%s578 + $0xb8] sm:$0xff]
        %v655 = vld [vmem:[%s578 + $0xc0] sm:$0xff]
        %v656 = vld [vmem:[%s578 + $0xc8] sm:$0xff]
        %v657 = vld [vmem:[%s578 + $0xd0] sm:$0xff]
        %v658 = vld [vmem:[%s578 + $0xd8] sm:$0xff]
        %v659 = vld [vmem:[%s578 + $0xe0] sm:$0xff]
        %v660 = vld [vmem:[%s578 + $0xe8] sm:$0xff]
        %v661 = vld [vmem:[%s578 + $0xf0] sm:$0xff]
        %v662 = vld [vmem:[%s578 + $0xf8] sm:$0xff]
        %v663 = vld [vmem:[%s1] sm:$0x7]
        %665 = vset.pattern.permute.xlu0 0
        %666 = vperm.xlu0 %665, 0.0
        %v667 = vpop.permute.xlu0 %666
        %670 = vset.pattern.permute.xlu0 0
        %671 = vperm.xlu0 %670, %v631
        %v672 = vpop.permute.xlu0 %671
        %675 = vset.pattern.permute.xlu0 0
        %676 = vperm.xlu0 %675, %v632
        %v677 = vpop.permute.xlu0 %676
        %680 = vset.pattern.permute.xlu0 0
        %681 = vperm.xlu0 %680, %v633
        %v682 = vpop.permute.xlu0 %681
        %685 = vset.pattern.permute.xlu0 0
        %686 = vperm.xlu0 %685, %v634
        %v687 = vpop.permute.xlu0 %686
        %690 = vset.pattern.permute.xlu0 0
        %691 = vperm.xlu0 %690, %v635
        %v692 = vpop.permute.xlu0 %691
        %695 = vset.pattern.permute.xlu0 0
        %696 = vperm.xlu0 %695, %v636
        %v697 = vpop.permute.xlu0 %696
        %700 = vset.pattern.permute.xlu0 0
        %701 = vperm.xlu0 %700, %v637
        %v702 = vpop.permute.xlu0 %701
        %705 = vset.pattern.permute.xlu0 0
        %706 = vperm.xlu0 %705, %v638
        %v707 = vpop.permute.xlu0 %706
        %710 = vset.pattern.permute.xlu0 0
        %711 = vperm.xlu0 %710, %v639
        %v712 = vpop.permute.xlu0 %711
        %715 = vset.pattern.permute.xlu0 0
        %716 = vperm.xlu0 %715, %v640
        %v717 = vpop.permute.xlu0 %716
        %720 = vset.pattern.permute.xlu0 0
        %721 = vperm.xlu0 %720, %v641
        %v722 = vpop.permute.xlu0 %721
        %725 = vset.pattern.permute.xlu0 0
        %726 = vperm.xlu0 %725, %v642
        %v727 = vpop.permute.xlu0 %726
        %730 = vset.pattern.permute.xlu0 0
        %731 = vperm.xlu0 %730, %v643
        %v732 = vpop.permute.xlu0 %731
        %735 = vset.pattern.permute.xlu0 0
        %736 = vperm.xlu0 %735, %v644
        %v737 = vpop.permute.xlu0 %736
        %740 = vset.pattern.permute.xlu0 0
        %741 = vperm.xlu0 %740, %v645
        %v742 = vpop.permute.xlu0 %741
        %745 = vset.pattern.permute.xlu0 0
        %746 = vperm.xlu0 %745, %v646
        %v747 = vpop.permute.xlu0 %746
        %750 = vset.pattern.permute.xlu0 0
        %751 = vperm.xlu0 %750, %v647
        %v752 = vpop.permute.xlu0 %751
        %755 = vset.pattern.permute.xlu0 0
        %756 = vperm.xlu0 %755, %v648
        %v757 = vpop.permute.xlu0 %756
        %760 = vset.pattern.permute.xlu0 0
        %761 = vperm.xlu0 %760, %v649
        %v762 = vpop.permute.xlu0 %761
        %765 = vset.pattern.permute.xlu0 0
        %766 = vperm.xlu0 %765, %v650
        %v767 = vpop.permute.xlu0 %766
        %770 = vset.pattern.permute.xlu0 0
        %771 = vperm.xlu0 %770, %v651
        %v772 = vpop.permute.xlu0 %771
        %775 = vset.pattern.permute.xlu0 0
        %776 = vperm.xlu0 %775, %v652
        %v777 = vpop.permute.xlu0 %776
        %780 = vset.pattern.permute.xlu0 0
        %781 = vperm.xlu0 %780, %v653
        %v782 = vpop.permute.xlu0 %781
        %785 = vset.pattern.permute.xlu0 0
        %786 = vperm.xlu0 %785, %v654
        %v787 = vpop.permute.xlu0 %786
        %790 = vset.pattern.permute.xlu0 0
        %791 = vperm.xlu0 %790, %v655
        %v792 = vpop.permute.xlu0 %791
        %795 = vset.pattern.permute.xlu0 0
        %796 = vperm.xlu0 %795, %v656
        %v797 = vpop.permute.xlu0 %796
        %800 = vset.pattern.permute.xlu0 0
        %801 = vperm.xlu0 %800, %v657
        %v802 = vpop.permute.xlu0 %801
        %805 = vset.pattern.permute.xlu0 0
        %806 = vperm.xlu0 %805, %v658
        %v807 = vpop.permute.xlu0 %806
        %810 = vset.pattern.permute.xlu0 0
        %811 = vperm.xlu0 %810, %v659
        %v812 = vpop.permute.xlu0 %811
        %815 = vset.pattern.permute.xlu0 0
        %816 = vperm.xlu0 %815, %v660
        %v817 = vpop.permute.xlu0 %816
        %820 = vset.pattern.permute.xlu0 0
        %821 = vperm.xlu0 %820, %v661
        %v822 = vpop.permute.xlu0 %821
        %v824 = vlaneseq
        %v825 = vshrl.u32 %v824, 7
        %v826 = vsub.s32 0, %v825
        %v827 = vrot.slane %v663, %v826
        %v828 = vmul.f32 %v667, %v827
        %v829 = vmul.f32 %v672, %v827
        %v830 = vmul.f32 %v677, %v827
        %v831 = vmul.f32 %v682, %v827
        %v832 = vmul.f32 %v687, %v827
        %v833 = vmul.f32 %v692, %v827
        %v834 = vmul.f32 %v697, %v827
        %v835 = vmul.f32 %v702, %v827
        %v836 = vmul.f32 %v707, %v827
        %v837 = vmul.f32 %v712, %v827
        %v838 = vmul.f32 %v717, %v827
        %v839 = vmul.f32 %v722, %v827
        %v840 = vmul.f32 %v727, %v827
        %v841 = vmul.f32 %v732, %v827
        %v842 = vmul.f32 %v737, %v827
        %v843 = vmul.f32 %v742, %v827
        %v844 = vmul.f32 %v747, %v827
        %v845 = vmul.f32 %v752, %v827
        %v846 = vmul.f32 %v757, %v827
        %v847 = vmul.f32 %v762, %v827
        %v848 = vmul.f32 %v767, %v827
        %v849 = vmul.f32 %v772, %v827
        %v850 = vmul.f32 %v777, %v827
        %v851 = vmul.f32 %v782, %v827
        %v852 = vmul.f32 %v787, %v827
        %v853 = vmul.f32 %v792, %v827
        %v854 = vmul.f32 %v797, %v827
        %v855 = vmul.f32 %v802, %v827
        %v856 = vmul.f32 %v807, %v827
        %v857 = vmul.f32 %v812, %v827
        %v858 = vmul.f32 %v817, %v827
        %v859 = vmul.f32 %v822, %v827
        %861 = vset.pattern.permute.xlu0 0
        %862 = vperm.xlu0 %861, %v662
        %v863 = vpop.permute.xlu0 %862
        %v865 = vlaneseq
        %v866 = vshrl.u32 %v865, 7
        %v867 = vsub.s32 1, %v866
        %v868 = vrot.slane %v663, %v867
        %v869 = vmul.f32 %v672, %v868
        %v870 = vmul.f32 %v677, %v868
        %v871 = vmul.f32 %v682, %v868
        %v872 = vmul.f32 %v687, %v868
        %v873 = vmul.f32 %v692, %v868
        %v874 = vmul.f32 %v697, %v868
        %v875 = vmul.f32 %v702, %v868
        %v876 = vmul.f32 %v707, %v868
        %v877 = vmul.f32 %v712, %v868
        %v878 = vmul.f32 %v717, %v868
        %v879 = vmul.f32 %v722, %v868
        %v880 = vmul.f32 %v727, %v868
        %v881 = vmul.f32 %v732, %v868
        %v882 = vmul.f32 %v737, %v868
        %v883 = vmul.f32 %v742, %v868
        %v884 = vmul.f32 %v747, %v868
        %v885 = vmul.f32 %v752, %v868
        %v886 = vmul.f32 %v757, %v868
        %v887 = vmul.f32 %v762, %v868
        %v888 = vmul.f32 %v767, %v868
        %v889 = vmul.f32 %v772, %v868
        %v890 = vmul.f32 %v777, %v868
        %v891 = vmul.f32 %v782, %v868
        %v892 = vmul.f32 %v787, %v868
        %v893 = vmul.f32 %v792, %v868
        %v894 = vmul.f32 %v797, %v868
        %v895 = vmul.f32 %v802, %v868
        %v896 = vmul.f32 %v807, %v868
        %v897 = vmul.f32 %v812, %v868
        %v898 = vmul.f32 %v817, %v868
        %v899 = vmul.f32 %v822, %v868
        %v900 = vmul.f32 %v863, %v868
        %v901 = vadd.f32 %v828, %v869
        %v902 = vadd.f32 %v829, %v870
        %v903 = vadd.f32 %v830, %v871
        %v904 = vadd.f32 %v831, %v872
        %v905 = vadd.f32 %v832, %v873
        %v906 = vadd.f32 %v833, %v874
        %v907 = vadd.f32 %v834, %v875
        %v908 = vadd.f32 %v835, %v876
        %v909 = vadd.f32 %v836, %v877
        %v910 = vadd.f32 %v837, %v878
        %v911 = vadd.f32 %v838, %v879
        %v912 = vadd.f32 %v839, %v880
        %v913 = vadd.f32 %v840, %v881
        %v914 = vadd.f32 %v841, %v882
        %v915 = vadd.f32 %v842, %v883
        %v916 = vadd.f32 %v843, %v884
        %v917 = vadd.f32 %v844, %v885
        %v918 = vadd.f32 %v845, %v886
        %v919 = vadd.f32 %v846, %v887
        %v920 = vadd.f32 %v847, %v888
        %v921 = vadd.f32 %v848, %v889
        %v922 = vadd.f32 %v849, %v890
        %v923 = vadd.f32 %v850, %v891
        %v924 = vadd.f32 %v851, %v892
        %v925 = vadd.f32 %v852, %v893
        %v926 = vadd.f32 %v853, %v894
        %v927 = vadd.f32 %v854, %v895
        %v928 = vadd.f32 %v855, %v896
        %v929 = vadd.f32 %v856, %v897
        %v930 = vadd.f32 %v857, %v898
        %v931 = vadd.f32 %v858, %v899
        %v932 = vadd.f32 %v859, %v900
        %v933 = vlaneseq
        %v934 = vshrl.u32 %v933, 7
        %v935 = vsub.s32 2, %v934
        %v936 = vrot.slane %v663, %v935
        %v937 = vmul.f32 %v677, %v936
        %v938 = vmul.f32 %v682, %v936
        %v939 = vmul.f32 %v687, %v936
        %v940 = vmul.f32 %v692, %v936
        %v941 = vmul.f32 %v697, %v936
        %v942 = vmul.f32 %v702, %v936
        %v943 = vmul.f32 %v707, %v936
        %v944 = vmul.f32 %v712, %v936
        %v945 = vmul.f32 %v717, %v936
        %v946 = vmul.f32 %v722, %v936
        %v947 = vmul.f32 %v727, %v936
        %v948 = vmul.f32 %v732, %v936
        %v949 = vmul.f32 %v737, %v936
        %v950 = vmul.f32 %v742, %v936
        %v951 = vmul.f32 %v747, %v936
        %v952 = vmul.f32 %v752, %v936
        %v953 = vmul.f32 %v757, %v936
        %v954 = vmul.f32 %v762, %v936
        %v955 = vmul.f32 %v767, %v936
        %v956 = vmul.f32 %v772, %v936
        %v957 = vmul.f32 %v777, %v936
        %v958 = vmul.f32 %v782, %v936
        %v959 = vmul.f32 %v787, %v936
        %v960 = vmul.f32 %v792, %v936
        %v961 = vmul.f32 %v797, %v936
        %v962 = vmul.f32 %v802, %v936
        %v963 = vmul.f32 %v807, %v936
        %v964 = vmul.f32 %v812, %v936
        %v965 = vmul.f32 %v817, %v936
        %v966 = vmul.f32 %v822, %v936
        %v967 = vmul.f32 %v863, %v936
        %v968 = vmul.f32 %v667, %v936
        %v969 = vadd.f32 %v901, %v937
        %v970 = vadd.f32 %v902, %v938
        %v971 = vadd.f32 %v903, %v939
        %v972 = vadd.f32 %v904, %v940
        %v973 = vadd.f32 %v905, %v941
        %v974 = vadd.f32 %v906, %v942
        %v975 = vadd.f32 %v907, %v943
        %v976 = vadd.f32 %v908, %v944
        %v977 = vadd.f32 %v909, %v945
        %v978 = vadd.f32 %v910, %v946
        %v979 = vadd.f32 %v911, %v947
        %v980 = vadd.f32 %v912, %v948
        %v981 = vadd.f32 %v913, %v949
        %v982 = vadd.f32 %v914, %v950
        %v983 = vadd.f32 %v915, %v951
        %v984 = vadd.f32 %v916, %v952
        %v985 = vadd.f32 %v917, %v953
        %v986 = vadd.f32 %v918, %v954
        %v987 = vadd.f32 %v919, %v955
        %v988 = vadd.f32 %v920, %v956
        %v989 = vadd.f32 %v921, %v957
        %v990 = vadd.f32 %v922, %v958
        %v991 = vadd.f32 %v923, %v959
        %v992 = vadd.f32 %v924, %v960
        %v993 = vadd.f32 %v925, %v961
        %v994 = vadd.f32 %v926, %v962
        %v995 = vadd.f32 %v927, %v963
        %v996 = vadd.f32 %v928, %v964
        %v997 = vadd.f32 %v929, %v965
        %v998 = vadd.f32 %v930, %v966
        %v999 = vadd.f32 %v931, %v967
        %v1000 = vadd.f32 %v932, %v968
        %v1001 = vld [vmem:[%s2] sm:$0x1]
        %v1003 = vlaneseq
        %v1004 = vshrl.u32 %v1003, 7
        %v1005 = vsub.s32 0, %v1004
        %v1006 = vrot.slane %v1001, %v1005
        %v1008 = vadd.f32 %v969, %v1006
        %v1009 = vadd.f32 %v970, %v1006
        %v1010 = vadd.f32 %v971, %v1006
        %v1011 = vadd.f32 %v972, %v1006
        %v1012 = vadd.f32 %v973, %v1006
        %v1013 = vadd.f32 %v974, %v1006
        %v1014 = vadd.f32 %v975, %v1006
        %v1015 = vadd.f32 %v976, %v1006
        %v1016 = vadd.f32 %v977, %v1006
        %v1017 = vadd.f32 %v978, %v1006
        %v1018 = vadd.f32 %v979, %v1006
        %v1019 = vadd.f32 %v980, %v1006
        %v1020 = vadd.f32 %v981, %v1006
        %v1021 = vadd.f32 %v982, %v1006
        %v1022 = vadd.f32 %v983, %v1006
        %v1023 = vadd.f32 %v984, %v1006
        %v1024 = vadd.f32 %v985, %v1006
        %v1025 = vadd.f32 %v986, %v1006
        %v1026 = vadd.f32 %v987, %v1006
        %v1027 = vadd.f32 %v988, %v1006
        %v1028 = vadd.f32 %v989, %v1006
        %v1029 = vadd.f32 %v990, %v1006
        %v1030 = vadd.f32 %v991, %v1006
        %v1031 = vadd.f32 %v992, %v1006
        %v1032 = vadd.f32 %v993, %v1006
        %v1033 = vadd.f32 %v994, %v1006
        %v1034 = vadd.f32 %v995, %v1006
        %v1035 = vadd.f32 %v996, %v1006
        %v1036 = vadd.f32 %v997, %v1006
        %v1037 = vadd.f32 %v998, %v1006
        %v1038 = vadd.f32 %v999, %v1006
        %v1039 = vadd.f32 %v1000, %v1006
        %v1040 = vmax.f32 %v1008, 0.0
        %v1041 = vmax.f32 %v1009, 0.0
        %v1042 = vmax.f32 %v1010, 0.0
        %v1043 = vmax.f32 %v1011, 0.0
        %v1044 = vmax.f32 %v1012, 0.0
        %v1045 = vmax.f32 %v1013, 0.0
        %v1046 = vmax.f32 %v1014, 0.0
        %v1047 = vmax.f32 %v1015, 0.0
        %v1048 = vmax.f32 %v1016, 0.0
        %v1049 = vmax.f32 %v1017, 0.0
        %v1050 = vmax.f32 %v1018, 0.0
        %v1051 = vmax.f32 %v1019, 0.0
        %v1052 = vmax.f32 %v1020, 0.0
        %v1053 = vmax.f32 %v1021, 0.0
        %v1054 = vmax.f32 %v1022, 0.0
        %v1055 = vmax.f32 %v1023, 0.0
        %v1056 = vmax.f32 %v1024, 0.0
        %v1057 = vmax.f32 %v1025, 0.0
        %v1058 = vmax.f32 %v1026, 0.0
        %v1059 = vmax.f32 %v1027, 0.0
        %v1060 = vmax.f32 %v1028, 0.0
        %v1061 = vmax.f32 %v1029, 0.0
        %v1062 = vmax.f32 %v1030, 0.0
        %v1063 = vmax.f32 %v1031, 0.0
        %v1064 = vmax.f32 %v1032, 0.0
        %v1065 = vmax.f32 %v1033, 0.0
        %v1066 = vmax.f32 %v1034, 0.0
        %v1067 = vmax.f32 %v1035, 0.0
        %v1068 = vmax.f32 %v1036, 0.0
        %v1069 = vmax.f32 %v1037, 0.0
        %v1070 = vmax.f32 %v1038, 0.0
        %v1071 = vmax.f32 %v1039, 0.0
        %v1072 = vmax.f32 %v1040, %v1041
        %v1073 = vmax.f32 %v1042, %v1043
        %v1074 = vmax.f32 %v1044, %v1045
        %v1075 = vmax.f32 %v1046, %v1047
        %v1076 = vmax.f32 %v1048, %v1049
        %v1077 = vmax.f32 %v1050, %v1051
        %v1078 = vmax.f32 %v1052, %v1053
        %v1079 = vmax.f32 %v1054, %v1055
        %v1080 = vmax.f32 %v1056, %v1057
        %v1081 = vmax.f32 %v1058, %v1059
        %v1082 = vmax.f32 %v1060, %v1061
        %v1083 = vmax.f32 %v1062, %v1063
        %v1084 = vmax.f32 %v1064, %v1065
        %v1085 = vmax.f32 %v1066, %v1067
        %v1086 = vmax.f32 %v1068, %v1069
        %v1087 = vmax.f32 %v1070, %v1071
        %1104 = vrot.lane.b32.xlu0 %v1072, 64
        %v1105 = vpop.permute.xlu0 %1104
        %1106 = vrot.lane.b32.xlu0 %v1073, 64
        %v1107 = vpop.permute.xlu0 %1106
        %1108 = vrot.lane.b32.xlu0 %v1074, 64
        %v1109 = vpop.permute.xlu0 %1108
        %1110 = vrot.lane.b32.xlu0 %v1075, 64
        %v1111 = vpop.permute.xlu0 %1110
        %1112 = vrot.lane.b32.xlu0 %v1076, 64
        %v1113 = vpop.permute.xlu0 %1112
        %1114 = vrot.lane.b32.xlu0 %v1077, 64
        %v1115 = vpop.permute.xlu0 %1114
        %1116 = vrot.lane.b32.xlu0 %v1078, 64
        %v1117 = vpop.permute.xlu0 %1116
        %1118 = vrot.lane.b32.xlu0 %v1079, 64
        %v1119 = vpop.permute.xlu0 %1118
        %1120 = vrot.lane.b32.xlu0 %v1080, 64
        %v1121 = vpop.permute.xlu0 %1120
        %1122 = vrot.lane.b32.xlu0 %v1081, 64
        %v1123 = vpop.permute.xlu0 %1122
        %1124 = vrot.lane.b32.xlu0 %v1082, 64
        %v1125 = vpop.permute.xlu0 %1124
        %1126 = vrot.lane.b32.xlu0 %v1083, 64
        %v1127 = vpop.permute.xlu0 %1126
        %1128 = vrot.lane.b32.xlu0 %v1084, 64
        %v1129 = vpop.permute.xlu0 %1128
        %1130 = vrot.lane.b32.xlu0 %v1085, 64
        %v1131 = vpop.permute.xlu0 %1130
        %1132 = vrot.lane.b32.xlu0 %v1086, 64
        %v1133 = vpop.permute.xlu0 %1132
        %1134 = vrot.lane.b32.xlu0 %v1087, 64
        %v1135 = vpop.permute.xlu0 %1134
        %vm1152 = vcmask 523264
        %v1153 = vsel %vm1152, 0.0, %v1105
        %v1154 = vsel %vm1152, %v1072, %v1107
        %v1155 = vsel %vm1152, %v1073, %v1109
        %v1156 = vsel %vm1152, %v1074, %v1111
        %v1157 = vsel %vm1152, %v1075, %v1113
        %v1158 = vsel %vm1152, %v1076, %v1115
        %v1159 = vsel %vm1152, %v1077, %v1117
        %v1160 = vsel %vm1152, %v1078, %v1119
        %v1161 = vsel %vm1152, %v1079, %v1121
        %v1162 = vsel %vm1152, %v1080, %v1123
        %v1163 = vsel %vm1152, %v1081, %v1125
        %v1164 = vsel %vm1152, %v1082, %v1127
        %v1165 = vsel %vm1152, %v1083, %v1129
        %v1166 = vsel %vm1152, %v1084, %v1131
        %v1167 = vsel %vm1152, %v1085, %v1133
        %v1168 = vsel %vm1152, %v1086, %v1135
        %v1169 = vpack.c.bf16 %v1154, %v1153
        %v1170 = vpack.c.bf16 %v1074, %v1073
        %v1171 = vpack.c.bf16 %v1156, %v1155
        %v1172 = vpack.c.bf16 %v1076, %v1075
        %v1173 = vpack.c.bf16 %v1158, %v1157
        %v1174 = vpack.c.bf16 %v1078, %v1077
        %v1175 = vpack.c.bf16 %v1160, %v1159
        %v1176 = vpack.c.bf16 %v1080, %v1079
        %v1177 = vpack.c.bf16 %v1162, %v1161
        %v1178 = vpack.c.bf16 %v1082, %v1081
        %v1179 = vpack.c.bf16 %v1164, %v1163
        %v1180 = vpack.c.bf16 %v1084, %v1083
        %v1181 = vpack.c.bf16 %v1166, %v1165
        %v1182 = vpack.c.bf16 %v1086, %v1085
        %v1183 = vpack.c.bf16 %v1168, %v1167
        %v1184 = vpack.c.bf16 0.0, %v1087
        %v1185 = vld [vmem:[%s3] sm:$0xf]
        %v1186 = vld [vmem:[%s3 + $0x4] sm:$0xf]
        %v1187 = vld [vmem:[%s3 + $0x8] sm:$0xf]
        %v1188 = vld [vmem:[%s3 + $0xc] sm:$0xf]
        %v1189 = vld [vmem:[%s3 + $0x10] sm:$0xf]
        %v1190 = vld [vmem:[%s3 + $0x14] sm:$0xf]
        %v1191 = vld [vmem:[%s3 + $0x18] sm:$0xf]
        %v1192 = vld [vmem:[%s3 + $0x1c] sm:$0xf]
        %v1193 = vld [vmem:[%s3 + $0x20] sm:$0xf]
        %v1194 = vld [vmem:[%s3 + $0x24] sm:$0xf]
        %v1195 = vld [vmem:[%s3 + $0x28] sm:$0xf]
        %v1196 = vld [vmem:[%s3 + $0x2c] sm:$0xf]
        %v1197 = vld [vmem:[%s3 + $0x30] sm:$0xf]
        %v1198 = vld [vmem:[%s3 + $0x34] sm:$0xf]
        %v1199 = vld [vmem:[%s3 + $0x38] sm:$0xf]
        %v1200 = vld [vmem:[%s3 + $0x3c] sm:$0xf]
        %v1201 = vld [vmem:[%s3 + $0x40] sm:$0xf]
        %v1202 = vld [vmem:[%s3 + $0x44] sm:$0xf]
        %v1203 = vld [vmem:[%s3 + $0x48] sm:$0xf]
        %v1204 = vld [vmem:[%s3 + $0x4c] sm:$0xf]
        %v1205 = vld [vmem:[%s3 + $0x50] sm:$0xf]
        %v1206 = vld [vmem:[%s3 + $0x54] sm:$0xf]
        %v1207 = vld [vmem:[%s3 + $0x58] sm:$0xf]
        %v1208 = vld [vmem:[%s3 + $0x5c] sm:$0xf]
        %v1209 = vld [vmem:[%s4] sm:$0x1]
        %v1211 = vlaneseq
        %v1212 = vshrl.u32 %v1211, 7
        %v1213 = vsub.s32 0, %v1212
        %v1214 = vrot.slane %v1209, %v1213
        %v1240 = vunpack.c.l.b16 %v1185
        %v1241 = vunpack.c.l.b16 %v1186
        %v1242 = vunpack.c.l.b16 %v1187
        %v1243 = vunpack.c.l.b16 %v1188
        %v1244 = vunpack.c.l.b16 %v1189
        %v1245 = vunpack.c.l.b16 %v1190
        %v1246 = vunpack.c.l.b16 %v1191
        %v1247 = vunpack.c.l.b16 %v1192
        %v1248 = vunpack.c.l.b16 %v1193
        %v1249 = vunpack.c.l.b16 %v1194
        %v1250 = vunpack.c.l.b16 %v1195
        %v1251 = vunpack.c.l.b16 %v1196
        %v1252 = vunpack.c.l.b16 %v1197
        %v1253 = vunpack.c.l.b16 %v1198
        %v1254 = vunpack.c.l.b16 %v1199
        %v1255 = vunpack.c.l.b16 %v1200
        %v1256 = vunpack.c.l.b16 %v1201
        %v1257 = vunpack.c.l.b16 %v1202
        %v1258 = vunpack.c.l.b16 %v1203
        %v1259 = vunpack.c.l.b16 %v1204
        %v1260 = vunpack.c.l.b16 %v1205
        %v1261 = vunpack.c.l.b16 %v1206
        %v1262 = vunpack.c.l.b16 %v1207
        %v1263 = vunpack.c.l.b16 %v1208
        %v1264 = vpack.c.b16 %v1241, %v1240
        %v1265 = vpack.c.b16 %v1243, %v1242
        %v1266 = vpack.c.b16 %v1245, %v1244
        %v1267 = vpack.c.b16 %v1247, %v1246
        %v1268 = vpack.c.b16 %v1249, %v1248
        %v1269 = vpack.c.b16 %v1251, %v1250
        %v1270 = vpack.c.b16 %v1253, %v1252
        %v1271 = vpack.c.b16 %v1255, %v1254
        %v1272 = vpack.c.b16 %v1257, %v1256
        %v1273 = vpack.c.b16 %v1259, %v1258
        %v1274 = vpack.c.b16 %v1261, %v1260
        %v1275 = vpack.c.b16 %v1263, %v1262
        %v1289 = vsel %vm1152, %v1170, 0
        %v1292 = vsel %vm1152, %v1172, 0
        %v1295 = vsel %vm1152, %v1174, 0
        %v1298 = vsel %vm1152, %v1176, 0
        %v1301 = vsel %vm1152, %v1178, 0
        %v1304 = vsel %vm1152, %v1180, 0
        %v1307 = vsel %vm1152, %v1182, 0
        %v1310 = vsel %vm1152, %v1184, 0
        %1312 = vmatprep.subr.bf16.mxu0 0
        %1313 = vmatpush1.bf16.msra.mxu0 %v1271
        %1314 = vmatprep.subr.bf16.mxu0 0
        %1315 = vmatpush1.bf16.msra.mxu0 %v1270
        %1316 = vmatprep.subr.bf16.mxu0 0
        %1317 = vmatpush1.bf16.msra.mxu0 %v1269
        %1318 = vmatprep.subr.bf16.mxu0 0
        %1319 = vmatpush1.bf16.msra.mxu0 %v1268
        %1320 = vmatprep.subr.bf16.mxu0 0
        %1321 = vmatpush1.bf16.msra.mxu0 %v1267
        %1322 = vmatprep.subr.bf16.mxu0 0
        %1323 = vmatpush1.bf16.msra.mxu0 %v1266
        %1324 = vmatprep.subr.bf16.mxu0 0
        %1325 = vmatpush1.bf16.msra.mxu0 %v1265
        %1326 = vmatprep.subr.bf16.mxu0 0
        %1327 = vmatpush1.bf16.msra.mxu0 %v1264
        %1328 = vmatprep.subr.bf16.mxu0 0
        %1329 = vmatpush2.bf16.msra.mxu0 0
        %1330 = vmatprep.subr.bf16.mxu0 0
        %1331 = vmatpush2.bf16.msra.mxu0 0
        %1332 = vmatprep.subr.bf16.mxu0 0
        %1333 = vmatpush2.bf16.msra.mxu0 0
        %1334 = vmatprep.subr.bf16.mxu0 0
        %1335 = vmatpush2.bf16.msra.mxu0 0
        %1336 = vmatprep.subr.bf16.mxu0 0
        %1337 = vmatpush2.bf16.msra.mxu0 %v1275
        %1338 = vmatprep.subr.bf16.mxu0 0
        %1339 = vmatpush2.bf16.msra.mxu0 %v1274
        %1340 = vmatprep.subr.bf16.mxu0 0
        %1341 = vmatpush2.bf16.msra.mxu0 %v1273
        %1342 = vmatprep.subr.bf16.mxu0 0
        %1343 = vmatpush2.bf16.msra.mxu0 %v1272
        %1344 = vmatprep.mubr.bf16.mxu0 %v1289
        %1345 = vmatmul.mubr.bf16.gmra.mxu0 %v1169
        %v1346 = vpop.f32.mrf.mxu0
        %v1347 = vadd.f32 %v1214, %v1346
        %v1348 = vpop.f32.mrf.mxu0
        %v1349 = vpop.f32.mrf.mxu0
        %v1350 = vadd.f32 %v1214, %v1349
        %v1351 = vpop.f32.mrf.mxu0
        %1352 = vmatprep.mubr.bf16.mxu0 %v1292
        %1353 = vmatmul.mubr.bf16.gmra.mxu0 %v1171
        %v1354 = vpop.f32.mrf.mxu0
        %v1355 = vadd.f32 %v1214, %v1354
        %v1356 = vpop.f32.mrf.mxu0
        %v1357 = vpop.f32.mrf.mxu0
        %v1358 = vadd.f32 %v1214, %v1357
        %v1359 = vpop.f32.mrf.mxu0
        %1360 = vmatprep.mubr.bf16.mxu0 %v1295
        %1361 = vmatmul.mubr.bf16.gmra.mxu0 %v1173
        %v1362 = vpop.f32.mrf.mxu0
        %v1363 = vadd.f32 %v1214, %v1362
        %v1364 = vpop.f32.mrf.mxu0
        %v1365 = vpop.f32.mrf.mxu0
        %v1366 = vadd.f32 %v1214, %v1365
        %v1367 = vpop.f32.mrf.mxu0
        %1368 = vmatprep.mubr.bf16.mxu0 %v1298
        %1369 = vmatmul.mubr.bf16.gmra.mxu0 %v1175
        %v1370 = vpop.f32.mrf.mxu0
        %v1371 = vadd.f32 %v1214, %v1370
        %v1372 = vpop.f32.mrf.mxu0
        %v1373 = vpop.f32.mrf.mxu0
        %v1374 = vadd.f32 %v1214, %v1373
        %v1375 = vpop.f32.mrf.mxu0
        %1376 = vmatprep.mubr.bf16.mxu0 %v1301
        %1377 = vmatmul.mubr.bf16.gmra.mxu0 %v1177
        %v1378 = vpop.f32.mrf.mxu0
        %v1379 = vadd.f32 %v1214, %v1378
        %v1380 = vpop.f32.mrf.mxu0
        %v1381 = vpop.f32.mrf.mxu0
        %v1382 = vadd.f32 %v1214, %v1381
        %v1383 = vpop.f32.mrf.mxu0
        %1384 = vmatprep.mubr.bf16.mxu0 %v1304
        %1385 = vmatmul.mubr.bf16.gmra.mxu0 %v1179
        %v1386 = vpop.f32.mrf.mxu0
        %v1387 = vadd.f32 %v1214, %v1386
        %v1388 = vpop.f32.mrf.mxu0
        %v1389 = vpop.f32.mrf.mxu0
        %v1390 = vadd.f32 %v1214, %v1389
        %v1391 = vpop.f32.mrf.mxu0
        %1392 = vmatprep.mubr.bf16.mxu0 %v1307
        %1393 = vmatmul.mubr.bf16.gmra.mxu0 %v1181
        %v1394 = vpop.f32.mrf.mxu0
        %v1395 = vadd.f32 %v1214, %v1394
        %v1396 = vpop.f32.mrf.mxu0
        %v1397 = vpop.f32.mrf.mxu0
        %v1398 = vadd.f32 %v1214, %v1397
        %v1399 = vpop.f32.mrf.mxu0
        %1400 = vmatprep.mubr.bf16.mxu0 %v1310
        %1401 = vmatmul.mubr.bf16.gmra.mxu0 %v1183
        %v1402 = vpop.f32.mrf.mxu0
        %v1403 = vadd.f32 %v1214, %v1402
        %v1404 = vpop.f32.mrf.mxu0
        %v1405 = vpop.f32.mrf.mxu0
        %v1406 = vadd.f32 %v1214, %v1405
        %v1407 = vpop.f32.mrf.mxu0
        %1408 = vdwg.mxu0
        %v1409 = vmax.f32 %v1347, 0.0
        %v1410 = vmax.f32 %v1350, 0.0
        %v1411 = vmax.f32 %v1355, 0.0
        %v1412 = vmax.f32 %v1358, 0.0
        %v1413 = vmax.f32 %v1363, 0.0
        %v1414 = vmax.f32 %v1366, 0.0
        %v1415 = vmax.f32 %v1371, 0.0
        %v1416 = vmax.f32 %v1374, 0.0
        %v1417 = vmax.f32 %v1379, 0.0
        %v1418 = vmax.f32 %v1382, 0.0
        %v1419 = vmax.f32 %v1387, 0.0
        %v1420 = vmax.f32 %v1390, 0.0
        %v1421 = vmax.f32 %v1395, 0.0
        %v1422 = vmax.f32 %v1398, 0.0
        %v1423 = vmax.f32 %v1403, 0.0
        %v1424 = vmax.f32 %v1406, 0.0
        %v1425 = vmax.f32 %v1409, %v1410
        %v1426 = vmax.f32 %v1411, %v1412
        %v1427 = vmax.f32 %v1413, %v1414
        %v1428 = vmax.f32 %v1415, %v1416
        %v1429 = vmax.f32 %v1417, %v1418
        %v1430 = vmax.f32 %v1419, %v1420
        %v1431 = vmax.f32 %v1421, %v1422
        %v1432 = vmax.f32 %v1423, %v1424
        %v1433 = vpack.c.bf16 %v1425, 0.0
        %v1434 = vpack.c.bf16 %v1426, %v1425
        %v1435 = vpack.c.bf16 %v1427, %v1426
        %v1436 = vpack.c.bf16 %v1428, %v1427
        %v1437 = vpack.c.bf16 %v1429, %v1428
        %v1438 = vpack.c.bf16 %v1430, %v1429
        %v1439 = vpack.c.bf16 %v1431, %v1430
        %v1440 = vpack.c.bf16 %v1432, %v1431
        %v1441 = vpack.c.bf16 0.0, %v1432
        %v1442 = vld [vmem:[%s5] sm:$0xff]
        %v1443 = vld [vmem:[%s5 + $0x8] sm:$0xff]
        %v1444 = vld [vmem:[%s5 + $0x10] sm:$0xff]
        %v1445 = vld [vmem:[%s5 + $0x18] sm:$0xff]
        %v1446 = vld [vmem:[%s5 + $0x20] sm:$0xff]
        %v1447 = vld [vmem:[%s5 + $0x28] sm:$0xff]
        %v1448 = vld [vmem:[%s5 + $0x30] sm:$0xff]
        %v1449 = vld [vmem:[%s5 + $0x38] sm:$0xff]
        %v1450 = vld [vmem:[%s5 + $0x40] sm:$0xff]
        %v1451 = vld [vmem:[%s5 + $0x48] sm:$0xff]
        %v1452 = vld [vmem:[%s5 + $0x50] sm:$0xff]
        %v1453 = vld [vmem:[%s5 + $0x58] sm:$0xff]
        %v1454 = vld [vmem:[%s5 + $0x60] sm:$0xff]
        %v1455 = vld [vmem:[%s5 + $0x68] sm:$0xff]
        %v1456 = vld [vmem:[%s5 + $0x70] sm:$0xff]
        %v1457 = vld [vmem:[%s5 + $0x78] sm:$0xff]
        %v1458 = vld [vmem:[%s5 + $0x80] sm:$0xff]
        %v1459 = vld [vmem:[%s5 + $0x88] sm:$0xff]
        %v1460 = vld [vmem:[%s5 + $0x90] sm:$0xff]
        %v1461 = vld [vmem:[%s5 + $0x98] sm:$0xff]
        %v1462 = vld [vmem:[%s5 + $0xa0] sm:$0xff]
        %v1463 = vld [vmem:[%s5 + $0xa8] sm:$0xff]
        %v1464 = vld [vmem:[%s5 + $0xb0] sm:$0xff]
        %v1465 = vld [vmem:[%s5 + $0xb8] sm:$0xff]
        %v1466 = vld [vmem:[%s5 + $0xc0] sm:$0xff]
        %v1467 = vld [vmem:[%s5 + $0xc8] sm:$0xff]
        %v1468 = vld [vmem:[%s5 + $0xd0] sm:$0xff]
        %v1469 = vld [vmem:[%s5 + $0xd8] sm:$0xff]
        %v1470 = vld [vmem:[%s5 + $0xe0] sm:$0xff]
        %v1471 = vld [vmem:[%s5 + $0xe8] sm:$0xff]
        %v1472 = vld [vmem:[%s5 + $0xf0] sm:$0xff]
        %v1473 = vld [vmem:[%s5 + $0xf8] sm:$0xff]
        %v1474 = vld [vmem:[%s5 + $0x100] sm:$0xff]
        %v1475 = vld [vmem:[%s5 + $0x108] sm:$0xff]
        %v1476 = vld [vmem:[%s5 + $0x110] sm:$0xff]
        %v1477 = vld [vmem:[%s5 + $0x118] sm:$0xff]
        %v1478 = vld [vmem:[%s5 + $0x120] sm:$0xff]
        %v1479 = vld [vmem:[%s5 + $0x128] sm:$0xff]
        %v1480 = vld [vmem:[%s5 + $0x130] sm:$0xff]
        %v1481 = vld [vmem:[%s5 + $0x138] sm:$0xff]
        %v1482 = vld [vmem:[%s5 + $0x140] sm:$0xff]
        %v1483 = vld [vmem:[%s5 + $0x148] sm:$0xff]
        %v1484 = vld [vmem:[%s5 + $0x150] sm:$0xff]
        %v1485 = vld [vmem:[%s5 + $0x158] sm:$0xff]
        %v1486 = vld [vmem:[%s5 + $0x160] sm:$0xff]
        %v1487 = vld [vmem:[%s5 + $0x168] sm:$0xff]
        %v1488 = vld [vmem:[%s5 + $0x170] sm:$0xff]
        %v1489 = vld [vmem:[%s5 + $0x178] sm:$0xff]
        %v1490 = vld [vmem:[%s6] sm:$0x3]
        %v1492 = vlaneseq
        %v1493 = vshrl.u32 %v1492, 7
        %v1494 = vsub.s32 0, %v1493
        %v1495 = vrot.slane %v1490, %v1494
        %v1496 = vlaneseq
        %v1497 = vshrl.u32 %v1496, 7
        %v1498 = vsub.s32 1, %v1497
        %v1499 = vrot.slane %v1490, %v1498
        %v1550 = vunpack.c.l.b16 %v1442
        %v1551 = vunpack.c.h.b16 %v1442
        %v1552 = vunpack.c.l.b16 %v1443
        %v1553 = vunpack.c.h.b16 %v1443
        %v1554 = vunpack.c.l.b16 %v1444
        %v1555 = vunpack.c.h.b16 %v1444
        %v1556 = vunpack.c.l.b16 %v1445
        %v1557 = vunpack.c.h.b16 %v1445
        %v1558 = vunpack.c.l.b16 %v1446
        %v1559 = vunpack.c.h.b16 %v1446
        %v1560 = vunpack.c.l.b16 %v1447
        %v1561 = vunpack.c.h.b16 %v1447
        %v1562 = vunpack.c.l.b16 %v1448
        %v1563 = vunpack.c.h.b16 %v1448
        %v1564 = vunpack.c.l.b16 %v1449
        %v1565 = vunpack.c.h.b16 %v1449
        %v1566 = vunpack.c.l.b16 %v1450
        %v1567 = vunpack.c.h.b16 %v1450
        %v1568 = vunpack.c.l.b16 %v1451
        %v1569 = vunpack.c.h.b16 %v1451
        %v1570 = vunpack.c.l.b16 %v1452
        %v1571 = vunpack.c.h.b16 %v1452
        %v1572 = vunpack.c.l.b16 %v1453
        %v1573 = vunpack.c.h.b16 %v1453
        %v1574 = vunpack.c.l.b16 %v1454
        %v1575 = vunpack.c.h.b16 %v1454
        %v1576 = vunpack.c.l.b16 %v1455
        %v1577 = vunpack.c.h.b16 %v1455
        %v1578 = vunpack.c.l.b16 %v1456
        %v1579 = vunpack.c.h.b16 %v1456
        %v1580 = vunpack.c.l.b16 %v1457
        %v1581 = vunpack.c.h.b16 %v1457
        %v1582 = vunpack.c.l.b16 %v1458
        %v1583 = vunpack.c.h.b16 %v1458
        %v1584 = vunpack.c.l.b16 %v1459
        %v1585 = vunpack.c.h.b16 %v1459
        %v1586 = vunpack.c.l.b16 %v1460
        %v1587 = vunpack.c.h.b16 %v1460
        %v1588 = vunpack.c.l.b16 %v1461
        %v1589 = vunpack.c.h.b16 %v1461
        %v1590 = vunpack.c.l.b16 %v1462
        %v1591 = vunpack.c.h.b16 %v1462
        %v1592 = vunpack.c.l.b16 %v1463
        %v1593 = vunpack.c.h.b16 %v1463
        %v1594 = vunpack.c.l.b16 %v1464
        %v1595 = vunpack.c.h.b16 %v1464
        %v1596 = vunpack.c.l.b16 %v1465
        %v1597 = vunpack.c.h.b16 %v1465
        %v1598 = vunpack.c.l.b16 %v1466
        %v1599 = vunpack.c.h.b16 %v1466
        %v1600 = vunpack.c.l.b16 %v1467
        %v1601 = vunpack.c.h.b16 %v1467
        %v1602 = vunpack.c.l.b16 %v1468
        %v1603 = vunpack.c.h.b16 %v1468
        %v1604 = vunpack.c.l.b16 %v1469
        %v1605 = vunpack.c.h.b16 %v1469
        %v1606 = vunpack.c.l.b16 %v1470
        %v1607 = vunpack.c.h.b16 %v1470
        %v1608 = vunpack.c.l.b16 %v1471
        %v1609 = vunpack.c.h.b16 %v1471
        %v1610 = vunpack.c.l.b16 %v1472
        %v1611 = vunpack.c.h.b16 %v1472
        %v1612 = vunpack.c.l.b16 %v1473
        %v1613 = vunpack.c.h.b16 %v1473
        %v1614 = vunpack.c.l.b16 %v1474
        %v1615 = vunpack.c.h.b16 %v1474
        %v1616 = vunpack.c.l.b16 %v1475
        %v1617 = vunpack.c.h.b16 %v1475
        %v1618 = vunpack.c.l.b16 %v1476
        %v1619 = vunpack.c.h.b16 %v1476
        %v1620 = vunpack.c.l.b16 %v1477
        %v1621 = vunpack.c.h.b16 %v1477
        %v1622 = vunpack.c.l.b16 %v1478
        %v1623 = vunpack.c.h.b16 %v1478
        %v1624 = vunpack.c.l.b16 %v1479
        %v1625 = vunpack.c.h.b16 %v1479
        %v1626 = vunpack.c.l.b16 %v1480
        %v1627 = vunpack.c.h.b16 %v1480
        %v1628 = vunpack.c.l.b16 %v1481
        %v1629 = vunpack.c.h.b16 %v1481
        %v1630 = vunpack.c.l.b16 %v1482
        %v1631 = vunpack.c.h.b16 %v1482
        %v1632 = vunpack.c.l.b16 %v1483
        %v1633 = vunpack.c.h.b16 %v1483
        %v1634 = vunpack.c.l.b16 %v1484
        %v1635 = vunpack.c.h.b16 %v1484
        %v1636 = vunpack.c.l.b16 %v1485
        %v1637 = vunpack.c.h.b16 %v1485
        %v1638 = vunpack.c.l.b16 %v1486
        %v1639 = vunpack.c.h.b16 %v1486
        %v1640 = vunpack.c.l.b16 %v1487
        %v1641 = vunpack.c.h.b16 %v1487
        %v1642 = vunpack.c.l.b16 %v1488
        %v1643 = vunpack.c.h.b16 %v1488
        %v1644 = vunpack.c.l.b16 %v1489
        %v1645 = vunpack.c.h.b16 %v1489
        %v1646 = vpack.c.b16 %v1552, %v1550
        %v1647 = vpack.c.b16 %v1553, %v1551
        %v1648 = vpack.c.b16 %v1556, %v1554
        %v1649 = vpack.c.b16 %v1557, %v1555
        %v1650 = vpack.c.b16 %v1560, %v1558
        %v1651 = vpack.c.b16 %v1561, %v1559
        %v1652 = vpack.c.b16 %v1564, %v1562
        %v1653 = vpack.c.b16 %v1565, %v1563
        %v1654 = vpack.c.b16 %v1568, %v1566
        %v1655 = vpack.c.b16 %v1569, %v1567
        %v1656 = vpack.c.b16 %v1572, %v1570
        %v1657 = vpack.c.b16 %v1573, %v1571
        %v1658 = vpack.c.b16 %v1576, %v1574
        %v1659 = vpack.c.b16 %v1577, %v1575
        %v1660 = vpack.c.b16 %v1580, %v1578
        %v1661 = vpack.c.b16 %v1581, %v1579
        %v1662 = vpack.c.b16 %v1584, %v1582
        %v1663 = vpack.c.b16 %v1585, %v1583
        %v1664 = vpack.c.b16 %v1588, %v1586
        %v1665 = vpack.c.b16 %v1589, %v1587
        %v1666 = vpack.c.b16 %v1592, %v1590
        %v1667 = vpack.c.b16 %v1593, %v1591
        %v1668 = vpack.c.b16 %v1596, %v1594
        %v1669 = vpack.c.b16 %v1597, %v1595
        %v1670 = vpack.c.b16 %v1600, %v1598
        %v1671 = vpack.c.b16 %v1601, %v1599
        %v1672 = vpack.c.b16 %v1604, %v1602
        %v1673 = vpack.c.b16 %v1605, %v1603
        %v1674 = vpack.c.b16 %v1608, %v1606
        %v1675 = vpack.c.b16 %v1609, %v1607
        %v1676 = vpack.c.b16 %v1612, %v1610
        %v1677 = vpack.c.b16 %v1613, %v1611
        %v1678 = vpack.c.b16 %v1616, %v1614
        %v1679 = vpack.c.b16 %v1617, %v1615
        %v1680 = vpack.c.b16 %v1620, %v1618
        %v1681 = vpack.c.b16 %v1621, %v1619
        %v1682 = vpack.c.b16 %v1624, %v1622
        %v1683 = vpack.c.b16 %v1625, %v1623
        %v1684 = vpack.c.b16 %v1628, %v1626
        %v1685 = vpack.c.b16 %v1629, %v1627
        %v1686 = vpack.c.b16 %v1632, %v1630
        %v1687 = vpack.c.b16 %v1633, %v1631
        %v1688 = vpack.c.b16 %v1636, %v1634
        %v1689 = vpack.c.b16 %v1637, %v1635
        %v1690 = vpack.c.b16 %v1640, %v1638
        %v1691 = vpack.c.b16 %v1641, %v1639
        %v1692 = vpack.c.b16 %v1644, %v1642
        %v1693 = vpack.c.b16 %v1645, %v1643
        %1742 = vmatprep.subr.bf16.mxu0 %v1661
        %1743 = vmatpush1.bf16.msra.mxu0 %v1660
        %1744 = vmatprep.subr.bf16.mxu0 %v1659
        %1745 = vmatpush1.bf16.msra.mxu0 %v1658
        %1746 = vmatprep.subr.bf16.mxu0 %v1657
        %1747 = vmatpush1.bf16.msra.mxu0 %v1656
        %1748 = vmatprep.subr.bf16.mxu0 %v1655
        %1749 = vmatpush1.bf16.msra.mxu0 %v1654
        %1750 = vmatprep.subr.bf16.mxu0 %v1653
        %1751 = vmatpush1.bf16.msra.mxu0 %v1652
        %1752 = vmatprep.subr.bf16.mxu0 %v1651
        %1753 = vmatpush1.bf16.msra.mxu0 %v1650
        %1754 = vmatprep.subr.bf16.mxu0 %v1649
        %1755 = vmatpush1.bf16.msra.mxu0 %v1648
        %1756 = vmatprep.subr.bf16.mxu0 %v1647
        %1757 = vmatpush1.bf16.msra.mxu0 %v1646
        %1758 = vmatprep.subr.bf16.mxu0 %v1677
        %1759 = vmatpush2.bf16.msra.mxu0 %v1676
        %1760 = vmatprep.subr.bf16.mxu0 %v1675
        %1761 = vmatpush2.bf16.msra.mxu0 %v1674
        %1762 = vmatprep.subr.bf16.mxu0 %v1673
        %1763 = vmatpush2.bf16.msra.mxu0 %v1672
        %1764 = vmatprep.subr.bf16.mxu0 %v1671
        %1765 = vmatpush2.bf16.msra.mxu0 %v1670
        %1766 = vmatprep.subr.bf16.mxu0 %v1669
        %1767 = vmatpush2.bf16.msra.mxu0 %v1668
        %1768 = vmatprep.subr.bf16.mxu0 %v1667
        %1769 = vmatpush2.bf16.msra.mxu0 %v1666
        %1770 = vmatprep.subr.bf16.mxu0 %v1665
        %1771 = vmatpush2.bf16.msra.mxu0 %v1664
        %1772 = vmatprep.subr.bf16.mxu0 %v1663
        %1773 = vmatpush2.bf16.msra.mxu0 %v1662
        %1774 = vmatprep.mubr.bf16.mxu0 %v1434
        %1775 = vmatmul.mubr.bf16.gmra.mxu0 %v1433
        %v1776 = vpop.f32.mrf.mxu0
        %v1777 = vadd.f32 %v1495, %v1776
        %v1778 = vpop.f32.mrf.mxu0
        %v1779 = vadd.f32 %v1499, %v1778
        %v1780 = vpop.f32.mrf.mxu0
        %v1781 = vadd.f32 %v1495, %v1780
        %v1782 = vpop.f32.mrf.mxu0
        %v1783 = vadd.f32 %v1499, %v1782
        %1784 = vmatprep.mubr.bf16.mxu0 %v1436
        %1785 = vmatmul.mubr.bf16.gmra.mxu0 %v1435
        %v1786 = vpop.f32.mrf.mxu0
        %v1787 = vadd.f32 %v1495, %v1786
        %v1788 = vpop.f32.mrf.mxu0
        %v1789 = vadd.f32 %v1499, %v1788
        %v1790 = vpop.f32.mrf.mxu0
        %v1791 = vadd.f32 %v1495, %v1790
        %v1792 = vpop.f32.mrf.mxu0
        %v1793 = vadd.f32 %v1499, %v1792
        %1794 = vmatprep.mubr.bf16.mxu0 %v1438
        %1795 = vmatmul.mubr.bf16.gmra.mxu0 %v1437
        %v1796 = vpop.f32.mrf.mxu0
        %v1797 = vadd.f32 %v1495, %v1796
        %v1798 = vpop.f32.mrf.mxu0
        %v1799 = vadd.f32 %v1499, %v1798
        %v1800 = vpop.f32.mrf.mxu0
        %v1801 = vadd.f32 %v1495, %v1800
        %v1802 = vpop.f32.mrf.mxu0
        %v1803 = vadd.f32 %v1499, %v1802
        %1804 = vmatprep.mubr.bf16.mxu0 %v1440
        %1805 = vmatmul.mubr.bf16.gmra.mxu0 %v1439
        %v1806 = vpop.f32.mrf.mxu0
        %v1807 = vadd.f32 %v1495, %v1806
        %v1808 = vpop.f32.mrf.mxu0
        %v1809 = vadd.f32 %v1499, %v1808
        %v1810 = vpop.f32.mrf.mxu0
        %v1811 = vadd.f32 %v1495, %v1810
        %v1812 = vpop.f32.mrf.mxu0
        %v1813 = vadd.f32 %v1499, %v1812
        %1814 = vdwg.mxu0
        %1815 = vmatprep.subr.bf16.mxu0 %v1693
        %1816 = vmatpush1.bf16.msra.mxu0 %v1692
        %1817 = vmatprep.subr.bf16.mxu0 %v1691
        %1818 = vmatpush1.bf16.msra.mxu0 %v1690
        %1819 = vmatprep.subr.bf16.mxu0 %v1689
        %1820 = vmatpush1.bf16.msra.mxu0 %v1688
        %1821 = vmatprep.subr.bf16.mxu0 %v1687
        %1822 = vmatpush1.bf16.msra.mxu0 %v1686
        %1823 = vmatprep.subr.bf16.mxu0 %v1685
        %1824 = vmatpush1.bf16.msra.mxu0 %v1684
        %1825 = vmatprep.subr.bf16.mxu0 %v1683
        %1826 = vmatpush1.bf16.msra.mxu0 %v1682
        %1827 = vmatprep.subr.bf16.mxu0 %v1681
        %1828 = vmatpush1.bf16.msra.mxu0 %v1680
        %1829 = vmatprep.subr.bf16.mxu0 %v1679
        %1830 = vmatpush1.bf16.msra.mxu0 %v1678
        %1831 = vmatprep.subr.bf16.mxu0 0
        %1832 = vmatpush2.bf16.msra.mxu0 0
        %1833 = vmatprep.subr.bf16.mxu0 0
        %1834 = vmatpush2.bf16.msra.mxu0 0
        %1835 = vmatprep.subr.bf16.mxu0 0
        %1836 = vmatpush2.bf16.msra.mxu0 0
        %1837 = vmatprep.subr.bf16.mxu0 0
        %1838 = vmatpush2.bf16.msra.mxu0 0
        %1839 = vmatprep.subr.bf16.mxu0 0
        %1840 = vmatpush2.bf16.msra.mxu0 0
        %1841 = vmatprep.subr.bf16.mxu0 0
        %1842 = vmatpush2.bf16.msra.mxu0 0
        %1843 = vmatprep.subr.bf16.mxu0 0
        %1844 = vmatpush2.bf16.msra.mxu0 0
        %1845 = vmatprep.subr.bf16.mxu0 0
        %1846 = vmatpush2.bf16.msra.mxu0 0
        %1847 = vmatprep.mubr.bf16.mxu0 0
        %1848 = vmatmul.mubr.bf16.gmra.mxu0 %v1435
        %v1849 = vpop.f32.mrf.mxu0
        %v1850 = vadd.f32 %v1777, %v1849
        %v1851 = vpop.f32.mrf.mxu0
        %v1852 = vadd.f32 %v1779, %v1851
        %v1853 = vpop.f32.mrf.mxu0
        %v1854 = vadd.f32 %v1781, %v1853
        %v1855 = vpop.f32.mrf.mxu0
        %v1856 = vadd.f32 %v1783, %v1855
        %1857 = vmatprep.mubr.bf16.mxu0 0
        %1858 = vmatmul.mubr.bf16.gmra.mxu0 %v1437
        %v1859 = vpop.f32.mrf.mxu0
        %v1860 = vadd.f32 %v1787, %v1859
        %v1861 = vpop.f32.mrf.mxu0
        %v1862 = vadd.f32 %v1789, %v1861
        %v1863 = vpop.f32.mrf.mxu0
        %v1864 = vadd.f32 %v1791, %v1863
        %v1865 = vpop.f32.mrf.mxu0
        %v1866 = vadd.f32 %v1793, %v1865
        %1867 = vmatprep.mubr.bf16.mxu0 0
        %1868 = vmatmul.mubr.bf16.gmra.mxu0 %v1439
        %v1869 = vpop.f32.mrf.mxu0
        %v1870 = vadd.f32 %v1797, %v1869
        %v1871 = vpop.f32.mrf.mxu0
        %v1872 = vadd.f32 %v1799, %v1871
        %v1873 = vpop.f32.mrf.mxu0
        %v1874 = vadd.f32 %v1801, %v1873
        %v1875 = vpop.f32.mrf.mxu0
        %v1876 = vadd.f32 %v1803, %v1875
        %1877 = vmatprep.mubr.bf16.mxu0 0
        %1878 = vmatmul.mubr.bf16.gmra.mxu0 %v1441
        %v1879 = vpop.f32.mrf.mxu0
        %v1880 = vadd.f32 %v1807, %v1879
        %v1881 = vpop.f32.mrf.mxu0
        %v1882 = vadd.f32 %v1809, %v1881
        %v1883 = vpop.f32.mrf.mxu0
        %v1884 = vadd.f32 %v1811, %v1883
        %v1885 = vpop.f32.mrf.mxu0
        %v1886 = vadd.f32 %v1813, %v1885
        %1887 = vdwg.mxu0
        %v1888 = vmax.f32 %v1850, 0.0
        %v1889 = vmax.f32 %v1852, 0.0
        %v1890 = vmax.f32 %v1854, 0.0
        %v1891 = vmax.f32 %v1856, 0.0
        %v1892 = vmax.f32 %v1860, 0.0
        %v1893 = vmax.f32 %v1862, 0.0
        %v1894 = vmax.f32 %v1864, 0.0
        %v1895 = vmax.f32 %v1866, 0.0
        %v1896 = vmax.f32 %v1870, 0.0
        %v1897 = vmax.f32 %v1872, 0.0
        %v1898 = vmax.f32 %v1874, 0.0
        %v1899 = vmax.f32 %v1876, 0.0
        %v1900 = vmax.f32 %v1880, 0.0
        %v1901 = vmax.f32 %v1882, 0.0
        %v1902 = vmax.f32 %v1884, 0.0
        %v1903 = vmax.f32 %v1886, 0.0
        %v1904 = vmax.f32 %v1888, %v1890
        %v1905 = vmax.f32 %v1889, %v1891
        %v1906 = vmax.f32 %v1892, %v1894
        %v1907 = vmax.f32 %v1893, %v1895
        %v1908 = vmax.f32 %v1896, %v1898
        %v1909 = vmax.f32 %v1897, %v1899
        %v1910 = vmax.f32 %v1900, %v1902
        %v1911 = vmax.f32 %v1901, %v1903
        %v1912 = vpack.c.bf16 %v1904, %v1904
        %v1913 = vpack.c.bf16 %v1905, %v1905
        %v1914 = vpack.c.bf16 %v1906, %v1906
        %v1915 = vpack.c.bf16 %v1907, %v1907
        %v1916 = vpack.c.bf16 %v1908, %v1908
        %v1917 = vpack.c.bf16 %v1909, %v1909
        %v1918 = vpack.c.bf16 %v1910, %v1910
        %v1919 = vpack.c.bf16 %v1911, %v1911
        %v1920 = vld [vmem:[#allocation4] sm:$0xff]
        %v1921 = vld [vmem:[#allocation4 + $0x8] sm:$0xff]
        %v1922 = vld [vmem:[#allocation4 + $0x10] sm:$0xff]
        %v1923 = vld [vmem:[#allocation4 + $0x18] sm:$0xff]
        %v1924 = vld [vmem:[#allocation4 + $0x20] sm:$0xff]
        %v1925 = vld [vmem:[#allocation4 + $0x28] sm:$0xff]
        %v1926 = vld [vmem:[#allocation4 + $0x30] sm:$0xff]
        %v1927 = vld [vmem:[#allocation4 + $0x38] sm:$0xff]
        %v1928 = vld [vmem:[#allocation4 + $0x40] sm:$0xff]
        %v1929 = vld [vmem:[#allocation4 + $0x48] sm:$0xff]
        %v1930 = vld [vmem:[#allocation4 + $0x50] sm:$0xff]
        %v1931 = vld [vmem:[#allocation4 + $0x58] sm:$0xff]
        %v1932 = vld [vmem:[#allocation4 + $0x60] sm:$0xff]
        %v1933 = vld [vmem:[#allocation4 + $0x68] sm:$0xff]
        %v1934 = vld [vmem:[#allocation4 + $0x70] sm:$0xff]
        %v1935 = vld [vmem:[#allocation4 + $0x78] sm:$0xff]
        %v1936 = vld [vmem:[#allocation4 + $0x80] sm:$0xff]
        %v1937 = vld [vmem:[#allocation4 + $0x88] sm:$0xff]
        %v1938 = vld [vmem:[#allocation4 + $0x90] sm:$0xff]
        %v1939 = vld [vmem:[#allocation4 + $0x98] sm:$0xff]
        %v1940 = vld [vmem:[#allocation4 + $0xa0] sm:$0xff]
        %v1941 = vld [vmem:[#allocation4 + $0xa8] sm:$0xff]
        %v1942 = vld [vmem:[#allocation4 + $0xb0] sm:$0xff]
        %v1943 = vld [vmem:[#allocation4 + $0xb8] sm:$0xff]
        %v1944 = vld [vmem:[#allocation4 + $0xc0] sm:$0xff]
        %v1945 = vld [vmem:[#allocation4 + $0xc8] sm:$0xff]
        %v1946 = vld [vmem:[#allocation4 + $0xd0] sm:$0xff]
        %v1947 = vld [vmem:[#allocation4 + $0xd8] sm:$0xff]
        %v1948 = vld [vmem:[#allocation4 + $0xe0] sm:$0xff]
        %v1949 = vld [vmem:[#allocation4 + $0xe8] sm:$0xff]
        %v1950 = vld [vmem:[#allocation4 + $0xf0] sm:$0xff]
        %v1951 = vld [vmem:[#allocation4 + $0xf8] sm:$0xff]
        %v1952 = vld [vmem:[#allocation4 + $0x100] sm:$0xff]
        %v1953 = vld [vmem:[#allocation4 + $0x108] sm:$0xff]
        %v1954 = vld [vmem:[#allocation4 + $0x110] sm:$0xff]
        %v1955 = vld [vmem:[#allocation4 + $0x118] sm:$0xff]
        %v1956 = vld [vmem:[#allocation4 + $0x120] sm:$0xff]
        %v1957 = vld [vmem:[#allocation4 + $0x128] sm:$0xff]
        %v1958 = vld [vmem:[#allocation4 + $0x130] sm:$0xff]
        %v1959 = vld [vmem:[#allocation4 + $0x138] sm:$0xff]
        %v1960 = vld [vmem:[#allocation4 + $0x140] sm:$0xff]
        %v1961 = vld [vmem:[#allocation4 + $0x148] sm:$0xff]
        %v1962 = vld [vmem:[#allocation4 + $0x150] sm:$0xff]
        %v1963 = vld [vmem:[#allocation4 + $0x158] sm:$0xff]
        %v1964 = vld [vmem:[#allocation4 + $0x160] sm:$0xff]
        %v1965 = vld [vmem:[#allocation4 + $0x168] sm:$0xff]
        %v1966 = vld [vmem:[#allocation4 + $0x170] sm:$0xff]
        %v1967 = vld [vmem:[#allocation4 + $0x178] sm:$0xff]
        %v1968 = vld [vmem:[#allocation4 + $0x180] sm:$0xff]
        %v1969 = vld [vmem:[#allocation4 + $0x188] sm:$0xff]
        %v1970 = vld [vmem:[#allocation4 + $0x190] sm:$0xff]
        %v1971 = vld [vmem:[#allocation4 + $0x198] sm:$0xff]
        %v1972 = vld [vmem:[#allocation4 + $0x1a0] sm:$0xff]
        %v1973 = vld [vmem:[#allocation4 + $0x1a8] sm:$0xff]
        %v1974 = vld [vmem:[#allocation4 + $0x1b0] sm:$0xff]
        %v1975 = vld [vmem:[#allocation4 + $0x1b8] sm:$0xff]
        %v1976 = vld [vmem:[#allocation4 + $0x1c0] sm:$0xff]
        %v1977 = vld [vmem:[#allocation4 + $0x1c8] sm:$0xff]
        %v1978 = vld [vmem:[#allocation4 + $0x1d0] sm:$0xff]
        %v1979 = vld [vmem:[#allocation4 + $0x1d8] sm:$0xff]
        %v1980 = vld [vmem:[#allocation4 + $0x1e0] sm:$0xff]
        %v1981 = vld [vmem:[#allocation4 + $0x1e8] sm:$0xff]
        %v1982 = vld [vmem:[#allocation4 + $0x1f0] sm:$0xff]
        %v1983 = vld [vmem:[#allocation4 + $0x1f8] sm:$0xff]
        %v1984 = vld [vmem:[#allocation4 + $0x200] sm:$0xff]
        %v1985 = vld [vmem:[#allocation4 + $0x208] sm:$0xff]
        %v1986 = vld [vmem:[#allocation4 + $0x210] sm:$0xff]
        %v1987 = vld [vmem:[#allocation4 + $0x218] sm:$0xff]
        %v1988 = vld [vmem:[#allocation4 + $0x220] sm:$0xff]
        %v1989 = vld [vmem:[#allocation4 + $0x228] sm:$0xff]
        %v1990 = vld [vmem:[#allocation4 + $0x230] sm:$0xff]
        %v1991 = vld [vmem:[#allocation4 + $0x238] sm:$0xff]
        %v1992 = vld [vmem:[#allocation4 + $0x240] sm:$0xff]
        %v1993 = vld [vmem:[#allocation4 + $0x248] sm:$0xff]
        %v1994 = vld [vmem:[#allocation4 + $0x250] sm:$0xff]
        %v1995 = vld [vmem:[#allocation4 + $0x258] sm:$0xff]
        %v1996 = vld [vmem:[#allocation4 + $0x260] sm:$0xff]
        %v1997 = vld [vmem:[#allocation4 + $0x268] sm:$0xff]
        %v1998 = vld [vmem:[#allocation4 + $0x270] sm:$0xff]
        %v1999 = vld [vmem:[#allocation4 + $0x278] sm:$0xff]
        %v2000 = vld [vmem:[#allocation4 + $0x280] sm:$0xff]
        %v2001 = vld [vmem:[#allocation4 + $0x288] sm:$0xff]
        %v2002 = vld [vmem:[#allocation4 + $0x290] sm:$0xff]
        %v2003 = vld [vmem:[#allocation4 + $0x298] sm:$0xff]
        %v2004 = vld [vmem:[#allocation4 + $0x2a0] sm:$0xff]
        %v2005 = vld [vmem:[#allocation4 + $0x2a8] sm:$0xff]
        %v2006 = vld [vmem:[#allocation4 + $0x2b0] sm:$0xff]
        %v2007 = vld [vmem:[#allocation4 + $0x2b8] sm:$0xff]
        %v2008 = vld [vmem:[#allocation4 + $0x2c0] sm:$0xff]
        %v2009 = vld [vmem:[#allocation4 + $0x2c8] sm:$0xff]
        %v2010 = vld [vmem:[#allocation4 + $0x2d0] sm:$0xff]
        %v2011 = vld [vmem:[#allocation4 + $0x2d8] sm:$0xff]
        %v2012 = vld [vmem:[#allocation4 + $0x2e0] sm:$0xff]
        %v2013 = vld [vmem:[#allocation4 + $0x2e8] sm:$0xff]
        %v2014 = vld [vmem:[#allocation4 + $0x2f0] sm:$0xff]
        %v2015 = vld [vmem:[#allocation4 + $0x2f8] sm:$0xff]
        %v2016 = vld [vmem:[#allocation4 + $0x300] sm:$0xff]
        %v2017 = vld [vmem:[#allocation4 + $0x308] sm:$0xff]
        %v2018 = vld [vmem:[#allocation4 + $0x310] sm:$0xff]
        %v2019 = vld [vmem:[#allocation4 + $0x318] sm:$0xff]
        %v2020 = vld [vmem:[#allocation4 + $0x320] sm:$0xff]
        %v2021 = vld [vmem:[#allocation4 + $0x328] sm:$0xff]
        %v2022 = vld [vmem:[#allocation4 + $0x330] sm:$0xff]
        %v2023 = vld [vmem:[#allocation4 + $0x338] sm:$0xff]
        %v2024 = vld [vmem:[#allocation4 + $0x340] sm:$0xff]
        %v2025 = vld [vmem:[#allocation4 + $0x348] sm:$0xff]
        %v2026 = vld [vmem:[#allocation4 + $0x350] sm:$0xff]
        %v2027 = vld [vmem:[#allocation4 + $0x358] sm:$0xff]
        %v2028 = vld [vmem:[#allocation4 + $0x360] sm:$0xff]
        %v2029 = vld [vmem:[#allocation4 + $0x368] sm:$0xff]
        %v2030 = vld [vmem:[#allocation4 + $0x370] sm:$0xff]
        %v2031 = vld [vmem:[#allocation4 + $0x378] sm:$0xff]
        %v2032 = vld [vmem:[#allocation4 + $0x380] sm:$0xff]
        %v2033 = vld [vmem:[#allocation4 + $0x388] sm:$0xff]
        %v2034 = vld [vmem:[#allocation4 + $0x390] sm:$0xff]
        %v2035 = vld [vmem:[#allocation4 + $0x398] sm:$0xff]
        %v2036 = vld [vmem:[#allocation4 + $0x3a0] sm:$0xff]
        %v2037 = vld [vmem:[#allocation4 + $0x3a8] sm:$0xff]
        %v2038 = vld [vmem:[#allocation4 + $0x3b0] sm:$0xff]
        %v2039 = vld [vmem:[#allocation4 + $0x3b8] sm:$0xff]
        %v2040 = vld [vmem:[#allocation4 + $0x3c0] sm:$0xff]
        %v2041 = vld [vmem:[#allocation4 + $0x3c8] sm:$0xff]
        %v2042 = vld [vmem:[#allocation4 + $0x3d0] sm:$0xff]
        %v2043 = vld [vmem:[#allocation4 + $0x3d8] sm:$0xff]
        %v2044 = vld [vmem:[#allocation4 + $0x3e0] sm:$0xff]
        %v2045 = vld [vmem:[#allocation4 + $0x3e8] sm:$0xff]
        %v2046 = vld [vmem:[#allocation4 + $0x3f0] sm:$0xff]
        %v2047 = vld [vmem:[#allocation4 + $0x3f8] sm:$0xff]
        %v2048 = vld [vmem:[#allocation4 + $0x400] sm:$0xff]
        %v2049 = vld [vmem:[#allocation4 + $0x408] sm:$0xff]
        %v2050 = vld [vmem:[#allocation4 + $0x410] sm:$0xff]
        %v2051 = vld [vmem:[#allocation4 + $0x418] sm:$0xff]
        %v2052 = vld [vmem:[#allocation4 + $0x420] sm:$0xff]
        %v2053 = vld [vmem:[#allocation4 + $0x428] sm:$0xff]
        %v2054 = vld [vmem:[#allocation4 + $0x430] sm:$0xff]
        %v2055 = vld [vmem:[#allocation4 + $0x438] sm:$0xff]
        %v2056 = vld [vmem:[#allocation4 + $0x440] sm:$0xff]
        %v2057 = vld [vmem:[#allocation4 + $0x448] sm:$0xff]
        %v2058 = vld [vmem:[#allocation4 + $0x450] sm:$0xff]
        %v2059 = vld [vmem:[#allocation4 + $0x458] sm:$0xff]
        %v2060 = vld [vmem:[#allocation4 + $0x460] sm:$0xff]
        %v2061 = vld [vmem:[#allocation4 + $0x468] sm:$0xff]
        %v2062 = vld [vmem:[#allocation4 + $0x470] sm:$0xff]
        %v2063 = vld [vmem:[#allocation4 + $0x478] sm:$0xff]
        %v2064 = vld [vmem:[#allocation4 + $0x480] sm:$0xff]
        %v2065 = vld [vmem:[#allocation4 + $0x488] sm:$0xff]
        %v2066 = vld [vmem:[#allocation4 + $0x490] sm:$0xff]
        %v2067 = vld [vmem:[#allocation4 + $0x498] sm:$0xff]
        %v2068 = vld [vmem:[#allocation4 + $0x4a0] sm:$0xff]
        %v2069 = vld [vmem:[#allocation4 + $0x4a8] sm:$0xff]
        %v2070 = vld [vmem:[#allocation4 + $0x4b0] sm:$0xff]
        %v2071 = vld [vmem:[#allocation4 + $0x4b8] sm:$0xff]
        %v2072 = vld [vmem:[#allocation4 + $0x4c0] sm:$0xff]
        %v2073 = vld [vmem:[#allocation4 + $0x4c8] sm:$0xff]
        %v2074 = vld [vmem:[#allocation4 + $0x4d0] sm:$0xff]
        %v2075 = vld [vmem:[#allocation4 + $0x4d8] sm:$0xff]
        %v2076 = vld [vmem:[#allocation4 + $0x4e0] sm:$0xff]
        %v2077 = vld [vmem:[#allocation4 + $0x4e8] sm:$0xff]
        %v2078 = vld [vmem:[#allocation4 + $0x4f0] sm:$0xff]
        %v2079 = vld [vmem:[#allocation4 + $0x4f8] sm:$0xff]
        %v2080 = vld [vmem:[#allocation4 + $0x500] sm:$0xff]
        %v2081 = vld [vmem:[#allocation4 + $0x508] sm:$0xff]
        %v2082 = vld [vmem:[#allocation4 + $0x510] sm:$0xff]
        %v2083 = vld [vmem:[#allocation4 + $0x518] sm:$0xff]
        %v2084 = vld [vmem:[#allocation4 + $0x520] sm:$0xff]
        %v2085 = vld [vmem:[#allocation4 + $0x528] sm:$0xff]
        %v2086 = vld [vmem:[#allocation4 + $0x530] sm:$0xff]
        %v2087 = vld [vmem:[#allocation4 + $0x538] sm:$0xff]
        %v2088 = vld [vmem:[#allocation4 + $0x540] sm:$0xff]
        %v2089 = vld [vmem:[#allocation4 + $0x548] sm:$0xff]
        %v2090 = vld [vmem:[#allocation4 + $0x550] sm:$0xff]
        %v2091 = vld [vmem:[#allocation4 + $0x558] sm:$0xff]
        %v2092 = vld [vmem:[#allocation4 + $0x560] sm:$0xff]
        %v2093 = vld [vmem:[#allocation4 + $0x568] sm:$0xff]
        %v2094 = vld [vmem:[#allocation4 + $0x570] sm:$0xff]
        %v2095 = vld [vmem:[#allocation4 + $0x578] sm:$0xff]
        %v2096 = vld [vmem:[#allocation4 + $0x580] sm:$0xff]
        %v2097 = vld [vmem:[#allocation4 + $0x588] sm:$0xff]
        %v2098 = vld [vmem:[#allocation4 + $0x590] sm:$0xff]
        %v2099 = vld [vmem:[#allocation4 + $0x598] sm:$0xff]
        %v2100 = vld [vmem:[#allocation4 + $0x5a0] sm:$0xff]
        %v2101 = vld [vmem:[#allocation4 + $0x5a8] sm:$0xff]
        %v2102 = vld [vmem:[#allocation4 + $0x5b0] sm:$0xff]
        %v2103 = vld [vmem:[#allocation4 + $0x5b8] sm:$0xff]
        %v2104 = vld [vmem:[#allocation4 + $0x5c0] sm:$0xff]
        %v2105 = vld [vmem:[#allocation4 + $0x5c8] sm:$0xff]
        %v2106 = vld [vmem:[#allocation4 + $0x5d0] sm:$0xff]
        %v2107 = vld [vmem:[#allocation4 + $0x5d8] sm:$0xff]
        %v2108 = vld [vmem:[#allocation4 + $0x5e0] sm:$0xff]
        %v2109 = vld [vmem:[#allocation4 + $0x5e8] sm:$0xff]
        %v2110 = vld [vmem:[#allocation4 + $0x5f0] sm:$0xff]
        %v2111 = vld [vmem:[#allocation4 + $0x5f8] sm:$0xff]
        %v2112 = vld [vmem:[#allocation4 + $0x600] sm:$0xff]
        %v2113 = vld [vmem:[#allocation4 + $0x608] sm:$0xff]
        %v2114 = vld [vmem:[#allocation4 + $0x610] sm:$0xff]
        %v2115 = vld [vmem:[#allocation4 + $0x618] sm:$0xff]
        %v2116 = vld [vmem:[#allocation4 + $0x620] sm:$0xff]
        %v2117 = vld [vmem:[#allocation4 + $0x628] sm:$0xff]
        %v2118 = vld [vmem:[#allocation4 + $0x630] sm:$0xff]
        %v2119 = vld [vmem:[#allocation4 + $0x638] sm:$0xff]
        %v2120 = vld [vmem:[#allocation4 + $0x640] sm:$0xff]
        %v2121 = vld [vmem:[#allocation4 + $0x648] sm:$0xff]
        %v2122 = vld [vmem:[#allocation4 + $0x650] sm:$0xff]
        %v2123 = vld [vmem:[#allocation4 + $0x658] sm:$0xff]
        %v2124 = vld [vmem:[#allocation4 + $0x660] sm:$0xff]
        %v2125 = vld [vmem:[#allocation4 + $0x668] sm:$0xff]
        %v2126 = vld [vmem:[#allocation4 + $0x670] sm:$0xff]
        %v2127 = vld [vmem:[#allocation4 + $0x678] sm:$0xff]
        %v2128 = vld [vmem:[#allocation4 + $0x680] sm:$0xff]
        %v2129 = vld [vmem:[#allocation4 + $0x688] sm:$0xff]
        %v2130 = vld [vmem:[#allocation4 + $0x690] sm:$0xff]
        %v2131 = vld [vmem:[#allocation4 + $0x698] sm:$0xff]
        %v2132 = vld [vmem:[#allocation4 + $0x6a0] sm:$0xff]
        %v2133 = vld [vmem:[#allocation4 + $0x6a8] sm:$0xff]
        %v2134 = vld [vmem:[#allocation4 + $0x6b0] sm:$0xff]
        %v2135 = vld [vmem:[#allocation4 + $0x6b8] sm:$0xff]
        %v2136 = vld [vmem:[#allocation4 + $0x6c0] sm:$0xff]
        %v2137 = vld [vmem:[#allocation4 + $0x6c8] sm:$0xff]
        %v2138 = vld [vmem:[#allocation4 + $0x6d0] sm:$0xff]
        %v2139 = vld [vmem:[#allocation4 + $0x6d8] sm:$0xff]
        %v2140 = vld [vmem:[#allocation4 + $0x6e0] sm:$0xff]
        %v2141 = vld [vmem:[#allocation4 + $0x6e8] sm:$0xff]
        %v2142 = vld [vmem:[#allocation4 + $0x6f0] sm:$0xff]
        %v2143 = vld [vmem:[#allocation4 + $0x6f8] sm:$0xff]
        %v2144 = vld [vmem:[#allocation4 + $0x700] sm:$0xff]
        %v2145 = vld [vmem:[#allocation4 + $0x708] sm:$0xff]
        %v2146 = vld [vmem:[#allocation4 + $0x710] sm:$0xff]
        %v2147 = vld [vmem:[#allocation4 + $0x718] sm:$0xff]
        %v2148 = vld [vmem:[#allocation4 + $0x720] sm:$0xff]
        %v2149 = vld [vmem:[#allocation4 + $0x728] sm:$0xff]
        %v2150 = vld [vmem:[#allocation4 + $0x730] sm:$0xff]
        %v2151 = vld [vmem:[#allocation4 + $0x738] sm:$0xff]
        %v2152 = vld [vmem:[#allocation4 + $0x740] sm:$0xff]
        %v2153 = vld [vmem:[#allocation4 + $0x748] sm:$0xff]
        %v2154 = vld [vmem:[#allocation4 + $0x750] sm:$0xff]
        %v2155 = vld [vmem:[#allocation4 + $0x758] sm:$0xff]
        %v2156 = vld [vmem:[#allocation4 + $0x760] sm:$0xff]
        %v2157 = vld [vmem:[#allocation4 + $0x768] sm:$0xff]
        %v2158 = vld [vmem:[#allocation4 + $0x770] sm:$0xff]
        %v2159 = vld [vmem:[#allocation4 + $0x778] sm:$0xff]
        %v2160 = vld [vmem:[#allocation4 + $0x780] sm:$0xff]
        %v2161 = vld [vmem:[#allocation4 + $0x788] sm:$0xff]
        %v2162 = vld [vmem:[#allocation4 + $0x790] sm:$0xff]
        %v2163 = vld [vmem:[#allocation4 + $0x798] sm:$0xff]
        %v2164 = vld [vmem:[#allocation4 + $0x7a0] sm:$0xff]
        %v2165 = vld [vmem:[#allocation4 + $0x7a8] sm:$0xff]
        %v2166 = vld [vmem:[#allocation4 + $0x7b0] sm:$0xff]
        %v2167 = vld [vmem:[#allocation4 + $0x7b8] sm:$0xff]
        %v2168 = vld [vmem:[#allocation4 + $0x7c0] sm:$0xff]
        %v2169 = vld [vmem:[#allocation4 + $0x7c8] sm:$0xff]
        %v2170 = vld [vmem:[#allocation4 + $0x7d0] sm:$0xff]
        %v2171 = vld [vmem:[#allocation4 + $0x7d8] sm:$0xff]
        %v2172 = vld [vmem:[#allocation4 + $0x7e0] sm:$0xff]
        %v2173 = vld [vmem:[#allocation4 + $0x7e8] sm:$0xff]
        %v2174 = vld [vmem:[#allocation4 + $0x7f0] sm:$0xff]
        %v2175 = vld [vmem:[#allocation4 + $0x7f8] sm:$0xff]
        %v2176 = vld [vmem:[%s8] sm:$0xf]
        %v2178 = vlaneseq
        %v2179 = vshrl.u32 %v2178, 7
        %v2180 = vsub.s32 0, %v2179
        %v2181 = vrot.slane %v2176, %v2180
        %v2182 = vlaneseq
        %v2183 = vshrl.u32 %v2182, 7
        %v2184 = vsub.s32 1, %v2183
        %v2185 = vrot.slane %v2176, %v2184
        %v2186 = vlaneseq
        %v2187 = vshrl.u32 %v2186, 7
        %v2188 = vsub.s32 2, %v2187
        %v2189 = vrot.slane %v2176, %v2188
        %v2190 = vlaneseq
        %v2191 = vshrl.u32 %v2190, 7
        %v2192 = vsub.s32 3, %v2191
        %v2193 = vrot.slane %v2176, %v2192
        %v2454 = vunpack.c.l.b16 %v1920
        %v2455 = vunpack.c.h.b16 %v1920
        %v2456 = vunpack.c.l.b16 %v1921
        %v2457 = vunpack.c.h.b16 %v1921
        %v2458 = vunpack.c.l.b16 %v1922
        %v2459 = vunpack.c.h.b16 %v1922
        %v2460 = vunpack.c.l.b16 %v1923
        %v2461 = vunpack.c.h.b16 %v1923
        %v2462 = vunpack.c.l.b16 %v1924
        %v2463 = vunpack.c.h.b16 %v1924
        %v2464 = vunpack.c.l.b16 %v1925
        %v2465 = vunpack.c.h.b16 %v1925
        %v2466 = vunpack.c.l.b16 %v1926
        %v2467 = vunpack.c.h.b16 %v1926
        %v2468 = vunpack.c.l.b16 %v1927
        %v2469 = vunpack.c.h.b16 %v1927
        %v2470 = vunpack.c.l.b16 %v1928
        %v2471 = vunpack.c.h.b16 %v1928
        %v2472 = vunpack.c.l.b16 %v1929
        %v2473 = vunpack.c.h.b16 %v1929
        %v2474 = vunpack.c.l.b16 %v1930
        %v2475 = vunpack.c.h.b16 %v1930
        %v2476 = vunpack.c.l.b16 %v1931
        %v2477 = vunpack.c.h.b16 %v1931
        %v2478 = vunpack.c.l.b16 %v1932
        %v2479 = vunpack.c.h.b16 %v1932
        %v2480 = vunpack.c.l.b16 %v1933
        %v2481 = vunpack.c.h.b16 %v1933
        %v2482 = vunpack.c.l.b16 %v1934
        %v2483 = vunpack.c.h.b16 %v1934
        %v2484 = vunpack.c.l.b16 %v1935
        %v2485 = vunpack.c.h.b16 %v1935
        %v2486 = vunpack.c.l.b16 %v1936
        %v2487 = vunpack.c.h.b16 %v1936
        %v2488 = vunpack.c.l.b16 %v1937
        %v2489 = vunpack.c.h.b16 %v1937
        %v2490 = vunpack.c.l.b16 %v1938
        %v2491 = vunpack.c.h.b16 %v1938
        %v2492 = vunpack.c.l.b16 %v1939
        %v2493 = vunpack.c.h.b16 %v1939
        %v2494 = vunpack.c.l.b16 %v1940
        %v2495 = vunpack.c.h.b16 %v1940
        %v2496 = vunpack.c.l.b16 %v1941
        %v2497 = vunpack.c.h.b16 %v1941
        %v2498 = vunpack.c.l.b16 %v1942
        %v2499 = vunpack.c.h.b16 %v1942
        %v2500 = vunpack.c.l.b16 %v1943
        %v2501 = vunpack.c.h.b16 %v1943
        %v2502 = vunpack.c.l.b16 %v1944
        %v2503 = vunpack.c.h.b16 %v1944
        %v2504 = vunpack.c.l.b16 %v1945
        %v2505 = vunpack.c.h.b16 %v1945
        %v2506 = vunpack.c.l.b16 %v1946
        %v2507 = vunpack.c.h.b16 %v1946
        %v2508 = vunpack.c.l.b16 %v1947
        %v2509 = vunpack.c.h.b16 %v1947
        %v2510 = vunpack.c.l.b16 %v1948
        %v2511 = vunpack.c.h.b16 %v1948
        %v2512 = vunpack.c.l.b16 %v1949
        %v2513 = vunpack.c.h.b16 %v1949
        %v2514 = vunpack.c.l.b16 %v1950
        %v2515 = vunpack.c.h.b16 %v1950
        %v2516 = vunpack.c.l.b16 %v1951
        %v2517 = vunpack.c.h.b16 %v1951
        %v2518 = vunpack.c.l.b16 %v1952
        %v2519 = vunpack.c.h.b16 %v1952
        %v2520 = vunpack.c.l.b16 %v1953
        %v2521 = vunpack.c.h.b16 %v1953
        %v2522 = vunpack.c.l.b16 %v1954
        %v2523 = vunpack.c.h.b16 %v1954
        %v2524 = vunpack.c.l.b16 %v1955
        %v2525 = vunpack.c.h.b16 %v1955
        %v2526 = vunpack.c.l.b16 %v1956
        %v2527 = vunpack.c.h.b16 %v1956
        %v2528 = vunpack.c.l.b16 %v1957
        %v2529 = vunpack.c.h.b16 %v1957
        %v2530 = vunpack.c.l.b16 %v1958
        %v2531 = vunpack.c.h.b16 %v1958
        %v2532 = vunpack.c.l.b16 %v1959
        %v2533 = vunpack.c.h.b16 %v1959
        %v2534 = vunpack.c.l.b16 %v1960
        %v2535 = vunpack.c.h.b16 %v1960
        %v2536 = vunpack.c.l.b16 %v1961
        %v2537 = vunpack.c.h.b16 %v1961
        %v2538 = vunpack.c.l.b16 %v1962
        %v2539 = vunpack.c.h.b16 %v1962
        %v2540 = vunpack.c.l.b16 %v1963
        %v2541 = vunpack.c.h.b16 %v1963
        %v2542 = vunpack.c.l.b16 %v1964
        %v2543 = vunpack.c.h.b16 %v1964
        %v2544 = vunpack.c.l.b16 %v1965
        %v2545 = vunpack.c.h.b16 %v1965
        %v2546 = vunpack.c.l.b16 %v1966
        %v2547 = vunpack.c.h.b16 %v1966
        %v2548 = vunpack.c.l.b16 %v1967
        %v2549 = vunpack.c.h.b16 %v1967
        %v2550 = vunpack.c.l.b16 %v1968
        %v2551 = vunpack.c.h.b16 %v1968
        %v2552 = vunpack.c.l.b16 %v1969
        %v2553 = vunpack.c.h.b16 %v1969
        %v2554 = vunpack.c.l.b16 %v1970
        %v2555 = vunpack.c.h.b16 %v1970
        %v2556 = vunpack.c.l.b16 %v1971
        %v2557 = vunpack.c.h.b16 %v1971
        %v2558 = vunpack.c.l.b16 %v1972
        %v2559 = vunpack.c.h.b16 %v1972
        %v2560 = vunpack.c.l.b16 %v1973
        %v2561 = vunpack.c.h.b16 %v1973
        %v2562 = vunpack.c.l.b16 %v1974
        %v2563 = vunpack.c.h.b16 %v1974
        %v2564 = vunpack.c.l.b16 %v1975
        %v2565 = vunpack.c.h.b16 %v1975
        %v2566 = vunpack.c.l.b16 %v1976
        %v2567 = vunpack.c.h.b16 %v1976
        %v2568 = vunpack.c.l.b16 %v1977
        %v2569 = vunpack.c.h.b16 %v1977
        %v2570 = vunpack.c.l.b16 %v1978
        %v2571 = vunpack.c.h.b16 %v1978
        %v2572 = vunpack.c.l.b16 %v1979
        %v2573 = vunpack.c.h.b16 %v1979
        %v2574 = vunpack.c.l.b16 %v1980
        %v2575 = vunpack.c.h.b16 %v1980
        %v2576 = vunpack.c.l.b16 %v1981
        %v2577 = vunpack.c.h.b16 %v1981
        %v2578 = vunpack.c.l.b16 %v1982
        %v2579 = vunpack.c.h.b16 %v1982
        %v2580 = vunpack.c.l.b16 %v1983
        %v2581 = vunpack.c.h.b16 %v1983
        %v2582 = vunpack.c.l.b16 %v1984
        %v2583 = vunpack.c.h.b16 %v1984
        %v2584 = vunpack.c.l.b16 %v1985
        %v2585 = vunpack.c.h.b16 %v1985
        %v2586 = vunpack.c.l.b16 %v1986
        %v2587 = vunpack.c.h.b16 %v1986
        %v2588 = vunpack.c.l.b16 %v1987
        %v2589 = vunpack.c.h.b16 %v1987
        %v2590 = vunpack.c.l.b16 %v1988
        %v2591 = vunpack.c.h.b16 %v1988
        %v2592 = vunpack.c.l.b16 %v1989
        %v2593 = vunpack.c.h.b16 %v1989
        %v2594 = vunpack.c.l.b16 %v1990
        %v2595 = vunpack.c.h.b16 %v1990
        %v2596 = vunpack.c.l.b16 %v1991
        %v2597 = vunpack.c.h.b16 %v1991
        %v2598 = vunpack.c.l.b16 %v1992
        %v2599 = vunpack.c.h.b16 %v1992
        %v2600 = vunpack.c.l.b16 %v1993
        %v2601 = vunpack.c.h.b16 %v1993
        %v2602 = vunpack.c.l.b16 %v1994
        %v2603 = vunpack.c.h.b16 %v1994
        %v2604 = vunpack.c.l.b16 %v1995
        %v2605 = vunpack.c.h.b16 %v1995
        %v2606 = vunpack.c.l.b16 %v1996
        %v2607 = vunpack.c.h.b16 %v1996
        %v2608 = vunpack.c.l.b16 %v1997
        %v2609 = vunpack.c.h.b16 %v1997
        %v2610 = vunpack.c.l.b16 %v1998
        %v2611 = vunpack.c.h.b16 %v1998
        %v2612 = vunpack.c.l.b16 %v1999
        %v2613 = vunpack.c.h.b16 %v1999
        %v2614 = vunpack.c.l.b16 %v2000
        %v2615 = vunpack.c.h.b16 %v2000
        %v2616 = vunpack.c.l.b16 %v2001
        %v2617 = vunpack.c.h.b16 %v2001
        %v2618 = vunpack.c.l.b16 %v2002
        %v2619 = vunpack.c.h.b16 %v2002
        %v2620 = vunpack.c.l.b16 %v2003
        %v2621 = vunpack.c.h.b16 %v2003
        %v2622 = vunpack.c.l.b16 %v2004
        %v2623 = vunpack.c.h.b16 %v2004
        %v2624 = vunpack.c.l.b16 %v2005
        %v2625 = vunpack.c.h.b16 %v2005
        %v2626 = vunpack.c.l.b16 %v2006
        %v2627 = vunpack.c.h.b16 %v2006
        %v2628 = vunpack.c.l.b16 %v2007
        %v2629 = vunpack.c.h.b16 %v2007
        %v2630 = vunpack.c.l.b16 %v2008
        %v2631 = vunpack.c.h.b16 %v2008
        %v2632 = vunpack.c.l.b16 %v2009
        %v2633 = vunpack.c.h.b16 %v2009
        %v2634 = vunpack.c.l.b16 %v2010
        %v2635 = vunpack.c.h.b16 %v2010
        %v2636 = vunpack.c.l.b16 %v2011
        %v2637 = vunpack.c.h.b16 %v2011
        %v2638 = vunpack.c.l.b16 %v2012
        %v2639 = vunpack.c.h.b16 %v2012
        %v2640 = vunpack.c.l.b16 %v2013
        %v2641 = vunpack.c.h.b16 %v2013
        %v2642 = vunpack.c.l.b16 %v2014
        %v2643 = vunpack.c.h.b16 %v2014
        %v2644 = vunpack.c.l.b16 %v2015
        %v2645 = vunpack.c.h.b16 %v2015
        %v2646 = vunpack.c.l.b16 %v2016
        %v2647 = vunpack.c.h.b16 %v2016
        %v2648 = vunpack.c.l.b16 %v2017
        %v2649 = vunpack.c.h.b16 %v2017
        %v2650 = vunpack.c.l.b16 %v2018
        %v2651 = vunpack.c.h.b16 %v2018
        %v2652 = vunpack.c.l.b16 %v2019
        %v2653 = vunpack.c.h.b16 %v2019
        %v2654 = vunpack.c.l.b16 %v2020
        %v2655 = vunpack.c.h.b16 %v2020
        %v2656 = vunpack.c.l.b16 %v2021
        %v2657 = vunpack.c.h.b16 %v2021
        %v2658 = vunpack.c.l.b16 %v2022
        %v2659 = vunpack.c.h.b16 %v2022
        %v2660 = vunpack.c.l.b16 %v2023
        %v2661 = vunpack.c.h.b16 %v2023
        %v2662 = vunpack.c.l.b16 %v2024
        %v2663 = vunpack.c.h.b16 %v2024
        %v2664 = vunpack.c.l.b16 %v2025
        %v2665 = vunpack.c.h.b16 %v2025
        %v2666 = vunpack.c.l.b16 %v2026
        %v2667 = vunpack.c.h.b16 %v2026
        %v2668 = vunpack.c.l.b16 %v2027
        %v2669 = vunpack.c.h.b16 %v2027
        %v2670 = vunpack.c.l.b16 %v2028
        %v2671 = vunpack.c.h.b16 %v2028
        %v2672 = vunpack.c.l.b16 %v2029
        %v2673 = vunpack.c.h.b16 %v2029
        %v2674 = vunpack.c.l.b16 %v2030
        %v2675 = vunpack.c.h.b16 %v2030
        %v2676 = vunpack.c.l.b16 %v2031
        %v2677 = vunpack.c.h.b16 %v2031
        %v2678 = vunpack.c.l.b16 %v2032
        %v2679 = vunpack.c.h.b16 %v2032
        %v2680 = vunpack.c.l.b16 %v2033
        %v2681 = vunpack.c.h.b16 %v2033
        %v2682 = vunpack.c.l.b16 %v2034
        %v2683 = vunpack.c.h.b16 %v2034
        %v2684 = vunpack.c.l.b16 %v2035
        %v2685 = vunpack.c.h.b16 %v2035
        %v2686 = vunpack.c.l.b16 %v2036
        %v2687 = vunpack.c.h.b16 %v2036
        %v2688 = vunpack.c.l.b16 %v2037
        %v2689 = vunpack.c.h.b16 %v2037
        %v2690 = vunpack.c.l.b16 %v2038
        %v2691 = vunpack.c.h.b16 %v2038
        %v2692 = vunpack.c.l.b16 %v2039
        %v2693 = vunpack.c.h.b16 %v2039
        %v2694 = vunpack.c.l.b16 %v2040
        %v2695 = vunpack.c.h.b16 %v2040
        %v2696 = vunpack.c.l.b16 %v2041
        %v2697 = vunpack.c.h.b16 %v2041
        %v2698 = vunpack.c.l.b16 %v2042
        %v2699 = vunpack.c.h.b16 %v2042
        %v2700 = vunpack.c.l.b16 %v2043
        %v2701 = vunpack.c.h.b16 %v2043
        %v2702 = vunpack.c.l.b16 %v2044
        %v2703 = vunpack.c.h.b16 %v2044
        %v2704 = vunpack.c.l.b16 %v2045
        %v2705 = vunpack.c.h.b16 %v2045
        %v2706 = vunpack.c.l.b16 %v2046
        %v2707 = vunpack.c.h.b16 %v2046
        %v2708 = vunpack.c.l.b16 %v2047
        %v2709 = vunpack.c.h.b16 %v2047
        %v2710 = vunpack.c.l.b16 %v2048
        %v2711 = vunpack.c.h.b16 %v2048
        %v2712 = vunpack.c.l.b16 %v2049
        %v2713 = vunpack.c.h.b16 %v2049
        %v2714 = vunpack.c.l.b16 %v2050
        %v2715 = vunpack.c.h.b16 %v2050
        %v2716 = vunpack.c.l.b16 %v2051
        %v2717 = vunpack.c.h.b16 %v2051
        %v2718 = vunpack.c.l.b16 %v2052
        %v2719 = vunpack.c.h.b16 %v2052
        %v2720 = vunpack.c.l.b16 %v2053
        %v2721 = vunpack.c.h.b16 %v2053
        %v2722 = vunpack.c.l.b16 %v2054
        %v2723 = vunpack.c.h.b16 %v2054
        %v2724 = vunpack.c.l.b16 %v2055
        %v2725 = vunpack.c.h.b16 %v2055
        %v2726 = vunpack.c.l.b16 %v2056
        %v2727 = vunpack.c.h.b16 %v2056
        %v2728 = vunpack.c.l.b16 %v2057
        %v2729 = vunpack.c.h.b16 %v2057
        %v2730 = vunpack.c.l.b16 %v2058
        %v2731 = vunpack.c.h.b16 %v2058
        %v2732 = vunpack.c.l.b16 %v2059
        %v2733 = vunpack.c.h.b16 %v2059
        %v2734 = vunpack.c.l.b16 %v2060
        %v2735 = vunpack.c.h.b16 %v2060
        %v2736 = vunpack.c.l.b16 %v2061
        %v2737 = vunpack.c.h.b16 %v2061
        %v2738 = vunpack.c.l.b16 %v2062
        %v2739 = vunpack.c.h.b16 %v2062
        %v2740 = vunpack.c.l.b16 %v2063
        %v2741 = vunpack.c.h.b16 %v2063
        %v2742 = vunpack.c.l.b16 %v2064
        %v2743 = vunpack.c.h.b16 %v2064
        %v2744 = vunpack.c.l.b16 %v2065
        %v2745 = vunpack.c.h.b16 %v2065
        %v2746 = vunpack.c.l.b16 %v2066
        %v2747 = vunpack.c.h.b16 %v2066
        %v2748 = vunpack.c.l.b16 %v2067
        %v2749 = vunpack.c.h.b16 %v2067
        %v2750 = vunpack.c.l.b16 %v2068
        %v2751 = vunpack.c.h.b16 %v2068
        %v2752 = vunpack.c.l.b16 %v2069
        %v2753 = vunpack.c.h.b16 %v2069
        %v2754 = vunpack.c.l.b16 %v2070
        %v2755 = vunpack.c.h.b16 %v2070
        %v2756 = vunpack.c.l.b16 %v2071
        %v2757 = vunpack.c.h.b16 %v2071
        %v2758 = vunpack.c.l.b16 %v2072
        %v2759 = vunpack.c.h.b16 %v2072
        %v2760 = vunpack.c.l.b16 %v2073
        %v2761 = vunpack.c.h.b16 %v2073
        %v2762 = vunpack.c.l.b16 %v2074
        %v2763 = vunpack.c.h.b16 %v2074
        %v2764 = vunpack.c.l.b16 %v2075
        %v2765 = vunpack.c.h.b16 %v2075
        %v2766 = vunpack.c.l.b16 %v2076
        %v2767 = vunpack.c.h.b16 %v2076
        %v2768 = vunpack.c.l.b16 %v2077
        %v2769 = vunpack.c.h.b16 %v2077
        %v2770 = vunpack.c.l.b16 %v2078
        %v2771 = vunpack.c.h.b16 %v2078
        %v2772 = vunpack.c.l.b16 %v2079
        %v2773 = vunpack.c.h.b16 %v2079
        %v2774 = vunpack.c.l.b16 %v2080
        %v2775 = vunpack.c.h.b16 %v2080
        %v2776 = vunpack.c.l.b16 %v2081
        %v2777 = vunpack.c.h.b16 %v2081
        %v2778 = vunpack.c.l.b16 %v2082
        %v2779 = vunpack.c.h.b16 %v2082
        %v2780 = vunpack.c.l.b16 %v2083
        %v2781 = vunpack.c.h.b16 %v2083
        %v2782 = vunpack.c.l.b16 %v2084
        %v2783 = vunpack.c.h.b16 %v2084
        %v2784 = vunpack.c.l.b16 %v2085
        %v2785 = vunpack.c.h.b16 %v2085
        %v2786 = vunpack.c.l.b16 %v2086
        %v2787 = vunpack.c.h.b16 %v2086
        %v2788 = vunpack.c.l.b16 %v2087
        %v2789 = vunpack.c.h.b16 %v2087
        %v2790 = vunpack.c.l.b16 %v2088
        %v2791 = vunpack.c.h.b16 %v2088
        %v2792 = vunpack.c.l.b16 %v2089
        %v2793 = vunpack.c.h.b16 %v2089
        %v2794 = vunpack.c.l.b16 %v2090
        %v2795 = vunpack.c.h.b16 %v2090
        %v2796 = vunpack.c.l.b16 %v2091
        %v2797 = vunpack.c.h.b16 %v2091
        %v2798 = vunpack.c.l.b16 %v2092
        %v2799 = vunpack.c.h.b16 %v2092
        %v2800 = vunpack.c.l.b16 %v2093
        %v2801 = vunpack.c.h.b16 %v2093
        %v2802 = vunpack.c.l.b16 %v2094
        %v2803 = vunpack.c.h.b16 %v2094
        %v2804 = vunpack.c.l.b16 %v2095
        %v2805 = vunpack.c.h.b16 %v2095
        %v2806 = vunpack.c.l.b16 %v2096
        %v2807 = vunpack.c.h.b16 %v2096
        %v2808 = vunpack.c.l.b16 %v2097
        %v2809 = vunpack.c.h.b16 %v2097
        %v2810 = vunpack.c.l.b16 %v2098
        %v2811 = vunpack.c.h.b16 %v2098
        %v2812 = vunpack.c.l.b16 %v2099
        %v2813 = vunpack.c.h.b16 %v2099
        %v2814 = vunpack.c.l.b16 %v2100
        %v2815 = vunpack.c.h.b16 %v2100
        %v2816 = vunpack.c.l.b16 %v2101
        %v2817 = vunpack.c.h.b16 %v2101
        %v2818 = vunpack.c.l.b16 %v2102
        %v2819 = vunpack.c.h.b16 %v2102
        %v2820 = vunpack.c.l.b16 %v2103
        %v2821 = vunpack.c.h.b16 %v2103
        %v2822 = vunpack.c.l.b16 %v2104
        %v2823 = vunpack.c.h.b16 %v2104
        %v2824 = vunpack.c.l.b16 %v2105
        %v2825 = vunpack.c.h.b16 %v2105
        %v2826 = vunpack.c.l.b16 %v2106
        %v2827 = vunpack.c.h.b16 %v2106
        %v2828 = vunpack.c.l.b16 %v2107
        %v2829 = vunpack.c.h.b16 %v2107
        %v2830 = vunpack.c.l.b16 %v2108
        %v2831 = vunpack.c.h.b16 %v2108
        %v2832 = vunpack.c.l.b16 %v2109
        %v2833 = vunpack.c.h.b16 %v2109
        %v2834 = vunpack.c.l.b16 %v2110
        %v2835 = vunpack.c.h.b16 %v2110
        %v2836 = vunpack.c.l.b16 %v2111
        %v2837 = vunpack.c.h.b16 %v2111
        %v2838 = vunpack.c.l.b16 %v2112
        %v2839 = vunpack.c.h.b16 %v2112
        %v2840 = vunpack.c.l.b16 %v2113
        %v2841 = vunpack.c.h.b16 %v2113
        %v2842 = vunpack.c.l.b16 %v2114
        %v2843 = vunpack.c.h.b16 %v2114
        %v2844 = vunpack.c.l.b16 %v2115
        %v2845 = vunpack.c.h.b16 %v2115
        %v2846 = vunpack.c.l.b16 %v2116
        %v2847 = vunpack.c.h.b16 %v2116
        %v2848 = vunpack.c.l.b16 %v2117
        %v2849 = vunpack.c.h.b16 %v2117
        %v2850 = vunpack.c.l.b16 %v2118
        %v2851 = vunpack.c.h.b16 %v2118
        %v2852 = vunpack.c.l.b16 %v2119
        %v2853 = vunpack.c.h.b16 %v2119
        %v2854 = vunpack.c.l.b16 %v2120
        %v2855 = vunpack.c.h.b16 %v2120
        %v2856 = vunpack.c.l.b16 %v2121
        %v2857 = vunpack.c.h.b16 %v2121
        %v2858 = vunpack.c.l.b16 %v2122
        %v2859 = vunpack.c.h.b16 %v2122
        %v2860 = vunpack.c.l.b16 %v2123
        %v2861 = vunpack.c.h.b16 %v2123
        %v2862 = vunpack.c.l.b16 %v2124
        %v2863 = vunpack.c.h.b16 %v2124
        %v2864 = vunpack.c.l.b16 %v2125
        %v2865 = vunpack.c.h.b16 %v2125
        %v2866 = vunpack.c.l.b16 %v2126
        %v2867 = vunpack.c.h.b16 %v2126
        %v2868 = vunpack.c.l.b16 %v2127
        %v2869 = vunpack.c.h.b16 %v2127
        %v2870 = vunpack.c.l.b16 %v2128
        %v2871 = vunpack.c.h.b16 %v2128
        %v2872 = vunpack.c.l.b16 %v2129
        %v2873 = vunpack.c.h.b16 %v2129
        %v2874 = vunpack.c.l.b16 %v2130
        %v2875 = vunpack.c.h.b16 %v2130
        %v2876 = vunpack.c.l.b16 %v2131
        %v2877 = vunpack.c.h.b16 %v2131
        %v2878 = vunpack.c.l.b16 %v2132
        %v2879 = vunpack.c.h.b16 %v2132
        %v2880 = vunpack.c.l.b16 %v2133
        %v2881 = vunpack.c.h.b16 %v2133
        %v2882 = vunpack.c.l.b16 %v2134
        %v2883 = vunpack.c.h.b16 %v2134
        %v2884 = vunpack.c.l.b16 %v2135
        %v2885 = vunpack.c.h.b16 %v2135
        %v2886 = vunpack.c.l.b16 %v2136
        %v2887 = vunpack.c.h.b16 %v2136
        %v2888 = vunpack.c.l.b16 %v2137
        %v2889 = vunpack.c.h.b16 %v2137
        %v2890 = vunpack.c.l.b16 %v2138
        %v2891 = vunpack.c.h.b16 %v2138
        %v2892 = vunpack.c.l.b16 %v2139
        %v2893 = vunpack.c.h.b16 %v2139
        %v2894 = vunpack.c.l.b16 %v2140
        %v2895 = vunpack.c.h.b16 %v2140
        %v2896 = vunpack.c.l.b16 %v2141
        %v2897 = vunpack.c.h.b16 %v2141
        %v2898 = vunpack.c.l.b16 %v2142
        %v2899 = vunpack.c.h.b16 %v2142
        %v2900 = vunpack.c.l.b16 %v2143
        %v2901 = vunpack.c.h.b16 %v2143
        %v2902 = vunpack.c.l.b16 %v2144
        %v2903 = vunpack.c.h.b16 %v2144
        %v2904 = vunpack.c.l.b16 %v2145
        %v2905 = vunpack.c.h.b16 %v2145
        %v2906 = vunpack.c.l.b16 %v2146
        %v2907 = vunpack.c.h.b16 %v2146
        %v2908 = vunpack.c.l.b16 %v2147
        %v2909 = vunpack.c.h.b16 %v2147
        %v2910 = vunpack.c.l.b16 %v2148
        %v2911 = vunpack.c.h.b16 %v2148
        %v2912 = vunpack.c.l.b16 %v2149
        %v2913 = vunpack.c.h.b16 %v2149
        %v2914 = vunpack.c.l.b16 %v2150
        %v2915 = vunpack.c.h.b16 %v2150
        %v2916 = vunpack.c.l.b16 %v2151
        %v2917 = vunpack.c.h.b16 %v2151
        %v2918 = vunpack.c.l.b16 %v2152
        %v2919 = vunpack.c.h.b16 %v2152
        %v2920 = vunpack.c.l.b16 %v2153
        %v2921 = vunpack.c.h.b16 %v2153
        %v2922 = vunpack.c.l.b16 %v2154
        %v2923 = vunpack.c.h.b16 %v2154
        %v2924 = vunpack.c.l.b16 %v2155
        %v2925 = vunpack.c.h.b16 %v2155
        %v2926 = vunpack.c.l.b16 %v2156
        %v2927 = vunpack.c.h.b16 %v2156
        %v2928 = vunpack.c.l.b16 %v2157
        %v2929 = vunpack.c.h.b16 %v2157
        %v2930 = vunpack.c.l.b16 %v2158
        %v2931 = vunpack.c.h.b16 %v2158
        %v2932 = vunpack.c.l.b16 %v2159
        %v2933 = vunpack.c.h.b16 %v2159
        %v2934 = vunpack.c.l.b16 %v2160
        %v2935 = vunpack.c.h.b16 %v2160
        %v2936 = vunpack.c.l.b16 %v2161
        %v2937 = vunpack.c.h.b16 %v2161
        %v2938 = vunpack.c.l.b16 %v2162
        %v2939 = vunpack.c.h.b16 %v2162
        %v2940 = vunpack.c.l.b16 %v2163
        %v2941 = vunpack.c.h.b16 %v2163
        %v2942 = vunpack.c.l.b16 %v2164
        %v2943 = vunpack.c.h.b16 %v2164
        %v2944 = vunpack.c.l.b16 %v2165
        %v2945 = vunpack.c.h.b16 %v2165
        %v2946 = vunpack.c.l.b16 %v2166
        %v2947 = vunpack.c.h.b16 %v2166
        %v2948 = vunpack.c.l.b16 %v2167
        %v2949 = vunpack.c.h.b16 %v2167
        %v2950 = vunpack.c.l.b16 %v2168
        %v2951 = vunpack.c.h.b16 %v2168
        %v2952 = vunpack.c.l.b16 %v2169
        %v2953 = vunpack.c.h.b16 %v2169
        %v2954 = vunpack.c.l.b16 %v2170
        %v2955 = vunpack.c.h.b16 %v2170
        %v2956 = vunpack.c.l.b16 %v2171
        %v2957 = vunpack.c.h.b16 %v2171
        %v2958 = vunpack.c.l.b16 %v2172
        %v2959 = vunpack.c.h.b16 %v2172
        %v2960 = vunpack.c.l.b16 %v2173
        %v2961 = vunpack.c.h.b16 %v2173
        %v2962 = vunpack.c.l.b16 %v2174
        %v2963 = vunpack.c.h.b16 %v2174
        %v2964 = vunpack.c.l.b16 %v2175
        %v2965 = vunpack.c.h.b16 %v2175
        %v2966 = vpack.c.b16 %v2458, %v2454
        %v2967 = vpack.c.b16 %v2459, %v2455
        %v2968 = vpack.c.b16 %v2460, %v2456
        %v2969 = vpack.c.b16 %v2461, %v2457
        %v2970 = vpack.c.b16 %v2466, %v2462
        %v2971 = vpack.c.b16 %v2467, %v2463
        %v2972 = vpack.c.b16 %v2468, %v2464
        %v2973 = vpack.c.b16 %v2469, %v2465
        %v2974 = vpack.c.b16 %v2474, %v2470
        %v2975 = vpack.c.b16 %v2475, %v2471
        %v2976 = vpack.c.b16 %v2476, %v2472
        %v2977 = vpack.c.b16 %v2477, %v2473
        %v2978 = vpack.c.b16 %v2482, %v2478
        %v2979 = vpack.c.b16 %v2483, %v2479
        %v2980 = vpack.c.b16 %v2484, %v2480
        %v2981 = vpack.c.b16 %v2485, %v2481
        %v2982 = vpack.c.b16 %v2490, %v2486
        %v2983 = vpack.c.b16 %v2491, %v2487
        %v2984 = vpack.c.b16 %v2492, %v2488
        %v2985 = vpack.c.b16 %v2493, %v2489
        %v2986 = vpack.c.b16 %v2498, %v2494
        %v2987 = vpack.c.b16 %v2499, %v2495
        %v2988 = vpack.c.b16 %v2500, %v2496
        %v2989 = vpack.c.b16 %v2501, %v2497
        %v2990 = vpack.c.b16 %v2506, %v2502
        %v2991 = vpack.c.b16 %v2507, %v2503
        %v2992 = vpack.c.b16 %v2508, %v2504
        %v2993 = vpack.c.b16 %v2509, %v2505
        %v2994 = vpack.c.b16 %v2514, %v2510
        %v2995 = vpack.c.b16 %v2515, %v2511
        %v2996 = vpack.c.b16 %v2516, %v2512
        %v2997 = vpack.c.b16 %v2517, %v2513
        %v2998 = vpack.c.b16 %v2522, %v2518
        %v2999 = vpack.c.b16 %v2523, %v2519
        %v3000 = vpack.c.b16 %v2524, %v2520
        %v3001 = vpack.c.b16 %v2525, %v2521
        %v3002 = vpack.c.b16 %v2530, %v2526
        %v3003 = vpack.c.b16 %v2531, %v2527
        %v3004 = vpack.c.b16 %v2532, %v2528
        %v3005 = vpack.c.b16 %v2533, %v2529
        %v3006 = vpack.c.b16 %v2538, %v2534
        %v3007 = vpack.c.b16 %v2539, %v2535
        %v3008 = vpack.c.b16 %v2540, %v2536
        %v3009 = vpack.c.b16 %v2541, %v2537
        %v3010 = vpack.c.b16 %v2546, %v2542
        %v3011 = vpack.c.b16 %v2547, %v2543
        %v3012 = vpack.c.b16 %v2548, %v2544
        %v3013 = vpack.c.b16 %v2549, %v2545
        %v3014 = vpack.c.b16 %v2554, %v2550
        %v3015 = vpack.c.b16 %v2555, %v2551
        %v3016 = vpack.c.b16 %v2556, %v2552
        %v3017 = vpack.c.b16 %v2557, %v2553
        %v3018 = vpack.c.b16 %v2562, %v2558
        %v3019 = vpack.c.b16 %v2563, %v2559
        %v3020 = vpack.c.b16 %v2564, %v2560
        %v3021 = vpack.c.b16 %v2565, %v2561
        %v3022 = vpack.c.b16 %v2570, %v2566
        %v3023 = vpack.c.b16 %v2571, %v2567
        %v3024 = vpack.c.b16 %v2572, %v2568
        %v3025 = vpack.c.b16 %v2573, %v2569
        %v3026 = vpack.c.b16 %v2578, %v2574
        %v3027 = vpack.c.b16 %v2579, %v2575
        %v3028 = vpack.c.b16 %v2580, %v2576
        %v3029 = vpack.c.b16 %v2581, %v2577
        %v3030 = vpack.c.b16 %v2586, %v2582
        %v3031 = vpack.c.b16 %v2587, %v2583
        %v3032 = vpack.c.b16 %v2588, %v2584
        %v3033 = vpack.c.b16 %v2589, %v2585
        %v3034 = vpack.c.b16 %v2594, %v2590
        %v3035 = vpack.c.b16 %v2595, %v2591
        %v3036 = vpack.c.b16 %v2596, %v2592
        %v3037 = vpack.c.b16 %v2597, %v2593
        %v3038 = vpack.c.b16 %v2602, %v2598
        %v3039 = vpack.c.b16 %v2603, %v2599
        %v3040 = vpack.c.b16 %v2604, %v2600
        %v3041 = vpack.c.b16 %v2605, %v2601
        %v3042 = vpack.c.b16 %v2610, %v2606
        %v3043 = vpack.c.b16 %v2611, %v2607
        %v3044 = vpack.c.b16 %v2612, %v2608
        %v3045 = vpack.c.b16 %v2613, %v2609
        %v3046 = vpack.c.b16 %v2618, %v2614
        %v3047 = vpack.c.b16 %v2619, %v2615
        %v3048 = vpack.c.b16 %v2620, %v2616
        %v3049 = vpack.c.b16 %v2621, %v2617
        %v3050 = vpack.c.b16 %v2626, %v2622
        %v3051 = vpack.c.b16 %v2627, %v2623
        %v3052 = vpack.c.b16 %v2628, %v2624
        %v3053 = vpack.c.b16 %v2629, %v2625
        %v3054 = vpack.c.b16 %v2634, %v2630
        %v3055 = vpack.c.b16 %v2635, %v2631
        %v3056 = vpack.c.b16 %v2636, %v2632
        %v3057 = vpack.c.b16 %v2637, %v2633
        %v3058 = vpack.c.b16 %v2642, %v2638
        %v3059 = vpack.c.b16 %v2643, %v2639
        %v3060 = vpack.c.b16 %v2644, %v2640
        %v3061 = vpack.c.b16 %v2645, %v2641
        %v3062 = vpack.c.b16 %v2650, %v2646
        %v3063 = vpack.c.b16 %v2651, %v2647
        %v3064 = vpack.c.b16 %v2652, %v2648
        %v3065 = vpack.c.b16 %v2653, %v2649
        %v3066 = vpack.c.b16 %v2658, %v2654
        %v3067 = vpack.c.b16 %v2659, %v2655
        %v3068 = vpack.c.b16 %v2660, %v2656
        %v3069 = vpack.c.b16 %v2661, %v2657
        %v3070 = vpack.c.b16 %v2666, %v2662
        %v3071 = vpack.c.b16 %v2667, %v2663
        %v3072 = vpack.c.b16 %v2668, %v2664
        %v3073 = vpack.c.b16 %v2669, %v2665
        %v3074 = vpack.c.b16 %v2674, %v2670
        %v3075 = vpack.c.b16 %v2675, %v2671
        %v3076 = vpack.c.b16 %v2676, %v2672
        %v3077 = vpack.c.b16 %v2677, %v2673
        %v3078 = vpack.c.b16 %v2682, %v2678
        %v3079 = vpack.c.b16 %v2683, %v2679
        %v3080 = vpack.c.b16 %v2684, %v2680
        %v3081 = vpack.c.b16 %v2685, %v2681
        %v3082 = vpack.c.b16 %v2690, %v2686
        %v3083 = vpack.c.b16 %v2691, %v2687
        %v3084 = vpack.c.b16 %v2692, %v2688
        %v3085 = vpack.c.b16 %v2693, %v2689
        %v3086 = vpack.c.b16 %v2698, %v2694
        %v3087 = vpack.c.b16 %v2699, %v2695
        %v3088 = vpack.c.b16 %v2700, %v2696
        %v3089 = vpack.c.b16 %v2701, %v2697
        %v3090 = vpack.c.b16 %v2706, %v2702
        %v3091 = vpack.c.b16 %v2707, %v2703
        %v3092 = vpack.c.b16 %v2708, %v2704
        %v3093 = vpack.c.b16 %v2709, %v2705
        %v3094 = vpack.c.b16 %v2714, %v2710
        %v3095 = vpack.c.b16 %v2715, %v2711
        %v3096 = vpack.c.b16 %v2716, %v2712
        %v3097 = vpack.c.b16 %v2717, %v2713
        %v3098 = vpack.c.b16 %v2722, %v2718
        %v3099 = vpack.c.b16 %v2723, %v2719
        %v3100 = vpack.c.b16 %v2724, %v2720
        %v3101 = vpack.c.b16 %v2725, %v2721
        %v3102 = vpack.c.b16 %v2730, %v2726
        %v3103 = vpack.c.b16 %v2731, %v2727
        %v3104 = vpack.c.b16 %v2732, %v2728
        %v3105 = vpack.c.b16 %v2733, %v2729
        %v3106 = vpack.c.b16 %v2738, %v2734
        %v3107 = vpack.c.b16 %v2739, %v2735
        %v3108 = vpack.c.b16 %v2740, %v2736
        %v3109 = vpack.c.b16 %v2741, %v2737
        %v3110 = vpack.c.b16 %v2746, %v2742
        %v3111 = vpack.c.b16 %v2747, %v2743
        %v3112 = vpack.c.b16 %v2748, %v2744
        %v3113 = vpack.c.b16 %v2749, %v2745
        %v3114 = vpack.c.b16 %v2754, %v2750
        %v3115 = vpack.c.b16 %v2755, %v2751
        %v3116 = vpack.c.b16 %v2756, %v2752
        %v3117 = vpack.c.b16 %v2757, %v2753
        %v3118 = vpack.c.b16 %v2762, %v2758
        %v3119 = vpack.c.b16 %v2763, %v2759
        %v3120 = vpack.c.b16 %v2764, %v2760
        %v3121 = vpack.c.b16 %v2765, %v2761
        %v3122 = vpack.c.b16 %v2770, %v2766
        %v3123 = vpack.c.b16 %v2771, %v2767
        %v3124 = vpack.c.b16 %v2772, %v2768
        %v3125 = vpack.c.b16 %v2773, %v2769
        %v3126 = vpack.c.b16 %v2778, %v2774
        %v3127 = vpack.c.b16 %v2779, %v2775
        %v3128 = vpack.c.b16 %v2780, %v2776
        %v3129 = vpack.c.b16 %v2781, %v2777
        %v3130 = vpack.c.b16 %v2786, %v2782
        %v3131 = vpack.c.b16 %v2787, %v2783
        %v3132 = vpack.c.b16 %v2788, %v2784
        %v3133 = vpack.c.b16 %v2789, %v2785
        %v3134 = vpack.c.b16 %v2794, %v2790
        %v3135 = vpack.c.b16 %v2795, %v2791
        %v3136 = vpack.c.b16 %v2796, %v2792
        %v3137 = vpack.c.b16 %v2797, %v2793
        %v3138 = vpack.c.b16 %v2802, %v2798
        %v3139 = vpack.c.b16 %v2803, %v2799
        %v3140 = vpack.c.b16 %v2804, %v2800
        %v3141 = vpack.c.b16 %v2805, %v2801
        %v3142 = vpack.c.b16 %v2810, %v2806
        %v3143 = vpack.c.b16 %v2811, %v2807
        %v3144 = vpack.c.b16 %v2812, %v2808
        %v3145 = vpack.c.b16 %v2813, %v2809
        %v3146 = vpack.c.b16 %v2818, %v2814
        %v3147 = vpack.c.b16 %v2819, %v2815
        %v3148 = vpack.c.b16 %v2820, %v2816
        %v3149 = vpack.c.b16 %v2821, %v2817
        %v3150 = vpack.c.b16 %v2826, %v2822
        %v3151 = vpack.c.b16 %v2827, %v2823
        %v3152 = vpack.c.b16 %v2828, %v2824
        %v3153 = vpack.c.b16 %v2829, %v2825
        %v3154 = vpack.c.b16 %v2834, %v2830
        %v3155 = vpack.c.b16 %v2835, %v2831
        %v3156 = vpack.c.b16 %v2836, %v2832
        %v3157 = vpack.c.b16 %v2837, %v2833
        %v3158 = vpack.c.b16 %v2842, %v2838
        %v3159 = vpack.c.b16 %v2843, %v2839
        %v3160 = vpack.c.b16 %v2844, %v2840
        %v3161 = vpack.c.b16 %v2845, %v2841
        %v3162 = vpack.c.b16 %v2850, %v2846
        %v3163 = vpack.c.b16 %v2851, %v2847
        %v3164 = vpack.c.b16 %v2852, %v2848
        %v3165 = vpack.c.b16 %v2853, %v2849
        %v3166 = vpack.c.b16 %v2858, %v2854
        %v3167 = vpack.c.b16 %v2859, %v2855
        %v3168 = vpack.c.b16 %v2860, %v2856
        %v3169 = vpack.c.b16 %v2861, %v2857
        %v3170 = vpack.c.b16 %v2866, %v2862
        %v3171 = vpack.c.b16 %v2867, %v2863
        %v3172 = vpack.c.b16 %v2868, %v2864
        %v3173 = vpack.c.b16 %v2869, %v2865
        %v3174 = vpack.c.b16 %v2874, %v2870
        %v3175 = vpack.c.b16 %v2875, %v2871
        %v3176 = vpack.c.b16 %v2876, %v2872
        %v3177 = vpack.c.b16 %v2877, %v2873
        %v3178 = vpack.c.b16 %v2882, %v2878
        %v3179 = vpack.c.b16 %v2883, %v2879
        %v3180 = vpack.c.b16 %v2884, %v2880
        %v3181 = vpack.c.b16 %v2885, %v2881
        %v3182 = vpack.c.b16 %v2890, %v2886
        %v3183 = vpack.c.b16 %v2891, %v2887
        %v3184 = vpack.c.b16 %v2892, %v2888
        %v3185 = vpack.c.b16 %v2893, %v2889
        %v3186 = vpack.c.b16 %v2898, %v2894
        %v3187 = vpack.c.b16 %v2899, %v2895
        %v3188 = vpack.c.b16 %v2900, %v2896
        %v3189 = vpack.c.b16 %v2901, %v2897
        %v3190 = vpack.c.b16 %v2906, %v2902
        %v3191 = vpack.c.b16 %v2907, %v2903
        %v3192 = vpack.c.b16 %v2908, %v2904
        %v3193 = vpack.c.b16 %v2909, %v2905
        %v3194 = vpack.c.b16 %v2914, %v2910
        %v3195 = vpack.c.b16 %v2915, %v2911
        %v3196 = vpack.c.b16 %v2916, %v2912
        %v3197 = vpack.c.b16 %v2917, %v2913
        %v3198 = vpack.c.b16 %v2922, %v2918
        %v3199 = vpack.c.b16 %v2923, %v2919
        %v3200 = vpack.c.b16 %v2924, %v2920
        %v3201 = vpack.c.b16 %v2925, %v2921
        %v3202 = vpack.c.b16 %v2930, %v2926
        %v3203 = vpack.c.b16 %v2931, %v2927
        %v3204 = vpack.c.b16 %v2932, %v2928
        %v3205 = vpack.c.b16 %v2933, %v2929
        %v3206 = vpack.c.b16 %v2938, %v2934
        %v3207 = vpack.c.b16 %v2939, %v2935
        %v3208 = vpack.c.b16 %v2940, %v2936
        %v3209 = vpack.c.b16 %v2941, %v2937
        %v3210 = vpack.c.b16 %v2946, %v2942
        %v3211 = vpack.c.b16 %v2947, %v2943
        %v3212 = vpack.c.b16 %v2948, %v2944
        %v3213 = vpack.c.b16 %v2949, %v2945
        %v3214 = vpack.c.b16 %v2954, %v2950
        %v3215 = vpack.c.b16 %v2955, %v2951
        %v3216 = vpack.c.b16 %v2956, %v2952
        %v3217 = vpack.c.b16 %v2957, %v2953
        %v3218 = vpack.c.b16 %v2962, %v2958
        %v3219 = vpack.c.b16 %v2963, %v2959
        %v3220 = vpack.c.b16 %v2964, %v2960
        %v3221 = vpack.c.b16 %v2965, %v2961
        %3478 = vmatprep.subr.bf16.mxu0 %v2995
        %3479 = vmatpush1.bf16.msra.mxu0 %v2994
        %3480 = vmatprep.subr.bf16.mxu0 %v2991
        %3481 = vmatpush1.bf16.msra.mxu0 %v2990
        %3482 = vmatprep.subr.bf16.mxu0 %v2987
        %3483 = vmatpush1.bf16.msra.mxu0 %v2986
        %3484 = vmatprep.subr.bf16.mxu0 %v2983
        %3485 = vmatpush1.bf16.msra.mxu0 %v2982
        %3486 = vmatprep.subr.bf16.mxu0 %v2979
        %3487 = vmatpush1.bf16.msra.mxu0 %v2978
        %3488 = vmatprep.subr.bf16.mxu0 %v2975
        %3489 = vmatpush1.bf16.msra.mxu0 %v2974
        %3490 = vmatprep.subr.bf16.mxu0 %v2971
        %3491 = vmatpush1.bf16.msra.mxu0 %v2970
        %3492 = vmatprep.subr.bf16.mxu0 %v2967
        %3493 = vmatpush1.bf16.msra.mxu0 %v2966
        %3494 = vmatprep.subr.bf16.mxu0 %v3027
        %3495 = vmatpush2.bf16.msra.mxu0 %v3026
        %3496 = vmatprep.subr.bf16.mxu0 %v3023
        %3497 = vmatpush2.bf16.msra.mxu0 %v3022
        %3498 = vmatprep.subr.bf16.mxu0 %v3019
        %3499 = vmatpush2.bf16.msra.mxu0 %v3018
        %3500 = vmatprep.subr.bf16.mxu0 %v3015
        %3501 = vmatpush2.bf16.msra.mxu0 %v3014
        %3502 = vmatprep.subr.bf16.mxu0 %v3011
        %3503 = vmatpush2.bf16.msra.mxu0 %v3010
        %3504 = vmatprep.subr.bf16.mxu0 %v3007
        %3505 = vmatpush2.bf16.msra.mxu0 %v3006
        %3506 = vmatprep.subr.bf16.mxu0 %v3003
        %3507 = vmatpush2.bf16.msra.mxu0 %v3002
        %3508 = vmatprep.subr.bf16.mxu0 %v2999
        %3509 = vmatpush2.bf16.msra.mxu0 %v2998
        %3510 = vmatprep.mubr.bf16.mxu0 %v1913
        %3511 = vmatmul.mubr.bf16.gmra.mxu0 %v1912
        %v3512 = vpop.f32.mrf.mxu0
        %v3513 = vadd.f32 %v2181, %v3512
        %v3514 = vpop.f32.mrf.mxu0
        %v3515 = vadd.f32 %v2185, %v3514
        %v3516 = vpop.f32.mrf.mxu0
        %v3517 = vpop.f32.mrf.mxu0
        %3518 = vdwg.mxu0
        %3519 = vmatprep.subr.bf16.mxu0 %v3059
        %3520 = vmatpush1.bf16.msra.mxu0 %v3058
        %3521 = vmatprep.subr.bf16.mxu0 %v3055
        %3522 = vmatpush1.bf16.msra.mxu0 %v3054
        %3523 = vmatprep.subr.bf16.mxu0 %v3051
        %3524 = vmatpush1.bf16.msra.mxu0 %v3050
        %3525 = vmatprep.subr.bf16.mxu0 %v3047
        %3526 = vmatpush1.bf16.msra.mxu0 %v3046
        %3527 = vmatprep.subr.bf16.mxu0 %v3043
        %3528 = vmatpush1.bf16.msra.mxu0 %v3042
        %3529 = vmatprep.subr.bf16.mxu0 %v3039
        %3530 = vmatpush1.bf16.msra.mxu0 %v3038
        %3531 = vmatprep.subr.bf16.mxu0 %v3035
        %3532 = vmatpush1.bf16.msra.mxu0 %v3034
        %3533 = vmatprep.subr.bf16.mxu0 %v3031
        %3534 = vmatpush1.bf16.msra.mxu0 %v3030
        %3535 = vmatprep.subr.bf16.mxu0 %v3091
        %3536 = vmatpush2.bf16.msra.mxu0 %v3090
        %3537 = vmatprep.subr.bf16.mxu0 %v3087
        %3538 = vmatpush2.bf16.msra.mxu0 %v3086
        %3539 = vmatprep.subr.bf16.mxu0 %v3083
        %3540 = vmatpush2.bf16.msra.mxu0 %v3082
        %3541 = vmatprep.subr.bf16.mxu0 %v3079
        %3542 = vmatpush2.bf16.msra.mxu0 %v3078
        %3543 = vmatprep.subr.bf16.mxu0 %v3075
        %3544 = vmatpush2.bf16.msra.mxu0 %v3074
        %3545 = vmatprep.subr.bf16.mxu0 %v3071
        %3546 = vmatpush2.bf16.msra.mxu0 %v3070
        %3547 = vmatprep.subr.bf16.mxu0 %v3067
        %3548 = vmatpush2.bf16.msra.mxu0 %v3066
        %3549 = vmatprep.subr.bf16.mxu0 %v3063
        %3550 = vmatpush2.bf16.msra.mxu0 %v3062
        %3551 = vmatprep.mubr.bf16.mxu0 %v1915
        %3552 = vmatmul.mubr.bf16.gmra.mxu0 %v1914
        %v3553 = vpop.f32.mrf.mxu0
        %v3554 = vadd.f32 %v3513, %v3553
        %v3555 = vpop.f32.mrf.mxu0
        %v3556 = vadd.f32 %v3515, %v3555
        %v3557 = vpop.f32.mrf.mxu0
        %v3558 = vpop.f32.mrf.mxu0
        %3559 = vdwg.mxu0
        %3560 = vmatprep.subr.bf16.mxu0 %v3123
        %3561 = vmatpush1.bf16.msra.mxu0 %v3122
        %3562 = vmatprep.subr.bf16.mxu0 %v3119
        %3563 = vmatpush1.bf16.msra.mxu0 %v3118
        %3564 = vmatprep.subr.bf16.mxu0 %v3115
        %3565 = vmatpush1.bf16.msra.mxu0 %v3114
        %3566 = vmatprep.subr.bf16.mxu0 %v3111
        %3567 = vmatpush1.bf16.msra.mxu0 %v3110
        %3568 = vmatprep.subr.bf16.mxu0 %v3107
        %3569 = vmatpush1.bf16.msra.mxu0 %v3106
        %3570 = vmatprep.subr.bf16.mxu0 %v3103
        %3571 = vmatpush1.bf16.msra.mxu0 %v3102
        %3572 = vmatprep.subr.bf16.mxu0 %v3099
        %3573 = vmatpush1.bf16.msra.mxu0 %v3098
        %3574 = vmatprep.subr.bf16.mxu0 %v3095
        %3575 = vmatpush1.bf16.msra.mxu0 %v3094
        %3576 = vmatprep.subr.bf16.mxu0 %v3155
        %3577 = vmatpush2.bf16.msra.mxu0 %v3154
        %3578 = vmatprep.subr.bf16.mxu0 %v3151
        %3579 = vmatpush2.bf16.msra.mxu0 %v3150
        %3580 = vmatprep.subr.bf16.mxu0 %v3147
        %3581 = vmatpush2.bf16.msra.mxu0 %v3146
        %3582 = vmatprep.subr.bf16.mxu0 %v3143
        %3583 = vmatpush2.bf16.msra.mxu0 %v3142
        %3584 = vmatprep.subr.bf16.mxu0 %v3139
        %3585 = vmatpush2.bf16.msra.mxu0 %v3138
        %3586 = vmatprep.subr.bf16.mxu0 %v3135
        %3587 = vmatpush2.bf16.msra.mxu0 %v3134
        %3588 = vmatprep.subr.bf16.mxu0 %v3131
        %3589 = vmatpush2.bf16.msra.mxu0 %v3130
        %3590 = vmatprep.subr.bf16.mxu0 %v3127
        %3591 = vmatpush2.bf16.msra.mxu0 %v3126
        %3592 = vmatprep.mubr.bf16.mxu0 %v1917
        %3593 = vmatmul.mubr.bf16.gmra.mxu0 %v1916
        %v3594 = vpop.f32.mrf.mxu0
        %v3595 = vadd.f32 %v3554, %v3594
        %v3596 = vpop.f32.mrf.mxu0
        %v3597 = vadd.f32 %v3556, %v3596
        %v3598 = vpop.f32.mrf.mxu0
        %v3599 = vpop.f32.mrf.mxu0
        %3600 = vdwg.mxu0
        %3601 = vmatprep.subr.bf16.mxu0 %v3187
        %3602 = vmatpush1.bf16.msra.mxu0 %v3186
        %3603 = vmatprep.subr.bf16.mxu0 %v3183
        %3604 = vmatpush1.bf16.msra.mxu0 %v3182
        %3605 = vmatprep.subr.bf16.mxu0 %v3179
        %3606 = vmatpush1.bf16.msra.mxu0 %v3178
        %3607 = vmatprep.subr.bf16.mxu0 %v3175
        %3608 = vmatpush1.bf16.msra.mxu0 %v3174
        %3609 = vmatprep.subr.bf16.mxu0 %v3171
        %3610 = vmatpush1.bf16.msra.mxu0 %v3170
        %3611 = vmatprep.subr.bf16.mxu0 %v3167
        %3612 = vmatpush1.bf16.msra.mxu0 %v3166
        %3613 = vmatprep.subr.bf16.mxu0 %v3163
        %3614 = vmatpush1.bf16.msra.mxu0 %v3162
        %3615 = vmatprep.subr.bf16.mxu0 %v3159
        %3616 = vmatpush1.bf16.msra.mxu0 %v3158
        %3617 = vmatprep.subr.bf16.mxu0 %v3219
        %3618 = vmatpush2.bf16.msra.mxu0 %v3218
        %3619 = vmatprep.subr.bf16.mxu0 %v3215
        %3620 = vmatpush2.bf16.msra.mxu0 %v3214
        %3621 = vmatprep.subr.bf16.mxu0 %v3211
        %3622 = vmatpush2.bf16.msra.mxu0 %v3210
        %3623 = vmatprep.subr.bf16.mxu0 %v3207
        %3624 = vmatpush2.bf16.msra.mxu0 %v3206
        %3625 = vmatprep.subr.bf16.mxu0 %v3203
        %3626 = vmatpush2.bf16.msra.mxu0 %v3202
        %3627 = vmatprep.subr.bf16.mxu0 %v3199
        %3628 = vmatpush2.bf16.msra.mxu0 %v3198
        %3629 = vmatprep.subr.bf16.mxu0 %v3195
        %3630 = vmatpush2.bf16.msra.mxu0 %v3194
        %3631 = vmatprep.subr.bf16.mxu0 %v3191
        %3632 = vmatpush2.bf16.msra.mxu0 %v3190
        %3633 = vmatprep.mubr.bf16.mxu0 %v1919
        %3634 = vmatmul.mubr.bf16.gmra.mxu0 %v1918
        %v3635 = vpop.f32.mrf.mxu0
        %v3636 = vadd.f32 %v3595, %v3635
        %v3637 = vpop.f32.mrf.mxu0
        %v3638 = vadd.f32 %v3597, %v3637
        %v3639 = vpop.f32.mrf.mxu0
        %v3640 = vpop.f32.mrf.mxu0
        %3641 = vdwg.mxu0
        %3642 = vmatprep.subr.bf16.mxu0 %v2997
        %3643 = vmatpush1.bf16.msra.mxu0 %v2996
        %3644 = vmatprep.subr.bf16.mxu0 %v2993
        %3645 = vmatpush1.bf16.msra.mxu0 %v2992
        %3646 = vmatprep.subr.bf16.mxu0 %v2989
        %3647 = vmatpush1.bf16.msra.mxu0 %v2988
        %3648 = vmatprep.subr.bf16.mxu0 %v2985
        %3649 = vmatpush1.bf16.msra.mxu0 %v2984
        %3650 = vmatprep.subr.bf16.mxu0 %v2981
        %3651 = vmatpush1.bf16.msra.mxu0 %v2980
        %3652 = vmatprep.subr.bf16.mxu0 %v2977
        %3653 = vmatpush1.bf16.msra.mxu0 %v2976
        %3654 = vmatprep.subr.bf16.mxu0 %v2973
        %3655 = vmatpush1.bf16.msra.mxu0 %v2972
        %3656 = vmatprep.subr.bf16.mxu0 %v2969
        %3657 = vmatpush1.bf16.msra.mxu0 %v2968
        %3658 = vmatprep.subr.bf16.mxu0 %v3029
        %3659 = vmatpush2.bf16.msra.mxu0 %v3028
        %3660 = vmatprep.subr.bf16.mxu0 %v3025
        %3661 = vmatpush2.bf16.msra.mxu0 %v3024
        %3662 = vmatprep.subr.bf16.mxu0 %v3021
        %3663 = vmatpush2.bf16.msra.mxu0 %v3020
        %3664 = vmatprep.subr.bf16.mxu0 %v3017
        %3665 = vmatpush2.bf16.msra.mxu0 %v3016
        %3666 = vmatprep.subr.bf16.mxu0 %v3013
        %3667 = vmatpush2.bf16.msra.mxu0 %v3012
        %3668 = vmatprep.subr.bf16.mxu0 %v3009
        %3669 = vmatpush2.bf16.msra.mxu0 %v3008
        %3670 = vmatprep.subr.bf16.mxu0 %v3005
        %3671 = vmatpush2.bf16.msra.mxu0 %v3004
        %3672 = vmatprep.subr.bf16.mxu0 %v3001
        %3673 = vmatpush2.bf16.msra.mxu0 %v3000
        %3674 = vmatprep.mubr.bf16.mxu0 %v1913
        %3675 = vmatmul.mubr.bf16.gmra.mxu0 %v1912
        %v3676 = vpop.f32.mrf.mxu0
        %v3677 = vadd.f32 %v2189, %v3676
        %v3678 = vpop.f32.mrf.mxu0
        %v3679 = vadd.f32 %v2193, %v3678
        %v3680 = vpop.f32.mrf.mxu0
        %v3681 = vpop.f32.mrf.mxu0
        %3682 = vdwg.mxu0
        %3683 = vmatprep.subr.bf16.mxu0 %v3061
        %3684 = vmatpush1.bf16.msra.mxu0 %v3060
        %3685 = vmatprep.subr.bf16.mxu0 %v3057
        %3686 = vmatpush1.bf16.msra.mxu0 %v3056
        %3687 = vmatprep.subr.bf16.mxu0 %v3053
        %3688 = vmatpush1.bf16.msra.mxu0 %v3052
        %3689 = vmatprep.subr.bf16.mxu0 %v3049
        %3690 = vmatpush1.bf16.msra.mxu0 %v3048
        %3691 = vmatprep.subr.bf16.mxu0 %v3045
        %3692 = vmatpush1.bf16.msra.mxu0 %v3044
        %3693 = vmatprep.subr.bf16.mxu0 %v3041
        %3694 = vmatpush1.bf16.msra.mxu0 %v3040
        %3695 = vmatprep.subr.bf16.mxu0 %v3037
        %3696 = vmatpush1.bf16.msra.mxu0 %v3036
        %3697 = vmatprep.subr.bf16.mxu0 %v3033
        %3698 = vmatpush1.bf16.msra.mxu0 %v3032
        %3699 = vmatprep.subr.bf16.mxu0 %v3093
        %3700 = vmatpush2.bf16.msra.mxu0 %v3092
        %3701 = vmatprep.subr.bf16.mxu0 %v3089
        %3702 = vmatpush2.bf16.msra.mxu0 %v3088
        %3703 = vmatprep.subr.bf16.mxu0 %v3085
        %3704 = vmatpush2.bf16.msra.mxu0 %v3084
        %3705 = vmatprep.subr.bf16.mxu0 %v3081
        %3706 = vmatpush2.bf16.msra.mxu0 %v3080
        %3707 = vmatprep.subr.bf16.mxu0 %v3077
        %3708 = vmatpush2.bf16.msra.mxu0 %v3076
        %3709 = vmatprep.subr.bf16.mxu0 %v3073
        %3710 = vmatpush2.bf16.msra.mxu0 %v3072
        %3711 = vmatprep.subr.bf16.mxu0 %v3069
        %3712 = vmatpush2.bf16.msra.mxu0 %v3068
        %3713 = vmatprep.subr.bf16.mxu0 %v3065
        %3714 = vmatpush2.bf16.msra.mxu0 %v3064
        %3715 = vmatprep.mubr.bf16.mxu0 %v1915
        %3716 = vmatmul.mubr.bf16.gmra.mxu0 %v1914
        %v3717 = vpop.f32.mrf.mxu0
        %v3718 = vadd.f32 %v3677, %v3717
        %v3719 = vpop.f32.mrf.mxu0
        %v3720 = vadd.f32 %v3679, %v3719
        %v3721 = vpop.f32.mrf.mxu0
        %v3722 = vpop.f32.mrf.mxu0
        %3723 = vdwg.mxu0
        %3724 = vmatprep.subr.bf16.mxu0 %v3125
        %3725 = vmatpush1.bf16.msra.mxu0 %v3124
        %3726 = vmatprep.subr.bf16.mxu0 %v3121
        %3727 = vmatpush1.bf16.msra.mxu0 %v3120
        %3728 = vmatprep.subr.bf16.mxu0 %v3117
        %3729 = vmatpush1.bf16.msra.mxu0 %v3116
        %3730 = vmatprep.subr.bf16.mxu0 %v3113
        %3731 = vmatpush1.bf16.msra.mxu0 %v3112
        %3732 = vmatprep.subr.bf16.mxu0 %v3109
        %3733 = vmatpush1.bf16.msra.mxu0 %v3108
        %3734 = vmatprep.subr.bf16.mxu0 %v3105
        %3735 = vmatpush1.bf16.msra.mxu0 %v3104
        %3736 = vmatprep.subr.bf16.mxu0 %v3101
        %3737 = vmatpush1.bf16.msra.mxu0 %v3100
        %3738 = vmatprep.subr.bf16.mxu0 %v3097
        %3739 = vmatpush1.bf16.msra.mxu0 %v3096
        %3740 = vmatprep.subr.bf16.mxu0 %v3157
        %3741 = vmatpush2.bf16.msra.mxu0 %v3156
        %3742 = vmatprep.subr.bf16.mxu0 %v3153
        %3743 = vmatpush2.bf16.msra.mxu0 %v3152
        %3744 = vmatprep.subr.bf16.mxu0 %v3149
        %3745 = vmatpush2.bf16.msra.mxu0 %v3148
        %3746 = vmatprep.subr.bf16.mxu0 %v3145
        %3747 = vmatpush2.bf16.msra.mxu0 %v3144
        %3748 = vmatprep.subr.bf16.mxu0 %v3141
        %3749 = vmatpush2.bf16.msra.mxu0 %v3140
        %3750 = vmatprep.subr.bf16.mxu0 %v3137
        %3751 = vmatpush2.bf16.msra.mxu0 %v3136
        %3752 = vmatprep.subr.bf16.mxu0 %v3133
        %3753 = vmatpush2.bf16.msra.mxu0 %v3132
        %3754 = vmatprep.subr.bf16.mxu0 %v3129
        %3755 = vmatpush2.bf16.msra.mxu0 %v3128
        %3756 = vmatprep.mubr.bf16.mxu0 %v1917
        %3757 = vmatmul.mubr.bf16.gmra.mxu0 %v1916
        %v3758 = vpop.f32.mrf.mxu0
        %v3759 = vadd.f32 %v3718, %v3758
        %v3760 = vpop.f32.mrf.mxu0
        %v3761 = vadd.f32 %v3720, %v3760
        %v3762 = vpop.f32.mrf.mxu0
        %v3763 = vpop.f32.mrf.mxu0
        %3764 = vdwg.mxu0
        %3765 = vmatprep.subr.bf16.mxu0 %v3189
        %3766 = vmatpush1.bf16.msra.mxu0 %v3188
        %3767 = vmatprep.subr.bf16.mxu0 %v3185
        %3768 = vmatpush1.bf16.msra.mxu0 %v3184
        %3769 = vmatprep.subr.bf16.mxu0 %v3181
        %3770 = vmatpush1.bf16.msra.mxu0 %v3180
        %3771 = vmatprep.subr.bf16.mxu0 %v3177
        %3772 = vmatpush1.bf16.msra.mxu0 %v3176
        %3773 = vmatprep.subr.bf16.mxu0 %v3173
        %3774 = vmatpush1.bf16.msra.mxu0 %v3172
        %3775 = vmatprep.subr.bf16.mxu0 %v3169
        %3776 = vmatpush1.bf16.msra.mxu0 %v3168
        %3777 = vmatprep.subr.bf16.mxu0 %v3165
        %3778 = vmatpush1.bf16.msra.mxu0 %v3164
        %3779 = vmatprep.subr.bf16.mxu0 %v3161
        %3780 = vmatpush1.bf16.msra.mxu0 %v3160
        %3781 = vmatprep.subr.bf16.mxu0 %v3221
        %3782 = vmatpush2.bf16.msra.mxu0 %v3220
        %3783 = vmatprep.subr.bf16.mxu0 %v3217
        %3784 = vmatpush2.bf16.msra.mxu0 %v3216
        %3785 = vmatprep.subr.bf16.mxu0 %v3213
        %3786 = vmatpush2.bf16.msra.mxu0 %v3212
        %3787 = vmatprep.subr.bf16.mxu0 %v3209
        %3788 = vmatpush2.bf16.msra.mxu0 %v3208
        %3789 = vmatprep.subr.bf16.mxu0 %v3205
        %3790 = vmatpush2.bf16.msra.mxu0 %v3204
        %3791 = vmatprep.subr.bf16.mxu0 %v3201
        %3792 = vmatpush2.bf16.msra.mxu0 %v3200
        %3793 = vmatprep.subr.bf16.mxu0 %v3197
        %3794 = vmatpush2.bf16.msra.mxu0 %v3196
        %3795 = vmatprep.subr.bf16.mxu0 %v3193
        %3796 = vmatpush2.bf16.msra.mxu0 %v3192
        %3797 = vmatprep.mubr.bf16.mxu0 %v1919
        %3798 = vmatmul.mubr.bf16.gmra.mxu0 %v1918
        %v3799 = vpop.f32.mrf.mxu0
        %v3800 = vadd.f32 %v3759, %v3799
        %v3801 = vpop.f32.mrf.mxu0
        %v3802 = vadd.f32 %v3761, %v3801
        %v3803 = vpop.f32.mrf.mxu0
        %v3804 = vpop.f32.mrf.mxu0
        %3805 = vdwg.mxu0
        %v3806 = vmax.f32 %v3636, 0.0
        %v3807 = vmax.f32 %v3638, 0.0
        %v3808 = vmax.f32 %v3800, 0.0
        %v3809 = vmax.f32 %v3802, 0.0
        %v3810 = vpack.c.bf16 %v3806, %v3806
        %v3811 = vpack.c.bf16 %v3807, %v3807
        %v3812 = vpack.c.bf16 %v3808, %v3808
        %v3813 = vpack.c.bf16 %v3809, %v3809
        %v3814 = vld [vmem:[#allocation6] sm:$0xf]
        %v3815 = vld [vmem:[#allocation6 + $0x4] sm:$0xf]
        %v3816 = vld [vmem:[#allocation6 + $0x8] sm:$0xf]
        %v3817 = vld [vmem:[#allocation6 + $0xc] sm:$0xf]
        %v3818 = vld [vmem:[#allocation6 + $0x10] sm:$0xf]
        %v3819 = vld [vmem:[#allocation6 + $0x14] sm:$0xf]
        %v3820 = vld [vmem:[#allocation6 + $0x18] sm:$0xf]
        %v3821 = vld [vmem:[#allocation6 + $0x1c] sm:$0xf]
        %v3822 = vld [vmem:[#allocation6 + $0x20] sm:$0xf]
        %v3823 = vld [vmem:[#allocation6 + $0x24] sm:$0xf]
        %v3824 = vld [vmem:[#allocation6 + $0x28] sm:$0xf]
        %v3825 = vld [vmem:[#allocation6 + $0x2c] sm:$0xf]
        %v3826 = vld [vmem:[#allocation6 + $0x30] sm:$0xf]
        %v3827 = vld [vmem:[#allocation6 + $0x34] sm:$0xf]
        %v3828 = vld [vmem:[#allocation6 + $0x38] sm:$0xf]
        %v3829 = vld [vmem:[#allocation6 + $0x3c] sm:$0xf]
        %v3830 = vld [vmem:[#allocation6 + $0x40] sm:$0xf]
        %v3831 = vld [vmem:[#allocation6 + $0x44] sm:$0xf]
        %v3832 = vld [vmem:[#allocation6 + $0x48] sm:$0xf]
        %v3833 = vld [vmem:[#allocation6 + $0x4c] sm:$0xf]
        %v3834 = vld [vmem:[#allocation6 + $0x50] sm:$0xf]
        %v3835 = vld [vmem:[#allocation6 + $0x54] sm:$0xf]
        %v3836 = vld [vmem:[#allocation6 + $0x58] sm:$0xf]
        %v3837 = vld [vmem:[#allocation6 + $0x5c] sm:$0xf]
        %v3838 = vld [vmem:[#allocation6 + $0x60] sm:$0xf]
        %v3839 = vld [vmem:[#allocation6 + $0x64] sm:$0xf]
        %v3840 = vld [vmem:[#allocation6 + $0x68] sm:$0xf]
        %v3841 = vld [vmem:[#allocation6 + $0x6c] sm:$0xf]
        %v3842 = vld [vmem:[#allocation6 + $0x70] sm:$0xf]
        %v3843 = vld [vmem:[#allocation6 + $0x74] sm:$0xf]
        %v3844 = vld [vmem:[#allocation6 + $0x78] sm:$0xf]
        %v3845 = vld [vmem:[#allocation6 + $0x7c] sm:$0xf]
        %v3846 = vld [vmem:[#allocation6 + $0x80] sm:$0xf]
        %v3847 = vld [vmem:[#allocation6 + $0x84] sm:$0xf]
        %v3848 = vld [vmem:[#allocation6 + $0x88] sm:$0xf]
        %v3849 = vld [vmem:[#allocation6 + $0x8c] sm:$0xf]
        %v3850 = vld [vmem:[#allocation6 + $0x90] sm:$0xf]
        %v3851 = vld [vmem:[#allocation6 + $0x94] sm:$0xf]
        %v3852 = vld [vmem:[#allocation6 + $0x98] sm:$0xf]
        %v3853 = vld [vmem:[#allocation6 + $0x9c] sm:$0xf]
        %v3854 = vld [vmem:[#allocation6 + $0xa0] sm:$0xf]
        %v3855 = vld [vmem:[#allocation6 + $0xa4] sm:$0xf]
        %v3856 = vld [vmem:[#allocation6 + $0xa8] sm:$0xf]
        %v3857 = vld [vmem:[#allocation6 + $0xac] sm:$0xf]
        %v3858 = vld [vmem:[#allocation6 + $0xb0] sm:$0xf]
        %v3859 = vld [vmem:[#allocation6 + $0xb4] sm:$0xf]
        %v3860 = vld [vmem:[#allocation6 + $0xb8] sm:$0xf]
        %v3861 = vld [vmem:[#allocation6 + $0xbc] sm:$0xf]
        %v3862 = vld [vmem:[#allocation6 + $0xc0] sm:$0xf]
        %v3863 = vld [vmem:[#allocation6 + $0xc4] sm:$0xf]
        %v3864 = vld [vmem:[#allocation6 + $0xc8] sm:$0xf]
        %v3865 = vld [vmem:[#allocation6 + $0xcc] sm:$0xf]
        %v3866 = vld [vmem:[#allocation6 + $0xd0] sm:$0xf]
        %v3867 = vld [vmem:[#allocation6 + $0xd4] sm:$0xf]
        %v3868 = vld [vmem:[#allocation6 + $0xd8] sm:$0xf]
        %v3869 = vld [vmem:[#allocation6 + $0xdc] sm:$0xf]
        %v3870 = vld [vmem:[#allocation6 + $0xe0] sm:$0xf]
        %v3871 = vld [vmem:[#allocation6 + $0xe4] sm:$0xf]
        %v3872 = vld [vmem:[#allocation6 + $0xe8] sm:$0xf]
        %v3873 = vld [vmem:[#allocation6 + $0xec] sm:$0xf]
        %v3874 = vld [vmem:[#allocation6 + $0xf0] sm:$0xf]
        %v3875 = vld [vmem:[#allocation6 + $0xf4] sm:$0xf]
        %v3876 = vld [vmem:[#allocation6 + $0xf8] sm:$0xf]
        %v3877 = vld [vmem:[#allocation6 + $0xfc] sm:$0xf]
        %v3878 = vld [vmem:[%s10] sm:$0x1]
        %v3880 = vlaneseq
        %v3881 = vshrl.u32 %v3880, 7
        %v3882 = vsub.s32 0, %v3881
        %v3883 = vrot.slane %v3878, %v3882
        %v3949 = vunpack.c.l.b16 %v3814
        %v3950 = vunpack.c.l.b16 %v3815
        %v3951 = vunpack.c.l.b16 %v3816
        %v3952 = vunpack.c.l.b16 %v3817
        %v3953 = vunpack.c.l.b16 %v3818
        %v3954 = vunpack.c.l.b16 %v3819
        %v3955 = vunpack.c.l.b16 %v3820
        %v3956 = vunpack.c.l.b16 %v3821
        %v3957 = vunpack.c.l.b16 %v3822
        %v3958 = vunpack.c.l.b16 %v3823
        %v3959 = vunpack.c.l.b16 %v3824
        %v3960 = vunpack.c.l.b16 %v3825
        %v3961 = vunpack.c.l.b16 %v3826
        %v3962 = vunpack.c.l.b16 %v3827
        %v3963 = vunpack.c.l.b16 %v3828
        %v3964 = vunpack.c.l.b16 %v3829
        %v3965 = vunpack.c.l.b16 %v3830
        %v3966 = vunpack.c.l.b16 %v3831
        %v3967 = vunpack.c.l.b16 %v3832
        %v3968 = vunpack.c.l.b16 %v3833
        %v3969 = vunpack.c.l.b16 %v3834
        %v3970 = vunpack.c.l.b16 %v3835
        %v3971 = vunpack.c.l.b16 %v3836
        %v3972 = vunpack.c.l.b16 %v3837
        %v3973 = vunpack.c.l.b16 %v3838
        %v3974 = vunpack.c.l.b16 %v3839
        %v3975 = vunpack.c.l.b16 %v3840
        %v3976 = vunpack.c.l.b16 %v3841
        %v3977 = vunpack.c.l.b16 %v3842
        %v3978 = vunpack.c.l.b16 %v3843
        %v3979 = vunpack.c.l.b16 %v3844
        %v3980 = vunpack.c.l.b16 %v3845
        %v3981 = vunpack.c.l.b16 %v3846
        %v3982 = vunpack.c.l.b16 %v3847
        %v3983 = vunpack.c.l.b16 %v3848
        %v3984 = vunpack.c.l.b16 %v3849
        %v3985 = vunpack.c.l.b16 %v3850
        %v3986 = vunpack.c.l.b16 %v3851
        %v3987 = vunpack.c.l.b16 %v3852
        %v3988 = vunpack.c.l.b16 %v3853
        %v3989 = vunpack.c.l.b16 %v3854
        %v3990 = vunpack.c.l.b16 %v3855
        %v3991 = vunpack.c.l.b16 %v3856
        %v3992 = vunpack.c.l.b16 %v3857
        %v3993 = vunpack.c.l.b16 %v3858
        %v3994 = vunpack.c.l.b16 %v3859
        %v3995 = vunpack.c.l.b16 %v3860
        %v3996 = vunpack.c.l.b16 %v3861
        %v3997 = vunpack.c.l.b16 %v3862
        %v3998 = vunpack.c.l.b16 %v3863
        %v3999 = vunpack.c.l.b16 %v3864
        %v4000 = vunpack.c.l.b16 %v3865
        %v4001 = vunpack.c.l.b16 %v3866
        %v4002 = vunpack.c.l.b16 %v3867
        %v4003 = vunpack.c.l.b16 %v3868
        %v4004 = vunpack.c.l.b16 %v3869
        %v4005 = vunpack.c.l.b16 %v3870
        %v4006 = vunpack.c.l.b16 %v3871
        %v4007 = vunpack.c.l.b16 %v3872
        %v4008 = vunpack.c.l.b16 %v3873
        %v4009 = vunpack.c.l.b16 %v3874
        %v4010 = vunpack.c.l.b16 %v3875
        %v4011 = vunpack.c.l.b16 %v3876
        %v4012 = vunpack.c.l.b16 %v3877
        %v4013 = vpack.c.b16 %v3950, %v3949
        %v4014 = vpack.c.b16 %v3952, %v3951
        %v4015 = vpack.c.b16 %v3954, %v3953
        %v4016 = vpack.c.b16 %v3956, %v3955
        %v4017 = vpack.c.b16 %v3958, %v3957
        %v4018 = vpack.c.b16 %v3960, %v3959
        %v4019 = vpack.c.b16 %v3962, %v3961
        %v4020 = vpack.c.b16 %v3964, %v3963
        %v4021 = vpack.c.b16 %v3966, %v3965
        %v4022 = vpack.c.b16 %v3968, %v3967
        %v4023 = vpack.c.b16 %v3970, %v3969
        %v4024 = vpack.c.b16 %v3972, %v3971
        %v4025 = vpack.c.b16 %v3974, %v3973
        %v4026 = vpack.c.b16 %v3976, %v3975
        %v4027 = vpack.c.b16 %v3978, %v3977
        %v4028 = vpack.c.b16 %v3980, %v3979
        %v4029 = vpack.c.b16 %v3982, %v3981
        %v4030 = vpack.c.b16 %v3984, %v3983
        %v4031 = vpack.c.b16 %v3986, %v3985
        %v4032 = vpack.c.b16 %v3988, %v3987
        %v4033 = vpack.c.b16 %v3990, %v3989
        %v4034 = vpack.c.b16 %v3992, %v3991
        %v4035 = vpack.c.b16 %v3994, %v3993
        %v4036 = vpack.c.b16 %v3996, %v3995
        %v4037 = vpack.c.b16 %v3998, %v3997
        %v4038 = vpack.c.b16 %v4000, %v3999
        %v4039 = vpack.c.b16 %v4002, %v4001
        %v4040 = vpack.c.b16 %v4004, %v4003
        %v4041 = vpack.c.b16 %v4006, %v4005
        %v4042 = vpack.c.b16 %v4008, %v4007
        %v4043 = vpack.c.b16 %v4010, %v4009
        %v4044 = vpack.c.b16 %v4012, %v4011
        %4077 = vmatprep.subr.bf16.mxu0 0
        %4078 = vmatpush1.bf16.msra.mxu0 %v4020
        %4079 = vmatprep.subr.bf16.mxu0 0
        %4080 = vmatpush1.bf16.msra.mxu0 %v4019
        %4081 = vmatprep.subr.bf16.mxu0 0
        %4082 = vmatpush1.bf16.msra.mxu0 %v4018
        %4083 = vmatprep.subr.bf16.mxu0 0
        %4084 = vmatpush1.bf16.msra.mxu0 %v4017
        %4085 = vmatprep.subr.bf16.mxu0 0
        %4086 = vmatpush1.bf16.msra.mxu0 %v4016
        %4087 = vmatprep.subr.bf16.mxu0 0
        %4088 = vmatpush1.bf16.msra.mxu0 %v4015
        %4089 = vmatprep.subr.bf16.mxu0 0
        %4090 = vmatpush1.bf16.msra.mxu0 %v4014
        %4091 = vmatprep.subr.bf16.mxu0 0
        %4092 = vmatpush1.bf16.msra.mxu0 %v4013
        %4093 = vmatprep.subr.bf16.mxu0 0
        %4094 = vmatpush2.bf16.msra.mxu0 %v4028
        %4095 = vmatprep.subr.bf16.mxu0 0
        %4096 = vmatpush2.bf16.msra.mxu0 %v4027
        %4097 = vmatprep.subr.bf16.mxu0 0
        %4098 = vmatpush2.bf16.msra.mxu0 %v4026
        %4099 = vmatprep.subr.bf16.mxu0 0
        %4100 = vmatpush2.bf16.msra.mxu0 %v4025
        %4101 = vmatprep.subr.bf16.mxu0 0
        %4102 = vmatpush2.bf16.msra.mxu0 %v4024
        %4103 = vmatprep.subr.bf16.mxu0 0
        %4104 = vmatpush2.bf16.msra.mxu0 %v4023
        %4105 = vmatprep.subr.bf16.mxu0 0
        %4106 = vmatpush2.bf16.msra.mxu0 %v4022
        %4107 = vmatprep.subr.bf16.mxu0 0
        %4108 = vmatpush2.bf16.msra.mxu0 %v4021
        %4109 = vmatprep.mubr.bf16.mxu0 %v3811
        %4110 = vmatmul.mubr.bf16.gmra.mxu0 %v3810
        %v4111 = vpop.f32.mrf.mxu0
        %v4112 = vadd.f32 %v3883, %v4111
        %v4113 = vpop.f32.mrf.mxu0
        %v4114 = vpop.f32.mrf.mxu0
        %v4115 = vpop.f32.mrf.mxu0
        %4116 = vdwg.mxu0
        %4117 = vmatprep.subr.bf16.mxu0 0
        %4118 = vmatpush1.bf16.msra.mxu0 %v4036
        %4119 = vmatprep.subr.bf16.mxu0 0
        %4120 = vmatpush1.bf16.msra.mxu0 %v4035
        %4121 = vmatprep.subr.bf16.mxu0 0
        %4122 = vmatpush1.bf16.msra.mxu0 %v4034
        %4123 = vmatprep.subr.bf16.mxu0 0
        %4124 = vmatpush1.bf16.msra.mxu0 %v4033
        %4125 = vmatprep.subr.bf16.mxu0 0
        %4126 = vmatpush1.bf16.msra.mxu0 %v4032
        %4127 = vmatprep.subr.bf16.mxu0 0
        %4128 = vmatpush1.bf16.msra.mxu0 %v4031
        %4129 = vmatprep.subr.bf16.mxu0 0
        %4130 = vmatpush1.bf16.msra.mxu0 %v4030
        %4131 = vmatprep.subr.bf16.mxu0 0
        %4132 = vmatpush1.bf16.msra.mxu0 %v4029
        %4133 = vmatprep.subr.bf16.mxu0 0
        %4134 = vmatpush2.bf16.msra.mxu0 %v4044
        %4135 = vmatprep.subr.bf16.mxu0 0
        %4136 = vmatpush2.bf16.msra.mxu0 %v4043
        %4137 = vmatprep.subr.bf16.mxu0 0
        %4138 = vmatpush2.bf16.msra.mxu0 %v4042
        %4139 = vmatprep.subr.bf16.mxu0 0
        %4140 = vmatpush2.bf16.msra.mxu0 %v4041
        %4141 = vmatprep.subr.bf16.mxu0 0
        %4142 = vmatpush2.bf16.msra.mxu0 %v4040
        %4143 = vmatprep.subr.bf16.mxu0 0
        %4144 = vmatpush2.bf16.msra.mxu0 %v4039
        %4145 = vmatprep.subr.bf16.mxu0 0
        %4146 = vmatpush2.bf16.msra.mxu0 %v4038
        %4147 = vmatprep.subr.bf16.mxu0 0
        %4148 = vmatpush2.bf16.msra.mxu0 %v4037
        %4149 = vmatprep.mubr.bf16.mxu0 %v3813
        %4150 = vmatmul.mubr.bf16.gmra.mxu0 %v3812
        %v4151 = vpop.f32.mrf.mxu0
        %v4152 = vadd.f32 %v4112, %v4151
        %v4153 = vpop.f32.mrf.mxu0
        %v4154 = vpop.f32.mrf.mxu0
        %v4155 = vpop.f32.mrf.mxu0
        %4156 = vdwg.mxu0
        %v4157 = vmax.f32 %v4152, 0.0
        %v4158 = vld [vmem:[%s11] sm:$0x1]
        %v4160 = vlaneseq
        %v4161 = vshrl.u32 %v4160, 7
        %v4162 = vsub.s32 0, %v4161
        %v4163 = vrot.slane %v4158, %v4162
        %v4165 = vmul.f32 %v4157, %v4163
        %4166 = vadd.xlane.f32.xlu0 %v4165
        %v4167 = vpop.xlane.xlu0 %4166
        %v4168 = vld [vmem:[#allocation2] sm:$0x1]
        %v4170 = vlaneseq
        %v4171 = vshrl.u32 %v4170, 7
        %v4172 = vsub.s32 0, %v4171
        %v4173 = vrot.slane %v4168, %v4172
        %v4175 = vadd.f32 %v4167, %v4173
        %vm4176 = vcmask 7168
        %4177 = vst.msk [vmem:[%s629] sm:$0xff] %vm4176, %v4175
        %p4178 = scmp.lt.s32.totalorder %s28, 1
        %s4179 = scalar_select %p4178, %s28, 1
        %s4180 = smul.addr %s4179, 8
        %s4181 = scalar_lea.vmem %s13, %s4180
        // Predicated region
        $region119: #{net_forward.1} parent=105 // pred_check
          %p4182 = pneg %p324
        $region120: #{net_forward.1} parent=105 // pred_check_branch
          %4184 = sbr.rel (%p4182) target = $region122
        $region121: #{net_forward.1} parent=105 // pred_region
          _
        $region122: #{net_forward.1} parent=105 // pred_fallthru
          _
      $region106: #{net_forward.1} parent=5 // pred_fallthru
        _
      %p4185 = scmp.le.s32.totalorder 2, %s23
      // Predicated region
      $region123: #{net_forward.1} parent=5 // pred_check
        %p4186 = pneg %p4185
      $region124: #{net_forward.1} parent=5 // pred_check_branch
        %4188 = sbr.rel (%p4186) target = $region126
      $region125: #{net_forward.1} parent=5 // pred_region
        %s4189 = ssub.s32 %s23, 2
        // Predicated region
        $region127: #{net_forward.1} parent=125 // pred_check
          %p4190 = pneg %p330
        $region128: #{net_forward.1} parent=125 // pred_check_branch
          %4192 = sbr.rel (%p4190) target = $region130
        $region129: #{net_forward.1} parent=125 // pred_region
          %p4193 = scmp.lt.s32.totalorder %s29, 1
          %s4194 = scalar_select %p4193, %s29, 1
          %s4195 = smul.addr %s4194, 8
          %s4196 = scalar_lea.vmem %s13, %s4195
        $region130: #{net_forward.1} parent=125 // pred_fallthru
          _
      $region126: #{net_forward.1} parent=5 // pred_fallthru
        _
    $region6: #{net_forward.1} parent=1 // loop_footer
      %s27 = sadd.s32 1, %s23
    $region7: #{net_forward.1} parent=1 // loop_footer_branch
      %22 = sbr.rel target = $region3
    $region8: #{net_forward.1} parent=1 // loop_exit
      _
    %4197 = vsyncpa [#allocation5], 1
    %s4198 = scalar_lea.sflag [#allocation5], 1
    %4199 = vsyncpa %s4198, 1
    %4200 = vsyncpa [#allocation7], 1

</llo_original>
